<compile_context>
chip_gen: v7x
topology: tpu7x:2x2x1
jax: 0.10.0
libtpu: 0.0.40
codegen_flags: <defaults>
</compile_context>

<pallas_src>
import jax
import jax.numpy as jnp
from jax.experimental import pallas as pl
from jax.experimental.pallas import tpu as pltpu


# ----------------------------------------------------------------------------
# In-kernel helpers
# ----------------------------------------------------------------------------
def _pad_into(xp_ref, x, H, W):
    """Write x (H, W, C) into the interior of xp_ref (H+2, W+2, C); zero only
    the 1-pixel border instead of the whole buffer."""
    C = x.shape[-1]
    zrow = jnp.zeros((1, W + 2, C), xp_ref.dtype)
    zcol = jnp.zeros((H, 1, C), xp_ref.dtype)
    xp_ref[0:1, :, :] = zrow
    xp_ref[H + 1:H + 2, :, :] = zrow
    xp_ref[1:H + 1, 0:1, :] = zcol
    xp_ref[1:H + 1, W + 1:W + 2, :] = zcol
    xp_ref[1:H + 1, 1:W + 1, :] = x.astype(xp_ref.dtype)


def _conv3x3(xp_ref, col_ref, w, Cin, Ho, Wo, stride):
    """3x3 conv (pad=1) via im2col: scatter the 9 shifted windows into the bf16
    col scratch, then ONE (Ho*Wo, 9*Cin) x (9*Cin, Cout) MXU matmul."""
    for ky in range(3):
        for kx in range(3):
            tap = ky * 3 + kx
            if stride == 1:
                win = xp_ref[pl.ds(ky, Ho), pl.ds(kx, Wo), :]
            else:
                win = xp_ref[pl.ds(ky, Ho, stride), pl.ds(kx, Wo, stride), :]
            col_ref[:, tap * Cin:(tap + 1) * Cin] = (
                win.reshape(Ho * Wo, Cin).astype(col_ref.dtype))
    return jnp.dot(col_ref[...], w, preferred_element_type=jnp.float32)


# ----------------------------------------------------------------------------
# Stem conv kernel (3x3, stride 1, no BN / residual)
# ----------------------------------------------------------------------------
def _make_stem_kernel(H, W, Cin, Cout):
    def kernel(x_ref, w_ref, o_ref, xp_ref, col_ref):
        _pad_into(xp_ref, x_ref[...], H, W)
        y = _conv3x3(xp_ref, col_ref, w_ref[...], Cin, H, W, 1)
        o_ref[...] = y.reshape(H, W, Cout).astype(o_ref.dtype)
    return kernel


def stem_conv(x, w):
    """x: (N, H, W, Cin) f32, w: (9*Cin, Cout) bf16 -> (N, H, W, Cout) f32."""
    N, H, W, Cin = x.shape
    Cout = w.shape[-1]
    return pl.pallas_call(
        _make_stem_kernel(H, W, Cin, Cout),
        out_shape=jax.ShapeDtypeStruct((N, H, W, Cout), jnp.float32),
        grid=(N,),
        in_specs=[pl.BlockSpec((None, H, W, Cin), lambda b: (b, 0, 0, 0)),
                  pl.BlockSpec((9 * Cin, Cout), lambda b: (0, 0))],
        out_specs=pl.BlockSpec((None, H, W, Cout), lambda b: (b, 0, 0, 0)),
        scratch_shapes=[pltpu.VMEM((H + 2, W + 2, Cin), jnp.float32),
                        pltpu.VMEM((H * W, 9 * Cin), jnp.bfloat16)],
        compiler_params=pltpu.CompilerParams(
            dimension_semantics=("parallel",)),
    )(x, w)


# ----------------------------------------------------------------------------
# Fused residual block kernel:
#   BN1 + ReLU + conv1(3x3, stride s) + BN2 + ReLU + conv2(3x3) + shortcut add
# all in one pallas_call; intermediates live in VMEM scratch only.
# ----------------------------------------------------------------------------
def _make_block_kernel(H, W, Cin, Cout, stride, has_shortcut):
    Ho = (H - 1) // stride + 1
    Wo = (W - 1) // stride + 1

    def kernel(*refs):
        i = 0
        x_ref = refs[i]; i += 1
        w1_ref = refs[i]; i += 1
        s1_ref = refs[i]; i += 1
        b1_ref = refs[i]; i += 1
        w2_ref = refs[i]; i += 1
        s2_ref = refs[i]; i += 1
        b2_ref = refs[i]; i += 1
        if has_shortcut:
            ws_ref = refs[i]; i += 1
        o_ref = refs[i]; i += 1
        xp1_ref = refs[i]; i += 1
        col1_ref = refs[i]; i += 1
        xp2_ref = refs[i]; i += 1
        col2_ref = refs[i]; i += 1

        x = x_ref[...]                                         # (H, W, Cin) f32
        # BN1 (eval-mode folded) + ReLU in f32, then conv1 via im2col.
        a1 = jnp.maximum(x * s1_ref[...] + b1_ref[...], 0.0)
        _pad_into(xp1_ref, a1, H, W)
        h = _conv3x3(xp1_ref, col1_ref, w1_ref[...], Cin, Ho, Wo, stride)

        # BN2 + ReLU, then conv2 (stride 1).
        a2 = jnp.maximum(h * s2_ref[...] + b2_ref[...], 0.0)
        _pad_into(xp2_ref, a2.reshape(Ho, Wo, Cout), Ho, Wo)
        y = _conv3x3(xp2_ref, col2_ref, w2_ref[...], Cout, Ho, Wo, 1)

        # Shortcut: identity or 1x1 strided conv on the ORIGINAL block input.
        if has_shortcut:
            if stride == 1:
                xs = x
            else:
                xs = x_ref[pl.ds(0, Ho, stride), pl.ds(0, Wo, stride), :]
            res = jnp.dot(xs.reshape(Ho * Wo, Cin).astype(jnp.bfloat16),
                          ws_ref[...], preferred_element_type=jnp.float32)
        else:
            res = x.reshape(Ho * Wo, Cout)

        o_ref[...] = (y + res).reshape(Ho, Wo, Cout).astype(o_ref.dtype)

    return kernel, Ho, Wo


def residual_block(x, p):
    """x: (N, H, W, Cin) f32; p: block parameter dict -> (N, Ho, Wo, Cout)."""
    N, H, W, Cin = x.shape
    stride = p["stride"]
    Cout = p["conv1"].shape[-1]
    has_sc = p["shortcut"] is not None
    kernel, Ho, Wo = _make_block_kernel(H, W, Cin, Cout, stride, has_sc)

    s1, b1 = p["bn1"]
    s2, b2 = p["bn2"]
    args = [x, p["conv1"], s1, b1, p["conv2"], s2, b2]
    in_specs = [
        pl.BlockSpec((None, H, W, Cin), lambda b: (b, 0, 0, 0)),
        pl.BlockSpec((9 * Cin, Cout), lambda b: (0, 0)),
        pl.BlockSpec((1, Cin), lambda b: (0, 0)),
        pl.BlockSpec((1, Cin), lambda b: (0, 0)),
        pl.BlockSpec((9 * Cout, Cout), lambda b: (0, 0)),
        pl.BlockSpec((1, Cout), lambda b: (0, 0)),
        pl.BlockSpec((1, Cout), lambda b: (0, 0)),
    ]
    if has_sc:
        args.append(p["shortcut"])
        in_specs.append(pl.BlockSpec((Cin, Cout), lambda b: (0, 0)))

    return pl.pallas_call(
        kernel,
        out_shape=jax.ShapeDtypeStruct((N, Ho, Wo, Cout), jnp.float32),
        grid=(N,),
        in_specs=in_specs,
        out_specs=pl.BlockSpec((None, Ho, Wo, Cout), lambda b: (b, 0, 0, 0)),
        scratch_shapes=[
            pltpu.VMEM((H + 2, W + 2, Cin), jnp.float32),       # padded conv1 in
            pltpu.VMEM((Ho * Wo, 9 * Cin), jnp.bfloat16),       # im2col conv1
            pltpu.VMEM((Ho + 2, Wo + 2, Cout), jnp.float32),    # padded conv2 in
            pltpu.VMEM((Ho * Wo, 9 * Cout), jnp.bfloat16),      # im2col conv2
        ],
        compiler_params=pltpu.CompilerParams(
            dimension_semantics=("parallel",)),
    )(*args)


# ----------------------------------------------------------------------------
# Head kernel: final BN + ReLU, 8x8 average pool, flatten, DenseMultihead matmul
# ----------------------------------------------------------------------------
def _head_kernel(x_ref, scale_ref, shift_ref, w_ref, b_ref, o_ref):
    x = x_ref[...]                                            # (N, 8, 8, C)
    x = jnp.maximum(x * scale_ref[...] + shift_ref[...], 0.0)
    N, Hh, Ww, C = x.shape
    pooled = jnp.mean(x.reshape(N, Hh * Ww, C), axis=1)       # AvgPool2d(8) -> (N, C)
    o_ref[...] = (jnp.dot(pooled, w_ref[...],
                          preferred_element_type=jnp.float32) + b_ref[...])


def head(x, scale, shift, wT, bias):
    N, Hh, Ww, C = x.shape
    O = wT.shape[-1]
    return pl.pallas_call(
        _head_kernel,
        out_shape=jax.ShapeDtypeStruct((N, O), jnp.float32),
        grid=(1,),
        in_specs=[pl.BlockSpec((N, Hh, Ww, C), lambda i: (0, 0, 0, 0)),
                  pl.BlockSpec((1, C), lambda i: (0, 0)),
                  pl.BlockSpec((1, C), lambda i: (0, 0)),
                  pl.BlockSpec((C, O), lambda i: (0, 0)),
                  pl.BlockSpec((1, O), lambda i: (0, 0))],
        out_specs=pl.BlockSpec((N, O), lambda i: (0, 0)),
        compiler_params=pltpu.CompilerParams(
            dimension_semantics=("arbitrary",)),
    )(x, scale, shift, wT, bias)


# ----------------------------------------------------------------------------
# Deterministic parameter construction (shapes per the PyTorch __init__).
# Conv weights stored im2col-style: (9*Cin, Cout), bf16; BN folded to
# per-channel scale/shift (eval mode); FC stored as W^T (f32).
# ----------------------------------------------------------------------------
def _kaiming(key, shape, fan_in):
    return jax.random.normal(key, shape, jnp.float32) * jnp.sqrt(2.0 / fan_in)


def _bn_params(key, c, eps=1e-5):
    k1, k2, k3, k4 = jax.random.split(key, 4)
    gamma = 1.0 + 0.1 * jax.random.normal(k1, (1, c), jnp.float32)
    beta = 0.1 * jax.random.normal(k2, (1, c), jnp.float32)
    mean = 0.1 * jax.random.normal(k3, (1, c), jnp.float32)
    var = 1.0 + 0.1 * jnp.abs(jax.random.normal(k4, (1, c), jnp.float32))
    scale = gamma / jnp.sqrt(var + eps)
    shift = beta - mean * scale
    return scale, shift


def _make_block(key, cin, cout, stride):
    keys = jax.random.split(key, 5)
    p = {"stride": stride}
    p["bn1"] = _bn_params(keys[0], cin)
    p["conv1"] = _kaiming(keys[1], (9 * cin, cout), cin * 9).astype(jnp.bfloat16)
    p["bn2"] = _bn_params(keys[2], cout)
    p["conv2"] = _kaiming(keys[3], (9 * cout, cout), cout * 9).astype(jnp.bfloat16)
    if stride != 1 or cin != cout:
        p["shortcut"] = _kaiming(keys[4], (cin, cout), cin).astype(jnp.bfloat16)
    else:
        p["shortcut"] = None
    return p


def make_params(key, ensemble_size, num_classes, width, num_blocks):
    keys = jax.random.split(key, 4)
    params = {}
    cin0 = 3 * ensemble_size
    params["conv1"] = _kaiming(keys[0], (9 * cin0, 16),
                               cin0 * 9).astype(jnp.bfloat16)
    dims = [16, 16 * width, 32 * width, 64 * width]
    strides = [1, 2, 2]
    groups = []
    gkeys = jax.random.split(keys[1], 3)
    for g in range(3):
        blocks = []
        bkeys = jax.random.split(gkeys[g], num_blocks)
        for b in range(num_blocks):
            cin = dims[g] if b == 0 else dims[g + 1]
            s = strides[g] if b == 0 else 1
            blocks.append(_make_block(bkeys[b], cin, dims[g + 1], s))
        groups.append(blocks)
    params["groups"] = groups
    params["bn_final"] = _bn_params(keys[2], 64 * width)
    out_feat = num_classes * ensemble_size
    params["fc_w"] = _kaiming(keys[3], (64 * width, out_feat), 64 * width)  # W^T
    params["fc_b"] = jnp.zeros((1, out_feat), jnp.float32)
    return params


# ----------------------------------------------------------------------------
# Forward pass (reshape/transpose glue in plain JAX; all compute in Pallas)
# ----------------------------------------------------------------------------
def mimo_wide_resnet28_forward(x, params, ensemble_size, num_classes):
    # x: (B, E, 3, H, W) -- same layout as the PyTorch module's input.
    B = x.shape[0]
    H, W = x.shape[-2], x.shape[-1]
    x = x.reshape(B, 3 * ensemble_size, H, W)      # torch.reshape semantics
    x = jnp.transpose(x, (0, 2, 3, 1))             # NCHW -> NHWC
    x = stem_conv(x, params["conv1"])
    for blocks in params["groups"]:
        for p in blocks:
            x = residual_block(x, p)
    scale, shift = params["bn_final"]
    flat = head(x, scale, shift, params["fc_w"], params["fc_b"])  # (B, E*nc)
    # DenseMultihead: row-major reshape of (B, E*nc) to (E, B, nc), exactly as
    # torch.reshape does in the reference module.
    return flat.reshape(ensemble_size, B, num_classes)


if __name__ == "__main__":
    # Small config consistent with the module: ensemble_size=2, width=1,
    # depth=10 -> 1 residual block per group, 32x32 input (so the final
    # AvgPool2d(kernel_size=8) acts on an 8x8 map), batch=2, 4 classes.
    B, E, NUM_CLASSES, WIDTH, NUM_BLOCKS, HW = 2, 2, 4, 1, 1, 32

    key = jax.random.PRNGKey(0)
    kx, kp = jax.random.split(key)
    x = jax.random.normal(kx, (B, E, 3, HW, HW), jnp.float32)
    params = make_params(kp, E, NUM_CLASSES, WIDTH, NUM_BLOCKS)

    out = mimo_wide_resnet28_forward(x, params, E, NUM_CLASSES)
    out = jax.block_until_ready(out)
    assert out.shape == (E, B, NUM_CLASSES), out.shape
    print("KERNEL_OK")
</pallas_src>

<mosaic_0001>
module attributes {stable_mosaic.version = 11 : i64} {
  func.func @kernel(%arg0: i32, %arg1: memref<1x32x32x6xf32, #tpu.memory_space<vmem>>, %arg2: memref<54x16xbf16, #tpu.memory_space<vmem>>, %arg3: memref<1x32x32x16xf32, #tpu.memory_space<vmem>>, %arg4: memref<34x34x6xf32, #tpu.memory_space<vmem>>, %arg5: memref<1024x54xbf16, #tpu.memory_space<vmem>>) attributes {dimension_semantics = [#tpu.dimension_semantics<parallel>], iteration_bounds = array<i64: 2>, scalar_prefetch = 0 : i64, scratch_operands = 2 : i64, tpu.core_type = #tpu.core_type<tc>, window_params = [{transform_indices = @transform_0, window_bounds = array<i64: 1, 32, 32, 6>}, {pipeline_mode = #tpu.pipeline_mode<synchronous>, transform_indices = @transform_1, window_bounds = array<i64: 54, 16>}, {transform_indices = @transform_2, window_bounds = array<i64: 1, 32, 32, 16>}]} {
    %c0 = arith.constant 0 : index
    %c0_0 = arith.constant 0 : index
    %c0_1 = arith.constant 0 : index
    %c0_2 = arith.constant 0 : index
    %0 = vector.load %arg1[%c0, %c0_0, %c0_1, %c0_2] : memref<1x32x32x6xf32, #tpu.memory_space<vmem>>, vector<1x32x32x6xf32>
    %1 = vector.shape_cast %0 : vector<1x32x32x6xf32> to vector<32x32x6xf32>
    %cst = arith.constant 0.000000e+00 : f32
    %2 = vector.broadcast %cst : f32 to vector<1x34x6xf32>
    %cst_3 = arith.constant 0.000000e+00 : f32
    %3 = vector.broadcast %cst_3 : f32 to vector<32x1x6xf32>
    %c0_4 = arith.constant 0 : index
    %c0_5 = arith.constant 0 : index
    %c0_6 = arith.constant 0 : index
    %4 = vector.load %arg4[%c0_4, %c0_5, %c0_6] : memref<34x34x6xf32, #tpu.memory_space<vmem>>, vector<1x34x6xf32>
    tpu.vector_store %arg4[%c0_4, %c0_5, %c0_6], %2 {strides = array<i32>} : memref<34x34x6xf32, #tpu.memory_space<vmem>>, vector<1x34x6xf32>,
    %c33 = arith.constant 33 : index
    %c0_7 = arith.constant 0 : index
    %c0_8 = arith.constant 0 : index
    %5 = vector.load %arg4[%c33, %c0_7, %c0_8] : memref<34x34x6xf32, #tpu.memory_space<vmem>>, vector<1x34x6xf32>
    tpu.vector_store %arg4[%c33, %c0_7, %c0_8], %2 {strides = array<i32>} : memref<34x34x6xf32, #tpu.memory_space<vmem>>, vector<1x34x6xf32>,
    %c1 = arith.constant 1 : index
    %c0_9 = arith.constant 0 : index
    %c0_10 = arith.constant 0 : index
    %6 = vector.load %arg4[%c1, %c0_9, %c0_10] : memref<34x34x6xf32, #tpu.memory_space<vmem>>, vector<32x1x6xf32>
    tpu.vector_store %arg4[%c1, %c0_9, %c0_10], %3 {strides = array<i32>} : memref<34x34x6xf32, #tpu.memory_space<vmem>>, vector<32x1x6xf32>,
    %c1_11 = arith.constant 1 : index
    %c33_12 = arith.constant 33 : index
    %c0_13 = arith.constant 0 : index
    %7 = vector.load %arg4[%c1_11, %c33_12, %c0_13] : memref<34x34x6xf32, #tpu.memory_space<vmem>>, vector<32x1x6xf32>
    tpu.vector_store %arg4[%c1_11, %c33_12, %c0_13], %3 {strides = array<i32>} : memref<34x34x6xf32, #tpu.memory_space<vmem>>, vector<32x1x6xf32>,
    %c1_14 = arith.constant 1 : index
    %c1_15 = arith.constant 1 : index
    %c0_16 = arith.constant 0 : index
    %8 = vector.load %arg4[%c1_14, %c1_15, %c0_16] : memref<34x34x6xf32, #tpu.memory_space<vmem>>, vector<32x32x6xf32>
    tpu.vector_store %arg4[%c1_14, %c1_15, %c0_16], %1 {strides = array<i32>} : memref<34x34x6xf32, #tpu.memory_space<vmem>>, vector<32x32x6xf32>,
    %c0_17 = arith.constant 0 : index
    %c0_18 = arith.constant 0 : index
    %9 = vector.load %arg2[%c0_17, %c0_18] : memref<54x16xbf16, #tpu.memory_space<vmem>>, vector<54x16xbf16>
    %c0_19 = arith.constant 0 : index
    %c0_20 = arith.constant 0 : index
    %c0_21 = arith.constant 0 : index
    %10 = vector.load %arg4[%c0_19, %c0_20, %c0_21] : memref<34x34x6xf32, #tpu.memory_space<vmem>>, vector<32x32x6xf32>
    %11 = vector.shape_cast %10 : vector<32x32x6xf32> to vector<1024x6xf32>
    %12 = arith.truncf %11 : vector<1024x6xf32> to vector<1024x6xbf16>
    %c0_22 = arith.constant 0 : index
    %c0_23 = arith.constant 0 : index
    %13 = vector.load %arg5[%c0_22, %c0_23] : memref<1024x54xbf16, #tpu.memory_space<vmem>>, vector<1024x6xbf16>
    tpu.vector_store %arg5[%c0_22, %c0_23], %12 {strides = array<i32>} : memref<1024x54xbf16, #tpu.memory_space<vmem>>, vector<1024x6xbf16>,
    %c0_24 = arith.constant 0 : index
    %c1_25 = arith.constant 1 : index
    %c0_26 = arith.constant 0 : index
    %14 = vector.load %arg4[%c0_24, %c1_25, %c0_26] : memref<34x34x6xf32, #tpu.memory_space<vmem>>, vector<32x32x6xf32>
    %15 = vector.shape_cast %14 : vector<32x32x6xf32> to vector<1024x6xf32>
    %16 = arith.truncf %15 : vector<1024x6xf32> to vector<1024x6xbf16>
    %c0_27 = arith.constant 0 : index
    %c6 = arith.constant 6 : index
    %17 = vector.load %arg5[%c0_27, %c6] : memref<1024x54xbf16, #tpu.memory_space<vmem>>, vector<1024x6xbf16>
    tpu.vector_store %arg5[%c0_27, %c6], %16 {strides = array<i32>} : memref<1024x54xbf16, #tpu.memory_space<vmem>>, vector<1024x6xbf16>,
    %c0_28 = arith.constant 0 : index
    %c2 = arith.constant 2 : index
    %c0_29 = arith.constant 0 : index
    %18 = vector.load %arg4[%c0_28, %c2, %c0_29] : memref<34x34x6xf32, #tpu.memory_space<vmem>>, vector<32x32x6xf32>
    %19 = vector.shape_cast %18 : vector<32x32x6xf32> to vector<1024x6xf32>
    %20 = arith.truncf %19 : vector<1024x6xf32> to vector<1024x6xbf16>
    %c0_30 = arith.constant 0 : index
    %c12 = arith.constant 12 : index
    %21 = vector.load %arg5[%c0_30, %c12] : memref<1024x54xbf16, #tpu.memory_space<vmem>>, vector<1024x6xbf16>
    tpu.vector_store %arg5[%c0_30, %c12], %20 {strides = array<i32>} : memref<1024x54xbf16, #tpu.memory_space<vmem>>, vector<1024x6xbf16>,
    %c1_31 = arith.constant 1 : index
    %c0_32 = arith.constant 0 : index
    %c0_33 = arith.constant 0 : index
    %22 = vector.load %arg4[%c1_31, %c0_32, %c0_33] : memref<34x34x6xf32, #tpu.memory_space<vmem>>, vector<32x32x6xf32>
    %23 = vector.shape_cast %22 : vector<32x32x6xf32> to vector<1024x6xf32>
    %24 = arith.truncf %23 : vector<1024x6xf32> to vector<1024x6xbf16>
    %c0_34 = arith.constant 0 : index
    %c18 = arith.constant 18 : index
    %25 = vector.load %arg5[%c0_34, %c18] : memref<1024x54xbf16, #tpu.memory_space<vmem>>, vector<1024x6xbf16>
    tpu.vector_store %arg5[%c0_34, %c18], %24 {strides = array<i32>} : memref<1024x54xbf16, #tpu.memory_space<vmem>>, vector<1024x6xbf16>,
    %c1_35 = arith.constant 1 : index
    %c1_36 = arith.constant 1 : index
    %c0_37 = arith.constant 0 : index
    %26 = vector.load %arg4[%c1_35, %c1_36, %c0_37] : memref<34x34x6xf32, #tpu.memory_space<vmem>>, vector<32x32x6xf32>
    %27 = vector.shape_cast %26 : vector<32x32x6xf32> to vector<1024x6xf32>
    %28 = arith.truncf %27 : vector<1024x6xf32> to vector<1024x6xbf16>
    %c0_38 = arith.constant 0 : index
    %c24 = arith.constant 24 : index
    %29 = vector.load %arg5[%c0_38, %c24] : memref<1024x54xbf16, #tpu.memory_space<vmem>>, vector<1024x6xbf16>
    tpu.vector_store %arg5[%c0_38, %c24], %28 {strides = array<i32>} : memref<1024x54xbf16, #tpu.memory_space<vmem>>, vector<1024x6xbf16>,
    %c1_39 = arith.constant 1 : index
    %c2_40 = arith.constant 2 : index
    %c0_41 = arith.constant 0 : index
    %30 = vector.load %arg4[%c1_39, %c2_40, %c0_41] : memref<34x34x6xf32, #tpu.memory_space<vmem>>, vector<32x32x6xf32>
    %31 = vector.shape_cast %30 : vector<32x32x6xf32> to vector<1024x6xf32>
    %32 = arith.truncf %31 : vector<1024x6xf32> to vector<1024x6xbf16>
    %c0_42 = arith.constant 0 : index
    %c30 = arith.constant 30 : index
    %33 = vector.load %arg5[%c0_42, %c30] : memref<1024x54xbf16, #tpu.memory_space<vmem>>, vector<1024x6xbf16>
    tpu.vector_store %arg5[%c0_42, %c30], %32 {strides = array<i32>} : memref<1024x54xbf16, #tpu.memory_space<vmem>>, vector<1024x6xbf16>,
    %c2_43 = arith.constant 2 : index
    %c0_44 = arith.constant 0 : index
    %c0_45 = arith.constant 0 : index
    %34 = vector.load %arg4[%c2_43, %c0_44, %c0_45] : memref<34x34x6xf32, #tpu.memory_space<vmem>>, vector<32x32x6xf32>
    %35 = vector.shape_cast %34 : vector<32x32x6xf32> to vector<1024x6xf32>
    %36 = arith.truncf %35 : vector<1024x6xf32> to vector<1024x6xbf16>
    %c0_46 = arith.constant 0 : index
    %c36 = arith.constant 36 : index
    %37 = vector.load %arg5[%c0_46, %c36] : memref<1024x54xbf16, #tpu.memory_space<vmem>>, vector<1024x6xbf16>
    tpu.vector_store %arg5[%c0_46, %c36], %36 {strides = array<i32>} : memref<1024x54xbf16, #tpu.memory_space<vmem>>, vector<1024x6xbf16>,
    %c2_47 = arith.constant 2 : index
    %c1_48 = arith.constant 1 : index
    %c0_49 = arith.constant 0 : index
    %38 = vector.load %arg4[%c2_47, %c1_48, %c0_49] : memref<34x34x6xf32, #tpu.memory_space<vmem>>, vector<32x32x6xf32>
    %39 = vector.shape_cast %38 : vector<32x32x6xf32> to vector<1024x6xf32>
    %40 = arith.truncf %39 : vector<1024x6xf32> to vector<1024x6xbf16>
    %c0_50 = arith.constant 0 : index
    %c42 = arith.constant 42 : index
    %41 = vector.load %arg5[%c0_50, %c42] : memref<1024x54xbf16, #tpu.memory_space<vmem>>, vector<1024x6xbf16>
    tpu.vector_store %arg5[%c0_50, %c42], %40 {strides = array<i32>} : memref<1024x54xbf16, #tpu.memory_space<vmem>>, vector<1024x6xbf16>,
    %c2_51 = arith.constant 2 : index
    %c2_52 = arith.constant 2 : index
    %c0_53 = arith.constant 0 : index
    %42 = vector.load %arg4[%c2_51, %c2_52, %c0_53] : memref<34x34x6xf32, #tpu.memory_space<vmem>>, vector<32x32x6xf32>
    %43 = vector.shape_cast %42 : vector<32x32x6xf32> to vector<1024x6xf32>
    %44 = arith.truncf %43 : vector<1024x6xf32> to vector<1024x6xbf16>
    %c0_54 = arith.constant 0 : index
    %c48 = arith.constant 48 : index
    %45 = vector.load %arg5[%c0_54, %c48] : memref<1024x54xbf16, #tpu.memory_space<vmem>>, vector<1024x6xbf16>
    tpu.vector_store %arg5[%c0_54, %c48], %44 {strides = array<i32>} : memref<1024x54xbf16, #tpu.memory_space<vmem>>, vector<1024x6xbf16>,
    %c0_55 = arith.constant 0 : index
    %c0_56 = arith.constant 0 : index
    %46 = vector.load %arg5[%c0_55, %c0_56] : memref<1024x54xbf16, #tpu.memory_space<vmem>>, vector<1024x54xbf16>
    %cst_57 = arith.constant dense<0.000000e+00> : vector<1024x16xf32>
    %47 = tpu.matmul %46, %9, %cst_57 {dimension_numbers = #tpu.dot_dimension_numbers<[1], [0], [0], [1], [0, 0, 1, 1], [], []>} : vector<1024x54xbf16>, vector<54x16xbf16>, vector<1024x16xf32> -> vector<1024x16xf32>
    %48 = vector.shape_cast %47 : vector<1024x16xf32> to vector<32x32x16xf32>
    %c0_58 = arith.constant 0 : index
    %c0_59 = arith.constant 0 : index
    %c0_60 = arith.constant 0 : index
    %c0_61 = arith.constant 0 : index
    %49 = vector.load %arg3[%c0_58, %c0_59, %c0_60, %c0_61] : memref<1x32x32x16xf32, #tpu.memory_space<vmem>>, vector<1x32x32x16xf32>
    %50 = vector.shape_cast %49 : vector<1x32x32x16xf32> to vector<32x32x16xf32>
    %51 = vector.shape_cast %48 : vector<32x32x16xf32> to vector<1x32x32x16xf32>
    tpu.vector_store %arg3[%c0_58, %c0_59, %c0_60, %c0_61], %51 {strides = array<i32>} : memref<1x32x32x16xf32, #tpu.memory_space<vmem>>, vector<1x32x32x16xf32>,
    return
  }
  func.func @transform_0(%arg0: i32) -> (i32, i32, i32, i32) {
    %c0_i32 = arith.constant 0 : i32
    %c0_i32_0 = arith.constant 0 : i32
    %c0_i32_1 = arith.constant 0 : i32
    %c0_i32_2 = arith.constant 0 : i32
    return %arg0, %c0_i32, %c0_i32_0, %c0_i32_1 : i32, i32, i32, i32
  }
  func.func @transform_1(%arg0: i32) -> (i32, i32) {
    %c0_i32 = arith.constant 0 : i32
    %c0_i32_0 = arith.constant 0 : i32
    %c0_i32_1 = arith.constant 0 : i32
    return %c0_i32, %c0_i32_0 : i32, i32
  }
  func.func @transform_2(%arg0: i32) -> (i32, i32, i32, i32) {
    %c0_i32 = arith.constant 0 : i32
    %c0_i32_0 = arith.constant 0 : i32
    %c0_i32_1 = arith.constant 0 : i32
    %c0_i32_2 = arith.constant 0 : i32
    return %arg0, %c0_i32, %c0_i32_0, %c0_i32_1 : i32, i32, i32, i32
  }
}

</mosaic_0001>

<llo_original>
// kernel: tpu_custom_call.1
$region0: #{tpu_custom_call.1}
  #allocation0 [shape = 'u32[]', space=smem, size = 0x4, offset = 0x4, fixed_abs, tag = 'smem constant byte address 0x4 - core index']
  #allocation1 [shape = 'u32[144,128]{1,0:T(1,128)}', space=vmem, size = 0x12000, scoped, tag = 'internal scratch']
  #allocation2 [shape = 'f32[34,34,6]{2,1,0:T(8,128)}', space=vmem, size = 0xaa000, scoped, tag = 'scratch operand']
  #allocation3 [shape = 'bf16[1024,54]{1,0:T(16,128)(2,1)}', space=vmem, size = 0x40000, scoped, tag = 'scratch operand']
  %s0 = inlined_call_operand.vmem [shape: f32[2,32,32,6], index: 0, kind: input, shape index: {}]
  %s1 = inlined_call_operand.vmem [shape: bf16[54,16], index: 1, kind: input, shape index: {}]
  %s2 = inlined_call_operand.vmem [shape: f32[2,32,32,16], index: 2, kind: output, shape index: {}]
  %s3 = sld [smem:[#allocation0]]
  $region41: #{tpu_custom_call.1} parent=0
    _
  %s5 = ssub.s32 1, %s3
  %s6 = scalar_select 0, %s5, %s3
  loop: start=0, step=1, limit=4
  $region2: #{tpu_custom_call.1} parent=0 // loop_pre_header
    _
  $region3: #{tpu_custom_call.1} parent=0 // loop_header
    %s8 = sphi 0, %s12
    %p9 = scmp.ge.s32.totalorder %s8, 4
    %s18 = sphi 0, %s20
    %s21 = sphi 0, %s18
    %s22 = sphi 0, %s21
    %s38 = sphi 0, %s22
    %s42 = sphi 0, %s42
    %s44 = sphi 0, %s42
    %s45 = sphi 0, %s44
    %s59 = sphi 0, %s45
    %s65 = sphi 0, %s67
    %s68 = sphi 0, %s65
    %s69 = sphi 0, %s68
    %s85 = sphi 0, %s69
  $region4: #{tpu_custom_call.1} parent=0 // loop_header_branch
    %11 = sbr.rel (%p9) target = $region8
  $region5: #{tpu_custom_call.1} parent=0 // loop_body
    %s13 = ssub.s32 %s8, 1
    %s14 = ssub.s32 %s8, 2
    %s15 = sadd.s32 %s8, 1
    %s16 = ssub.s32 %s8, %s15
    %p17 = scmp.eq.s32.totalorder %s16, 0
    %s19 = sadd.s32 %s18, 1
    %s20 = scalar_select %p17, %s18, %s19
    %p23 = pneg %p17
    %p24 = scmp.eq.s32.totalorder %s8, 1
    %p25 = por %p23, %p24
    %p26 = scmp.ne.s32.totalorder %s18, %s21
    %p27 = scmp.eq.s32.totalorder %s8, 0
    %p28 = por %p26, %p27
    %p29 = scmp.ne.s32.totalorder %s18, %s21
    %p30 = scmp.eq.s32.totalorder %s13, 1
    %p31 = por %p29, %p30
    %p32 = scmp.ne.s32.totalorder %s21, %s22
    %p33 = scmp.eq.s32.totalorder %s13, 0
    %p34 = por %p32, %p33
    %p35 = scmp.ne.s32.totalorder %s21, %s22
    %p36 = scmp.eq.s32.totalorder %s14, 1
    %p37 = por %p35, %p36
    %p39 = scmp.ne.s32.totalorder %s22, %s38
    %p40 = scmp.eq.s32.totalorder %s14, 0
    %p41 = por %p39, %p40
    %s43 = sadd.s32 %s42, 1
    %p46 = scmp.eq.s32.totalorder %s8, 1
    %p47 = scmp.ne.s32.totalorder %s42, %s44
    %p48 = scmp.eq.s32.totalorder %s8, 0
    %p49 = por %p47, %p48
    %p50 = scmp.ne.s32.totalorder %s42, %s44
    %p51 = scmp.eq.s32.totalorder %s13, 1
    %p52 = por %p50, %p51
    %p53 = scmp.ne.s32.totalorder %s44, %s45
    %p54 = scmp.eq.s32.totalorder %s13, 0
    %p55 = por %p53, %p54
    %p56 = scmp.ne.s32.totalorder %s44, %s45
    %p57 = scmp.eq.s32.totalorder %s14, 1
    %p58 = por %p56, %p57
    %p60 = scmp.ne.s32.totalorder %s45, %s59
    %p61 = scmp.eq.s32.totalorder %s14, 0
    %p62 = por %p60, %p61
    %s63 = ssub.s32 %s8, %s15
    %p64 = scmp.eq.s32.totalorder %s63, 0
    %s66 = sadd.s32 %s65, 1
    %s67 = scalar_select %p64, %s65, %s66
    %p70 = pneg %p64
    %p71 = scmp.eq.s32.totalorder %s8, 1
    %p72 = por %p70, %p71
    %p73 = scmp.ne.s32.totalorder %s65, %s68
    %p74 = scmp.eq.s32.totalorder %s8, 0
    %p75 = por %p73, %p74
    %p76 = scmp.ne.s32.totalorder %s65, %s68
    %p77 = scmp.eq.s32.totalorder %s13, 1
    %p78 = por %p76, %p77
    %p79 = scmp.ne.s32.totalorder %s68, %s69
    %p80 = scmp.eq.s32.totalorder %s13, 0
    %p81 = por %p79, %p80
    %p82 = scmp.ne.s32.totalorder %s68, %s69
    %p83 = scmp.eq.s32.totalorder %s14, 1
    %p84 = por %p82, %p83
    %p86 = scmp.ne.s32.totalorder %s69, %s85
    %p87 = scmp.eq.s32.totalorder %s14, 0
    %p88 = por %p86, %p87
    %p89 = scmp.le.s32.totalorder 1, %s8
    %p90 = scmp.lt.s32.totalorder %s8, 3
    %p91 = pnand %p89, %p90
    %p92 = pneg %p91
    // Predicated region
    $region9: #{tpu_custom_call.1} parent=5 // pred_check
      _
    $region10: #{tpu_custom_call.1} parent=5 // pred_check_branch
      %94 = sbr.rel (%p91) target = $region12
    $region11: #{tpu_custom_call.1} parent=5 // pred_region
      %s95 = ssub.s32 %s8, 1
      // Predicated region
      $region13: #{tpu_custom_call.1} parent=11 // pred_check
        %p96 = pneg %p55
      $region14: #{tpu_custom_call.1} parent=11 // pred_check_branch
        %98 = sbr.rel (%p96) target = $region16
      $region15: #{tpu_custom_call.1} parent=11 // pred_region
        _
      $region16: #{tpu_custom_call.1} parent=11 // pred_fallthru
        _
    $region12: #{tpu_custom_call.1} parent=5 // pred_fallthru
      _
    %p99 = scmp.lt.s32.totalorder %s8, 2
    // Predicated region
    $region17: #{tpu_custom_call.1} parent=5 // pred_check
      %p100 = pneg %p99
    $region18: #{tpu_custom_call.1} parent=5 // pred_check_branch
      %102 = sbr.rel (%p100) target = $region20
    $region19: #{tpu_custom_call.1} parent=5 // pred_region
      // Predicated region
      $region21: #{tpu_custom_call.1} parent=19 // pred_check
        %p103 = pneg %p28
      $region22: #{tpu_custom_call.1} parent=19 // pred_check_branch
        %105 = sbr.rel (%p103) target = $region24
      $region23: #{tpu_custom_call.1} parent=19 // pred_region
        %p106 = scmp.lt.s32.totalorder %s8, 1
        %s107 = scalar_select %p106, %s8, 1
        %s108 = smul.addr %s107, 128
        %s109 = smul.addr %s108, 8
        %s110 = scalar_lea.vmem %s0, %s109
      $region24: #{tpu_custom_call.1} parent=19 // pred_fallthru
        _
    $region20: #{tpu_custom_call.1} parent=5 // pred_fallthru
      _
    %p111 = scmp.le.s32.totalorder 1, %s8
    %p112 = scmp.lt.s32.totalorder %s8, 3
    %p113 = pnand %p111, %p112
    %p114 = pneg %p113
    // Predicated region
    $region25: #{tpu_custom_call.1} parent=5 // pred_check
      _
    $region26: #{tpu_custom_call.1} parent=5 // pred_check_branch
      %116 = sbr.rel (%p113) target = $region28
    $region27: #{tpu_custom_call.1} parent=5 // pred_region
      %s117 = ssub.s32 %s8, 1
      %p118 = scmp.lt.s32.totalorder %s13, 1
      %s119 = scalar_select %p118, %s13, 1
      %s120 = smul.addr %s119, 128
      %s121 = smul.addr %s120, 8
      %s122 = scalar_lea.vmem %s0, %s121
      %p123 = pneg %p34
      %p124 = pneg %p31
      %p125 = pneg %p55
      %p126 = pneg %p52
      %p127 = pneg %p81
      %p128 = pneg %p78
      %p129 = scmp.lt.s32.totalorder %s13, 1
      %s130 = scalar_select %p129, %s13, 1
      %s131 = smul.addr %s130, 128
      %s132 = smul.addr %s131, 8
      %s133 = scalar_lea.vmem %s2, %s132
      %p134 = scmp.lt.s32.totalorder %s13, 1
      %s135 = scalar_select %p134, %s13, 1
      %s136 = smul.addr %s135, 128
      %s137 = smul.addr %s136, 8
      %s138 = scalar_lea.vmem %s0, %s137
      %p139 = scmp.lt.s32.totalorder %s13, 1
      %s140 = scalar_select %p139, %s13, 1
      %s141 = smul.addr %s140, 128
      %s142 = smul.addr %s141, 8
      %s143 = scalar_lea.vmem %s2, %s142
      %v145 = vld [vmem:[%s138] sm:$0xff]
      %v146 = vld [vmem:[%s138 + $0x8] sm:$0xff]
      %v147 = vld [vmem:[%s138 + $0x10] sm:$0xff]
      %v148 = vld [vmem:[%s138 + $0x18] sm:$0xff]
      %v149 = vld [vmem:[%s138 + $0x20] sm:$0xff]
      %v150 = vld [vmem:[%s138 + $0x28] sm:$0xff]
      %v151 = vld [vmem:[%s138 + $0x30] sm:$0xff]
      %v152 = vld [vmem:[%s138 + $0x38] sm:$0xff]
      %v153 = vld [vmem:[%s138 + $0x40] sm:$0xff]
      %v154 = vld [vmem:[%s138 + $0x48] sm:$0xff]
      %v155 = vld [vmem:[%s138 + $0x50] sm:$0xff]
      %v156 = vld [vmem:[%s138 + $0x58] sm:$0xff]
      %v157 = vld [vmem:[%s138 + $0x60] sm:$0xff]
      %v158 = vld [vmem:[%s138 + $0x68] sm:$0xff]
      %v159 = vld [vmem:[%s138 + $0x70] sm:$0xff]
      %v160 = vld [vmem:[%s138 + $0x78] sm:$0xff]
      %v161 = vld [vmem:[%s138 + $0x80] sm:$0xff]
      %v162 = vld [vmem:[%s138 + $0x88] sm:$0xff]
      %v163 = vld [vmem:[%s138 + $0x90] sm:$0xff]
      %v164 = vld [vmem:[%s138 + $0x98] sm:$0xff]
      %v165 = vld [vmem:[%s138 + $0xa0] sm:$0xff]
      %v166 = vld [vmem:[%s138 + $0xa8] sm:$0xff]
      %v167 = vld [vmem:[%s138 + $0xb0] sm:$0xff]
      %v168 = vld [vmem:[%s138 + $0xb8] sm:$0xff]
      %v169 = vld [vmem:[%s138 + $0xc0] sm:$0xff]
      %v170 = vld [vmem:[%s138 + $0xc8] sm:$0xff]
      %v171 = vld [vmem:[%s138 + $0xd0] sm:$0xff]
      %v172 = vld [vmem:[%s138 + $0xd8] sm:$0xff]
      %v173 = vld [vmem:[%s138 + $0xe0] sm:$0xff]
      %v174 = vld [vmem:[%s138 + $0xe8] sm:$0xff]
      %v175 = vld [vmem:[%s138 + $0xf0] sm:$0xff]
      %v176 = vld [vmem:[%s138 + $0xf8] sm:$0xff]
      %v177 = vld [vmem:[%s138 + $0x100] sm:$0xff]
      %v178 = vld [vmem:[%s138 + $0x108] sm:$0xff]
      %v179 = vld [vmem:[%s138 + $0x110] sm:$0xff]
      %v180 = vld [vmem:[%s138 + $0x118] sm:$0xff]
      %v181 = vld [vmem:[%s138 + $0x120] sm:$0xff]
      %v182 = vld [vmem:[%s138 + $0x128] sm:$0xff]
      %v183 = vld [vmem:[%s138 + $0x130] sm:$0xff]
      %v184 = vld [vmem:[%s138 + $0x138] sm:$0xff]
      %v185 = vld [vmem:[%s138 + $0x140] sm:$0xff]
      %v186 = vld [vmem:[%s138 + $0x148] sm:$0xff]
      %v187 = vld [vmem:[%s138 + $0x150] sm:$0xff]
      %v188 = vld [vmem:[%s138 + $0x158] sm:$0xff]
      %v189 = vld [vmem:[%s138 + $0x160] sm:$0xff]
      %v190 = vld [vmem:[%s138 + $0x168] sm:$0xff]
      %v191 = vld [vmem:[%s138 + $0x170] sm:$0xff]
      %v192 = vld [vmem:[%s138 + $0x178] sm:$0xff]
      %v193 = vld [vmem:[%s138 + $0x180] sm:$0xff]
      %v194 = vld [vmem:[%s138 + $0x188] sm:$0xff]
      %v195 = vld [vmem:[%s138 + $0x190] sm:$0xff]
      %v196 = vld [vmem:[%s138 + $0x198] sm:$0xff]
      %v197 = vld [vmem:[%s138 + $0x1a0] sm:$0xff]
      %v198 = vld [vmem:[%s138 + $0x1a8] sm:$0xff]
      %v199 = vld [vmem:[%s138 + $0x1b0] sm:$0xff]
      %v200 = vld [vmem:[%s138 + $0x1b8] sm:$0xff]
      %v201 = vld [vmem:[%s138 + $0x1c0] sm:$0xff]
      %v202 = vld [vmem:[%s138 + $0x1c8] sm:$0xff]
      %v203 = vld [vmem:[%s138 + $0x1d0] sm:$0xff]
      %v204 = vld [vmem:[%s138 + $0x1d8] sm:$0xff]
      %v205 = vld [vmem:[%s138 + $0x1e0] sm:$0xff]
      %v206 = vld [vmem:[%s138 + $0x1e8] sm:$0xff]
      %v207 = vld [vmem:[%s138 + $0x1f0] sm:$0xff]
      %v208 = vld [vmem:[%s138 + $0x1f8] sm:$0xff]
      %v209 = vld [vmem:[%s138 + $0x200] sm:$0xff]
      %v210 = vld [vmem:[%s138 + $0x208] sm:$0xff]
      %v211 = vld [vmem:[%s138 + $0x210] sm:$0xff]
      %v212 = vld [vmem:[%s138 + $0x218] sm:$0xff]
      %v213 = vld [vmem:[%s138 + $0x220] sm:$0xff]
      %v214 = vld [vmem:[%s138 + $0x228] sm:$0xff]
      %v215 = vld [vmem:[%s138 + $0x230] sm:$0xff]
      %v216 = vld [vmem:[%s138 + $0x238] sm:$0xff]
      %v217 = vld [vmem:[%s138 + $0x240] sm:$0xff]
      %v218 = vld [vmem:[%s138 + $0x248] sm:$0xff]
      %v219 = vld [vmem:[%s138 + $0x250] sm:$0xff]
      %v220 = vld [vmem:[%s138 + $0x258] sm:$0xff]
      %v221 = vld [vmem:[%s138 + $0x260] sm:$0xff]
      %v222 = vld [vmem:[%s138 + $0x268] sm:$0xff]
      %v223 = vld [vmem:[%s138 + $0x270] sm:$0xff]
      %v224 = vld [vmem:[%s138 + $0x278] sm:$0xff]
      %v225 = vld [vmem:[%s138 + $0x280] sm:$0xff]
      %v226 = vld [vmem:[%s138 + $0x288] sm:$0xff]
      %v227 = vld [vmem:[%s138 + $0x290] sm:$0xff]
      %v228 = vld [vmem:[%s138 + $0x298] sm:$0xff]
      %v229 = vld [vmem:[%s138 + $0x2a0] sm:$0xff]
      %v230 = vld [vmem:[%s138 + $0x2a8] sm:$0xff]
      %v231 = vld [vmem:[%s138 + $0x2b0] sm:$0xff]
      %v232 = vld [vmem:[%s138 + $0x2b8] sm:$0xff]
      %v233 = vld [vmem:[%s138 + $0x2c0] sm:$0xff]
      %v234 = vld [vmem:[%s138 + $0x2c8] sm:$0xff]
      %v235 = vld [vmem:[%s138 + $0x2d0] sm:$0xff]
      %v236 = vld [vmem:[%s138 + $0x2d8] sm:$0xff]
      %v237 = vld [vmem:[%s138 + $0x2e0] sm:$0xff]
      %v238 = vld [vmem:[%s138 + $0x2e8] sm:$0xff]
      %v239 = vld [vmem:[%s138 + $0x2f0] sm:$0xff]
      %v240 = vld [vmem:[%s138 + $0x2f8] sm:$0xff]
      %v241 = vld [vmem:[%s138 + $0x300] sm:$0xff]
      %v242 = vld [vmem:[%s138 + $0x308] sm:$0xff]
      %v243 = vld [vmem:[%s138 + $0x310] sm:$0xff]
      %v244 = vld [vmem:[%s138 + $0x318] sm:$0xff]
      %v245 = vld [vmem:[%s138 + $0x320] sm:$0xff]
      %v246 = vld [vmem:[%s138 + $0x328] sm:$0xff]
      %v247 = vld [vmem:[%s138 + $0x330] sm:$0xff]
      %v248 = vld [vmem:[%s138 + $0x338] sm:$0xff]
      %v249 = vld [vmem:[%s138 + $0x340] sm:$0xff]
      %v250 = vld [vmem:[%s138 + $0x348] sm:$0xff]
      %v251 = vld [vmem:[%s138 + $0x350] sm:$0xff]
      %v252 = vld [vmem:[%s138 + $0x358] sm:$0xff]
      %v253 = vld [vmem:[%s138 + $0x360] sm:$0xff]
      %v254 = vld [vmem:[%s138 + $0x368] sm:$0xff]
      %v255 = vld [vmem:[%s138 + $0x370] sm:$0xff]
      %v256 = vld [vmem:[%s138 + $0x378] sm:$0xff]
      %v257 = vld [vmem:[%s138 + $0x380] sm:$0xff]
      %v258 = vld [vmem:[%s138 + $0x388] sm:$0xff]
      %v259 = vld [vmem:[%s138 + $0x390] sm:$0xff]
      %v260 = vld [vmem:[%s138 + $0x398] sm:$0xff]
      %v261 = vld [vmem:[%s138 + $0x3a0] sm:$0xff]
      %v262 = vld [vmem:[%s138 + $0x3a8] sm:$0xff]
      %v263 = vld [vmem:[%s138 + $0x3b0] sm:$0xff]
      %v264 = vld [vmem:[%s138 + $0x3b8] sm:$0xff]
      %v265 = vld [vmem:[%s138 + $0x3c0] sm:$0xff]
      %v266 = vld [vmem:[%s138 + $0x3c8] sm:$0xff]
      %v267 = vld [vmem:[%s138 + $0x3d0] sm:$0xff]
      %v268 = vld [vmem:[%s138 + $0x3d8] sm:$0xff]
      %v269 = vld [vmem:[%s138 + $0x3e0] sm:$0xff]
      %v270 = vld [vmem:[%s138 + $0x3e8] sm:$0xff]
      %v271 = vld [vmem:[%s138 + $0x3f0] sm:$0xff]
      %v272 = vld [vmem:[%s138 + $0x3f8] sm:$0xff]
      %vm273 = vcmask 48128
      %274 = vst.msk [vmem:[#allocation2] sm:$0xff] %vm273, 0.0
      %275 = vst.msk [vmem:[#allocation2 + $0x8] sm:$0xff] %vm273, 0.0
      %276 = vst.msk [vmem:[#allocation2 + $0x10] sm:$0xff] %vm273, 0.0
      %277 = vst.msk [vmem:[#allocation2 + $0x18] sm:$0xff] %vm273, 0.0
      %vm278 = vcmask 41984
      %279 = vst.msk [vmem:[#allocation2 + $0x20] sm:$0x3] %vm278, 0.0
      %s280 = scalar_lea.vmem [#allocation2], 1320
      %281 = vst.msk [vmem:[%s280] sm:$0xff] %vm273, 0.0
      %282 = vst.msk [vmem:[%s280 + $0x8] sm:$0xff] %vm273, 0.0
      %283 = vst.msk [vmem:[%s280 + $0x10] sm:$0xff] %vm273, 0.0
      %284 = vst.msk [vmem:[%s280 + $0x18] sm:$0xff] %vm273, 0.0
      %285 = vst.msk [vmem:[%s280 + $0x20] sm:$0x3] %vm278, 0.0
      %s286 = scalar_lea.vmem [#allocation2], 40
      %vm287 = vcmask 40960
      %288 = vst.msk [vmem:[%s286] sm:$0x1] %vm287, 0.0
      %289 = vst.msk [vmem:[%s286 + $0x28] sm:$0x1] %vm287, 0.0
      %290 = vst.msk [vmem:[%s286 + $0x50] sm:$0x1] %vm287, 0.0
      %291 = vst.msk [vmem:[%s286 + $0x78] sm:$0x1] %vm287, 0.0
      %292 = vst.msk [vmem:[%s286 + $0xa0] sm:$0x1] %vm287, 0.0
      %293 = vst.msk [vmem:[%s286 + $0xc8] sm:$0x1] %vm287, 0.0
      %294 = vst.msk [vmem:[%s286 + $0xf0] sm:$0x1] %vm287, 0.0
      %295 = vst.msk [vmem:[%s286 + $0x118] sm:$0x1] %vm287, 0.0
      %296 = vst.msk [vmem:[%s286 + $0x140] sm:$0x1] %vm287, 0.0
      %297 = vst.msk [vmem:[%s286 + $0x168] sm:$0x1] %vm287, 0.0
      %298 = vst.msk [vmem:[%s286 + $0x190] sm:$0x1] %vm287, 0.0
      %299 = vst.msk [vmem:[%s286 + $0x1b8] sm:$0x1] %vm287, 0.0
      %300 = vst.msk [vmem:[%s286 + $0x1e0] sm:$0x1] %vm287, 0.0
      %301 = vst.msk [vmem:[%s286 + $0x208] sm:$0x1] %vm287, 0.0
      %302 = vst.msk [vmem:[%s286 + $0x230] sm:$0x1] %vm287, 0.0
      %303 = vst.msk [vmem:[%s286 + $0x258] sm:$0x1] %vm287, 0.0
      %304 = vst.msk [vmem:[%s286 + $0x280] sm:$0x1] %vm287, 0.0
      %305 = vst.msk [vmem:[%s286 + $0x2a8] sm:$0x1] %vm287, 0.0
      %306 = vst.msk [vmem:[%s286 + $0x2d0] sm:$0x1] %vm287, 0.0
      %307 = vst.msk [vmem:[%s286 + $0x2f8] sm:$0x1] %vm287, 0.0
      %308 = vst.msk [vmem:[%s286 + $0x320] sm:$0x1] %vm287, 0.0
      %309 = vst.msk [vmem:[%s286 + $0x348] sm:$0x1] %vm287, 0.0
      %310 = vst.msk [vmem:[%s286 + $0x370] sm:$0x1] %vm287, 0.0
      %311 = vst.msk [vmem:[%s286 + $0x398] sm:$0x1] %vm287, 0.0
      %312 = vst.msk [vmem:[%s286 + $0x3c0] sm:$0x1] %vm287, 0.0
      %313 = vst.msk [vmem:[%s286 + $0x3e8] sm:$0x1] %vm287, 0.0
      %314 = vst.msk [vmem:[%s286 + $0x410] sm:$0x1] %vm287, 0.0
      %315 = vst.msk [vmem:[%s286 + $0x438] sm:$0x1] %vm287, 0.0
      %316 = vst.msk [vmem:[%s286 + $0x460] sm:$0x1] %vm287, 0.0
      %317 = vst.msk [vmem:[%s286 + $0x488] sm:$0x1] %vm287, 0.0
      %318 = vst.msk [vmem:[%s286 + $0x4b0] sm:$0x1] %vm287, 0.0
      %319 = vst.msk [vmem:[%s286 + $0x4d8] sm:$0x1] %vm287, 0.0
      %320 = vst.msk [vmem:[%s286 + $0x21] sm:$0x1] %vm287, 0.0
      %321 = vst.msk [vmem:[%s286 + $0x49] sm:$0x1] %vm287, 0.0
      %322 = vst.msk [vmem:[%s286 + $0x71] sm:$0x1] %vm287, 0.0
      %323 = vst.msk [vmem:[%s286 + $0x99] sm:$0x1] %vm287, 0.0
      %324 = vst.msk [vmem:[%s286 + $0xc1] sm:$0x1] %vm287, 0.0
      %325 = vst.msk [vmem:[%s286 + $0xe9] sm:$0x1] %vm287, 0.0
      %326 = vst.msk [vmem:[%s286 + $0x111] sm:$0x1] %vm287, 0.0
      %327 = vst.msk [vmem:[%s286 + $0x139] sm:$0x1] %vm287, 0.0
      %328 = vst.msk [vmem:[%s286 + $0x161] sm:$0x1] %vm287, 0.0
      %329 = vst.msk [vmem:[%s286 + $0x189] sm:$0x1] %vm287, 0.0
      %330 = vst.msk [vmem:[%s286 + $0x1b1] sm:$0x1] %vm287, 0.0
      %331 = vst.msk [vmem:[%s286 + $0x1d9] sm:$0x1] %vm287, 0.0
      %332 = vst.msk [vmem:[%s286 + $0x201] sm:$0x1] %vm287, 0.0
      %333 = vst.msk [vmem:[%s286 + $0x229] sm:$0x1] %vm287, 0.0
      %334 = vst.msk [vmem:[%s286 + $0x251] sm:$0x1] %vm287, 0.0
      %335 = vst.msk [vmem:[%s286 + $0x279] sm:$0x1] %vm287, 0.0
      %336 = vst.msk [vmem:[%s286 + $0x2a1] sm:$0x1] %vm287, 0.0
      %337 = vst.msk [vmem:[%s286 + $0x2c9] sm:$0x1] %vm287, 0.0
      %338 = vst.msk [vmem:[%s286 + $0x2f1] sm:$0x1] %vm287, 0.0
      %339 = vst.msk [vmem:[%s286 + $0x319] sm:$0x1] %vm287, 0.0
      %340 = vst.msk [vmem:[%s286 + $0x341] sm:$0x1] %vm287, 0.0
      %341 = vst.msk [vmem:[%s286 + $0x369] sm:$0x1] %vm287, 0.0
      %342 = vst.msk [vmem:[%s286 + $0x391] sm:$0x1] %vm287, 0.0
      %343 = vst.msk [vmem:[%s286 + $0x3b9] sm:$0x1] %vm287, 0.0
      %344 = vst.msk [vmem:[%s286 + $0x3e1] sm:$0x1] %vm287, 0.0
      %345 = vst.msk [vmem:[%s286 + $0x409] sm:$0x1] %vm287, 0.0
      %346 = vst.msk [vmem:[%s286 + $0x431] sm:$0x1] %vm287, 0.0
      %347 = vst.msk [vmem:[%s286 + $0x459] sm:$0x1] %vm287, 0.0
      %348 = vst.msk [vmem:[%s286 + $0x481] sm:$0x1] %vm287, 0.0
      %349 = vst.msk [vmem:[%s286 + $0x4a9] sm:$0x1] %vm287, 0.0
      %350 = vst.msk [vmem:[%s286 + $0x4d1] sm:$0x1] %vm287, 0.0
      %351 = vst.msk [vmem:[%s286 + $0x4f9] sm:$0x1] %vm287, 0.0
      %352 = vst.msk [vmem:[%s286 + $0x1] sm:$0xff] %vm273, %v145
      %353 = vst.msk [vmem:[%s286 + $0x9] sm:$0xff] %vm273, %v146
      %354 = vst.msk [vmem:[%s286 + $0x11] sm:$0xff] %vm273, %v147
      %355 = vst.msk [vmem:[%s286 + $0x19] sm:$0xff] %vm273, %v148
      %356 = vst.msk [vmem:[%s286 + $0x29] sm:$0xff] %vm273, %v149
      %357 = vst.msk [vmem:[%s286 + $0x31] sm:$0xff] %vm273, %v150
      %358 = vst.msk [vmem:[%s286 + $0x39] sm:$0xff] %vm273, %v151
      %359 = vst.msk [vmem:[%s286 + $0x41] sm:$0xff] %vm273, %v152
      %360 = vst.msk [vmem:[%s286 + $0x51] sm:$0xff] %vm273, %v153
      %361 = vst.msk [vmem:[%s286 + $0x59] sm:$0xff] %vm273, %v154
      %362 = vst.msk [vmem:[%s286 + $0x61] sm:$0xff] %vm273, %v155
      %363 = vst.msk [vmem:[%s286 + $0x69] sm:$0xff] %vm273, %v156
      %364 = vst.msk [vmem:[%s286 + $0x79] sm:$0xff] %vm273, %v157
      %365 = vst.msk [vmem:[%s286 + $0x81] sm:$0xff] %vm273, %v158
      %366 = vst.msk [vmem:[%s286 + $0x89] sm:$0xff] %vm273, %v159
      %367 = vst.msk [vmem:[%s286 + $0x91] sm:$0xff] %vm273, %v160
      %368 = vst.msk [vmem:[%s286 + $0xa1] sm:$0xff] %vm273, %v161
      %369 = vst.msk [vmem:[%s286 + $0xa9] sm:$0xff] %vm273, %v162
      %370 = vst.msk [vmem:[%s286 + $0xb1] sm:$0xff] %vm273, %v163
      %371 = vst.msk [vmem:[%s286 + $0xb9] sm:$0xff] %vm273, %v164
      %372 = vst.msk [vmem:[%s286 + $0xc9] sm:$0xff] %vm273, %v165
      %373 = vst.msk [vmem:[%s286 + $0xd1] sm:$0xff] %vm273, %v166
      %374 = vst.msk [vmem:[%s286 + $0xd9] sm:$0xff] %vm273, %v167
      %375 = vst.msk [vmem:[%s286 + $0xe1] sm:$0xff] %vm273, %v168
      %376 = vst.msk [vmem:[%s286 + $0xf1] sm:$0xff] %vm273, %v169
      %377 = vst.msk [vmem:[%s286 + $0xf9] sm:$0xff] %vm273, %v170
      %378 = vst.msk [vmem:[%s286 + $0x101] sm:$0xff] %vm273, %v171
      %379 = vst.msk [vmem:[%s286 + $0x109] sm:$0xff] %vm273, %v172
      %380 = vst.msk [vmem:[%s286 + $0x119] sm:$0xff] %vm273, %v173
      %381 = vst.msk [vmem:[%s286 + $0x121] sm:$0xff] %vm273, %v174
      %382 = vst.msk [vmem:[%s286 + $0x129] sm:$0xff] %vm273, %v175
      %383 = vst.msk [vmem:[%s286 + $0x131] sm:$0xff] %vm273, %v176
      %384 = vst.msk [vmem:[%s286 + $0x141] sm:$0xff] %vm273, %v177
      %385 = vst.msk [vmem:[%s286 + $0x149] sm:$0xff] %vm273, %v178
      %386 = vst.msk [vmem:[%s286 + $0x151] sm:$0xff] %vm273, %v179
      %387 = vst.msk [vmem:[%s286 + $0x159] sm:$0xff] %vm273, %v180
      %388 = vst.msk [vmem:[%s286 + $0x169] sm:$0xff] %vm273, %v181
      %389 = vst.msk [vmem:[%s286 + $0x171] sm:$0xff] %vm273, %v182
      %390 = vst.msk [vmem:[%s286 + $0x179] sm:$0xff] %vm273, %v183
      %391 = vst.msk [vmem:[%s286 + $0x181] sm:$0xff] %vm273, %v184
      %392 = vst.msk [vmem:[%s286 + $0x191] sm:$0xff] %vm273, %v185
      %393 = vst.msk [vmem:[%s286 + $0x199] sm:$0xff] %vm273, %v186
      %394 = vst.msk [vmem:[%s286 + $0x1a1] sm:$0xff] %vm273, %v187
      %395 = vst.msk [vmem:[%s286 + $0x1a9] sm:$0xff] %vm273, %v188
      %396 = vst.msk [vmem:[%s286 + $0x1b9] sm:$0xff] %vm273, %v189
      %397 = vst.msk [vmem:[%s286 + $0x1c1] sm:$0xff] %vm273, %v190
      %398 = vst.msk [vmem:[%s286 + $0x1c9] sm:$0xff] %vm273, %v191
      %399 = vst.msk [vmem:[%s286 + $0x1d1] sm:$0xff] %vm273, %v192
      %400 = vst.msk [vmem:[%s286 + $0x1e1] sm:$0xff] %vm273, %v193
      %401 = vst.msk [vmem:[%s286 + $0x1e9] sm:$0xff] %vm273, %v194
      %402 = vst.msk [vmem:[%s286 + $0x1f1] sm:$0xff] %vm273, %v195
      %403 = vst.msk [vmem:[%s286 + $0x1f9] sm:$0xff] %vm273, %v196
      %404 = vst.msk [vmem:[%s286 + $0x209] sm:$0xff] %vm273, %v197
      %405 = vst.msk [vmem:[%s286 + $0x211] sm:$0xff] %vm273, %v198
      %406 = vst.msk [vmem:[%s286 + $0x219] sm:$0xff] %vm273, %v199
      %407 = vst.msk [vmem:[%s286 + $0x221] sm:$0xff] %vm273, %v200
      %408 = vst.msk [vmem:[%s286 + $0x231] sm:$0xff] %vm273, %v201
      %409 = vst.msk [vmem:[%s286 + $0x239] sm:$0xff] %vm273, %v202
      %410 = vst.msk [vmem:[%s286 + $0x241] sm:$0xff] %vm273, %v203
      %411 = vst.msk [vmem:[%s286 + $0x249] sm:$0xff] %vm273, %v204
      %412 = vst.msk [vmem:[%s286 + $0x259] sm:$0xff] %vm273, %v205
      %413 = vst.msk [vmem:[%s286 + $0x261] sm:$0xff] %vm273, %v206
      %414 = vst.msk [vmem:[%s286 + $0x269] sm:$0xff] %vm273, %v207
      %415 = vst.msk [vmem:[%s286 + $0x271] sm:$0xff] %vm273, %v208
      %416 = vst.msk [vmem:[%s286 + $0x281] sm:$0xff] %vm273, %v209
      %417 = vst.msk [vmem:[%s286 + $0x289] sm:$0xff] %vm273, %v210
      %418 = vst.msk [vmem:[%s286 + $0x291] sm:$0xff] %vm273, %v211
      %419 = vst.msk [vmem:[%s286 + $0x299] sm:$0xff] %vm273, %v212
      %420 = vst.msk [vmem:[%s286 + $0x2a9] sm:$0xff] %vm273, %v213
      %421 = vst.msk [vmem:[%s286 + $0x2b1] sm:$0xff] %vm273, %v214
      %422 = vst.msk [vmem:[%s286 + $0x2b9] sm:$0xff] %vm273, %v215
      %423 = vst.msk [vmem:[%s286 + $0x2c1] sm:$0xff] %vm273, %v216
      %424 = vst.msk [vmem:[%s286 + $0x2d1] sm:$0xff] %vm273, %v217
      %425 = vst.msk [vmem:[%s286 + $0x2d9] sm:$0xff] %vm273, %v218
      %426 = vst.msk [vmem:[%s286 + $0x2e1] sm:$0xff] %vm273, %v219
      %427 = vst.msk [vmem:[%s286 + $0x2e9] sm:$0xff] %vm273, %v220
      %428 = vst.msk [vmem:[%s286 + $0x2f9] sm:$0xff] %vm273, %v221
      %429 = vst.msk [vmem:[%s286 + $0x301] sm:$0xff] %vm273, %v222
      %430 = vst.msk [vmem:[%s286 + $0x309] sm:$0xff] %vm273, %v223
      %431 = vst.msk [vmem:[%s286 + $0x311] sm:$0xff] %vm273, %v224
      %432 = vst.msk [vmem:[%s286 + $0x321] sm:$0xff] %vm273, %v225
      %433 = vst.msk [vmem:[%s286 + $0x329] sm:$0xff] %vm273, %v226
      %434 = vst.msk [vmem:[%s286 + $0x331] sm:$0xff] %vm273, %v227
      %435 = vst.msk [vmem:[%s286 + $0x339] sm:$0xff] %vm273, %v228
      %436 = vst.msk [vmem:[%s286 + $0x349] sm:$0xff] %vm273, %v229
      %437 = vst.msk [vmem:[%s286 + $0x351] sm:$0xff] %vm273, %v230
      %438 = vst.msk [vmem:[%s286 + $0x359] sm:$0xff] %vm273, %v231
      %439 = vst.msk [vmem:[%s286 + $0x361] sm:$0xff] %vm273, %v232
      %440 = vst.msk [vmem:[%s286 + $0x371] sm:$0xff] %vm273, %v233
      %441 = vst.msk [vmem:[%s286 + $0x379] sm:$0xff] %vm273, %v234
      %442 = vst.msk [vmem:[%s286 + $0x381] sm:$0xff] %vm273, %v235
      %443 = vst.msk [vmem:[%s286 + $0x389] sm:$0xff] %vm273, %v236
      %444 = vst.msk [vmem:[%s286 + $0x399] sm:$0xff] %vm273, %v237
      %445 = vst.msk [vmem:[%s286 + $0x3a1] sm:$0xff] %vm273, %v238
      %446 = vst.msk [vmem:[%s286 + $0x3a9] sm:$0xff] %vm273, %v239
      %447 = vst.msk [vmem:[%s286 + $0x3b1] sm:$0xff] %vm273, %v240
      %448 = vst.msk [vmem:[%s286 + $0x3c1] sm:$0xff] %vm273, %v241
      %449 = vst.msk [vmem:[%s286 + $0x3c9] sm:$0xff] %vm273, %v242
      %450 = vst.msk [vmem:[%s286 + $0x3d1] sm:$0xff] %vm273, %v243
      %451 = vst.msk [vmem:[%s286 + $0x3d9] sm:$0xff] %vm273, %v244
      %452 = vst.msk [vmem:[%s286 + $0x3e9] sm:$0xff] %vm273, %v245
      %453 = vst.msk [vmem:[%s286 + $0x3f1] sm:$0xff] %vm273, %v246
      %454 = vst.msk [vmem:[%s286 + $0x3f9] sm:$0xff] %vm273, %v247
      %455 = vst.msk [vmem:[%s286 + $0x401] sm:$0xff] %vm273, %v248
      %456 = vst.msk [vmem:[%s286 + $0x411] sm:$0xff] %vm273, %v249
      %457 = vst.msk [vmem:[%s286 + $0x419] sm:$0xff] %vm273, %v250
      %458 = vst.msk [vmem:[%s286 + $0x421] sm:$0xff] %vm273, %v251
      %459 = vst.msk [vmem:[%s286 + $0x429] sm:$0xff] %vm273, %v252
      %460 = vst.msk [vmem:[%s286 + $0x439] sm:$0xff] %vm273, %v253
      %461 = vst.msk [vmem:[%s286 + $0x441] sm:$0xff] %vm273, %v254
      %462 = vst.msk [vmem:[%s286 + $0x449] sm:$0xff] %vm273, %v255
      %463 = vst.msk [vmem:[%s286 + $0x451] sm:$0xff] %vm273, %v256
      %464 = vst.msk [vmem:[%s286 + $0x461] sm:$0xff] %vm273, %v257
      %465 = vst.msk [vmem:[%s286 + $0x469] sm:$0xff] %vm273, %v258
      %466 = vst.msk [vmem:[%s286 + $0x471] sm:$0xff] %vm273, %v259
      %467 = vst.msk [vmem:[%s286 + $0x479] sm:$0xff] %vm273, %v260
      %468 = vst.msk [vmem:[%s286 + $0x489] sm:$0xff] %vm273, %v261
      %469 = vst.msk [vmem:[%s286 + $0x491] sm:$0xff] %vm273, %v262
      %470 = vst.msk [vmem:[%s286 + $0x499] sm:$0xff] %vm273, %v263
      %471 = vst.msk [vmem:[%s286 + $0x4a1] sm:$0xff] %vm273, %v264
      %472 = vst.msk [vmem:[%s286 + $0x4b1] sm:$0xff] %vm273, %v265
      %473 = vst.msk [vmem:[%s286 + $0x4b9] sm:$0xff] %vm273, %v266
      %474 = vst.msk [vmem:[%s286 + $0x4c1] sm:$0xff] %vm273, %v267
      %475 = vst.msk [vmem:[%s286 + $0x4c9] sm:$0xff] %vm273, %v268
      %476 = vst.msk [vmem:[%s286 + $0x4d9] sm:$0xff] %vm273, %v269
      %477 = vst.msk [vmem:[%s286 + $0x4e1] sm:$0xff] %vm273, %v270
      %478 = vst.msk [vmem:[%s286 + $0x4e9] sm:$0xff] %vm273, %v271
      %479 = vst.msk [vmem:[%s286 + $0x4f1] sm:$0xff] %vm273, %v272
      %v480 = vld [vmem:[%s1] sm:$0xf]
      %v481 = vld [vmem:[%s1 + $0x4] sm:$0xf]
      %v482 = vld [vmem:[%s1 + $0x8] sm:$0xf]
      %v483 = vld [vmem:[%s1 + $0xc] sm:$0xf]
      %v484 = vld [vmem:[%s1 + $0x10] sm:$0xf]
      %v485 = vld [vmem:[%s1 + $0x14] sm:$0xf]
      %v486 = vld [vmem:[%s1 + $0x18] sm:$0x7]
      %v487 = vld [vmem:[#allocation2] sm:$0xff]
      %v488 = vld [vmem:[#allocation2 + $0x8] sm:$0xff]
      %v489 = vld [vmem:[#allocation2 + $0x10] sm:$0xff]
      %v490 = vld [vmem:[#allocation2 + $0x18] sm:$0xff]
      %v491 = vld [vmem:[#allocation2 + $0x28] sm:$0xff]
      %v492 = vld [vmem:[#allocation2 + $0x30] sm:$0xff]
      %v493 = vld [vmem:[#allocation2 + $0x38] sm:$0xff]
      %v494 = vld [vmem:[#allocation2 + $0x40] sm:$0xff]
      %v495 = vld [vmem:[#allocation2 + $0x50] sm:$0xff]
      %v496 = vld [vmem:[#allocation2 + $0x58] sm:$0xff]
      %v497 = vld [vmem:[#allocation2 + $0x60] sm:$0xff]
      %v498 = vld [vmem:[#allocation2 + $0x68] sm:$0xff]
      %v499 = vld [vmem:[#allocation2 + $0x78] sm:$0xff]
      %v500 = vld [vmem:[#allocation2 + $0x80] sm:$0xff]
      %v501 = vld [vmem:[#allocation2 + $0x88] sm:$0xff]
      %v502 = vld [vmem:[#allocation2 + $0x90] sm:$0xff]
      %v503 = vld [vmem:[#allocation2 + $0xa0] sm:$0xff]
      %v504 = vld [vmem:[#allocation2 + $0xa8] sm:$0xff]
      %v505 = vld [vmem:[#allocation2 + $0xb0] sm:$0xff]
      %v506 = vld [vmem:[#allocation2 + $0xb8] sm:$0xff]
      %v507 = vld [vmem:[#allocation2 + $0xc8] sm:$0xff]
      %v508 = vld [vmem:[#allocation2 + $0xd0] sm:$0xff]
      %v509 = vld [vmem:[#allocation2 + $0xd8] sm:$0xff]
      %v510 = vld [vmem:[#allocation2 + $0xe0] sm:$0xff]
      %v511 = vld [vmem:[#allocation2 + $0xf0] sm:$0xff]
      %v512 = vld [vmem:[#allocation2 + $0xf8] sm:$0xff]
      %v513 = vld [vmem:[#allocation2 + $0x100] sm:$0xff]
      %v514 = vld [vmem:[#allocation2 + $0x108] sm:$0xff]
      %v515 = vld [vmem:[#allocation2 + $0x118] sm:$0xff]
      %v516 = vld [vmem:[#allocation2 + $0x120] sm:$0xff]
      %v517 = vld [vmem:[#allocation2 + $0x128] sm:$0xff]
      %v518 = vld [vmem:[#allocation2 + $0x130] sm:$0xff]
      %v519 = vld [vmem:[#allocation2 + $0x140] sm:$0xff]
      %v520 = vld [vmem:[#allocation2 + $0x148] sm:$0xff]
      %v521 = vld [vmem:[#allocation2 + $0x150] sm:$0xff]
      %v522 = vld [vmem:[#allocation2 + $0x158] sm:$0xff]
      %v523 = vld [vmem:[#allocation2 + $0x168] sm:$0xff]
      %v524 = vld [vmem:[#allocation2 + $0x170] sm:$0xff]
      %v525 = vld [vmem:[#allocation2 + $0x178] sm:$0xff]
      %v526 = vld [vmem:[#allocation2 + $0x180] sm:$0xff]
      %v527 = vld [vmem:[#allocation2 + $0x190] sm:$0xff]
      %v528 = vld [vmem:[#allocation2 + $0x198] sm:$0xff]
      %v529 = vld [vmem:[#allocation2 + $0x1a0] sm:$0xff]
      %v530 = vld [vmem:[#allocation2 + $0x1a8] sm:$0xff]
      %v531 = vld [vmem:[#allocation2 + $0x1b8] sm:$0xff]
      %v532 = vld [vmem:[#allocation2 + $0x1c0] sm:$0xff]
      %v533 = vld [vmem:[#allocation2 + $0x1c8] sm:$0xff]
      %v534 = vld [vmem:[#allocation2 + $0x1d0] sm:$0xff]
      %v535 = vld [vmem:[#allocation2 + $0x1e0] sm:$0xff]
      %v536 = vld [vmem:[#allocation2 + $0x1e8] sm:$0xff]
      %v537 = vld [vmem:[#allocation2 + $0x1f0] sm:$0xff]
      %v538 = vld [vmem:[#allocation2 + $0x1f8] sm:$0xff]
      %v539 = vld [vmem:[#allocation2 + $0x208] sm:$0xff]
      %v540 = vld [vmem:[#allocation2 + $0x210] sm:$0xff]
      %v541 = vld [vmem:[#allocation2 + $0x218] sm:$0xff]
      %v542 = vld [vmem:[#allocation2 + $0x220] sm:$0xff]
      %v543 = vld [vmem:[#allocation2 + $0x230] sm:$0xff]
      %v544 = vld [vmem:[#allocation2 + $0x238] sm:$0xff]
      %v545 = vld [vmem:[#allocation2 + $0x240] sm:$0xff]
      %v546 = vld [vmem:[#allocation2 + $0x248] sm:$0xff]
      %v547 = vld [vmem:[#allocation2 + $0x258] sm:$0xff]
      %v548 = vld [vmem:[#allocation2 + $0x260] sm:$0xff]
      %v549 = vld [vmem:[#allocation2 + $0x268] sm:$0xff]
      %v550 = vld [vmem:[#allocation2 + $0x270] sm:$0xff]
      %v551 = vld [vmem:[#allocation2 + $0x280] sm:$0xff]
      %v552 = vld [vmem:[#allocation2 + $0x288] sm:$0xff]
      %v553 = vld [vmem:[#allocation2 + $0x290] sm:$0xff]
      %v554 = vld [vmem:[#allocation2 + $0x298] sm:$0xff]
      %v555 = vld [vmem:[#allocation2 + $0x2a8] sm:$0xff]
      %v556 = vld [vmem:[#allocation2 + $0x2b0] sm:$0xff]
      %v557 = vld [vmem:[#allocation2 + $0x2b8] sm:$0xff]
      %v558 = vld [vmem:[#allocation2 + $0x2c0] sm:$0xff]
      %v559 = vld [vmem:[#allocation2 + $0x2d0] sm:$0xff]
      %v560 = vld [vmem:[#allocation2 + $0x2d8] sm:$0xff]
      %v561 = vld [vmem:[#allocation2 + $0x2e0] sm:$0xff]
      %v562 = vld [vmem:[#allocation2 + $0x2e8] sm:$0xff]
      %v563 = vld [vmem:[#allocation2 + $0x2f8] sm:$0xff]
      %v564 = vld [vmem:[#allocation2 + $0x300] sm:$0xff]
      %v565 = vld [vmem:[#allocation2 + $0x308] sm:$0xff]
      %v566 = vld [vmem:[#allocation2 + $0x310] sm:$0xff]
      %v567 = vld [vmem:[#allocation2 + $0x320] sm:$0xff]
      %v568 = vld [vmem:[#allocation2 + $0x328] sm:$0xff]
      %v569 = vld [vmem:[#allocation2 + $0x330] sm:$0xff]
      %v570 = vld [vmem:[#allocation2 + $0x338] sm:$0xff]
      %v571 = vld [vmem:[#allocation2 + $0x348] sm:$0xff]
      %v572 = vld [vmem:[#allocation2 + $0x350] sm:$0xff]
      %v573 = vld [vmem:[#allocation2 + $0x358] sm:$0xff]
      %v574 = vld [vmem:[#allocation2 + $0x360] sm:$0xff]
      %v575 = vld [vmem:[#allocation2 + $0x370] sm:$0xff]
      %v576 = vld [vmem:[#allocation2 + $0x378] sm:$0xff]
      %v577 = vld [vmem:[#allocation2 + $0x380] sm:$0xff]
      %v578 = vld [vmem:[#allocation2 + $0x388] sm:$0xff]
      %v579 = vld [vmem:[#allocation2 + $0x398] sm:$0xff]
      %v580 = vld [vmem:[#allocation2 + $0x3a0] sm:$0xff]
      %v581 = vld [vmem:[#allocation2 + $0x3a8] sm:$0xff]
      %v582 = vld [vmem:[#allocation2 + $0x3b0] sm:$0xff]
      %v583 = vld [vmem:[#allocation2 + $0x3c0] sm:$0xff]
      %v584 = vld [vmem:[#allocation2 + $0x3c8] sm:$0xff]
      %v585 = vld [vmem:[#allocation2 + $0x3d0] sm:$0xff]
      %v586 = vld [vmem:[#allocation2 + $0x3d8] sm:$0xff]
      %v587 = vld [vmem:[#allocation2 + $0x3e8] sm:$0xff]
      %v588 = vld [vmem:[#allocation2 + $0x3f0] sm:$0xff]
      %v589 = vld [vmem:[#allocation2 + $0x3f8] sm:$0xff]
      %v590 = vld [vmem:[#allocation2 + $0x400] sm:$0xff]
      %v591 = vld [vmem:[#allocation2 + $0x410] sm:$0xff]
      %v592 = vld [vmem:[#allocation2 + $0x418] sm:$0xff]
      %v593 = vld [vmem:[#allocation2 + $0x420] sm:$0xff]
      %v594 = vld [vmem:[#allocation2 + $0x428] sm:$0xff]
      %v595 = vld [vmem:[#allocation2 + $0x438] sm:$0xff]
      %v596 = vld [vmem:[#allocation2 + $0x440] sm:$0xff]
      %v597 = vld [vmem:[#allocation2 + $0x448] sm:$0xff]
      %v598 = vld [vmem:[#allocation2 + $0x450] sm:$0xff]
      %v599 = vld [vmem:[#allocation2 + $0x460] sm:$0xff]
      %v600 = vld [vmem:[#allocation2 + $0x468] sm:$0xff]
      %v601 = vld [vmem:[#allocation2 + $0x470] sm:$0xff]
      %v602 = vld [vmem:[#allocation2 + $0x478] sm:$0xff]
      %v603 = vld [vmem:[#allocation2 + $0x488] sm:$0xff]
      %v604 = vld [vmem:[#allocation2 + $0x490] sm:$0xff]
      %v605 = vld [vmem:[#allocation2 + $0x498] sm:$0xff]
      %v606 = vld [vmem:[#allocation2 + $0x4a0] sm:$0xff]
      %v607 = vld [vmem:[#allocation2 + $0x4b0] sm:$0xff]
      %v608 = vld [vmem:[#allocation2 + $0x4b8] sm:$0xff]
      %v609 = vld [vmem:[#allocation2 + $0x4c0] sm:$0xff]
      %v610 = vld [vmem:[#allocation2 + $0x4c8] sm:$0xff]
      %v611 = vld [vmem:[#allocation2 + $0x4d8] sm:$0xff]
      %v612 = vld [vmem:[#allocation2 + $0x4e0] sm:$0xff]
      %v613 = vld [vmem:[#allocation2 + $0x4e8] sm:$0xff]
      %v614 = vld [vmem:[#allocation2 + $0x4f0] sm:$0xff]
      %v615 = vpack.c.bf16 %v488, %v487
      %v616 = vpack.c.bf16 %v490, %v489
      %v617 = vpack.c.bf16 %v492, %v491
      %v618 = vpack.c.bf16 %v494, %v493
      %v619 = vpack.c.bf16 %v496, %v495
      %v620 = vpack.c.bf16 %v498, %v497
      %v621 = vpack.c.bf16 %v500, %v499
      %v622 = vpack.c.bf16 %v502, %v501
      %v623 = vpack.c.bf16 %v504, %v503
      %v624 = vpack.c.bf16 %v506, %v505
      %v625 = vpack.c.bf16 %v508, %v507
      %v626 = vpack.c.bf16 %v510, %v509
      %v627 = vpack.c.bf16 %v512, %v511
      %v628 = vpack.c.bf16 %v514, %v513
      %v629 = vpack.c.bf16 %v516, %v515
      %v630 = vpack.c.bf16 %v518, %v517
      %v631 = vpack.c.bf16 %v520, %v519
      %v632 = vpack.c.bf16 %v522, %v521
      %v633 = vpack.c.bf16 %v524, %v523
      %v634 = vpack.c.bf16 %v526, %v525
      %v635 = vpack.c.bf16 %v528, %v527
      %v636 = vpack.c.bf16 %v530, %v529
      %v637 = vpack.c.bf16 %v532, %v531
      %v638 = vpack.c.bf16 %v534, %v533
      %v639 = vpack.c.bf16 %v536, %v535
      %v640 = vpack.c.bf16 %v538, %v537
      %v641 = vpack.c.bf16 %v540, %v539
      %v642 = vpack.c.bf16 %v542, %v541
      %v643 = vpack.c.bf16 %v544, %v543
      %v644 = vpack.c.bf16 %v546, %v545
      %v645 = vpack.c.bf16 %v548, %v547
      %v646 = vpack.c.bf16 %v550, %v549
      %v647 = vpack.c.bf16 %v552, %v551
      %v648 = vpack.c.bf16 %v554, %v553
      %v649 = vpack.c.bf16 %v556, %v555
      %v650 = vpack.c.bf16 %v558, %v557
      %v651 = vpack.c.bf16 %v560, %v559
      %v652 = vpack.c.bf16 %v562, %v561
      %v653 = vpack.c.bf16 %v564, %v563
      %v654 = vpack.c.bf16 %v566, %v565
      %v655 = vpack.c.bf16 %v568, %v567
      %v656 = vpack.c.bf16 %v570, %v569
      %v657 = vpack.c.bf16 %v572, %v571
      %v658 = vpack.c.bf16 %v574, %v573
      %v659 = vpack.c.bf16 %v576, %v575
      %v660 = vpack.c.bf16 %v578, %v577
      %v661 = vpack.c.bf16 %v580, %v579
      %v662 = vpack.c.bf16 %v582, %v581
      %v663 = vpack.c.bf16 %v584, %v583
      %v664 = vpack.c.bf16 %v586, %v585
      %v665 = vpack.c.bf16 %v588, %v587
      %v666 = vpack.c.bf16 %v590, %v589
      %v667 = vpack.c.bf16 %v592, %v591
      %v668 = vpack.c.bf16 %v594, %v593
      %v669 = vpack.c.bf16 %v596, %v595
      %v670 = vpack.c.bf16 %v598, %v597
      %v671 = vpack.c.bf16 %v600, %v599
      %v672 = vpack.c.bf16 %v602, %v601
      %v673 = vpack.c.bf16 %v604, %v603
      %v674 = vpack.c.bf16 %v606, %v605
      %v675 = vpack.c.bf16 %v608, %v607
      %v676 = vpack.c.bf16 %v610, %v609
      %v677 = vpack.c.bf16 %v612, %v611
      %v678 = vpack.c.bf16 %v614, %v613
      %679 = vst.msk [vmem:[#allocation3] sm:$0xff] %vm273, %v615
      %680 = vst.msk [vmem:[#allocation3 + $0x8] sm:$0xff] %vm273, %v616
      %681 = vst.msk [vmem:[#allocation3 + $0x10] sm:$0xff] %vm273, %v617
      %682 = vst.msk [vmem:[#allocation3 + $0x18] sm:$0xff] %vm273, %v618
      %683 = vst.msk [vmem:[#allocation3 + $0x20] sm:$0xff] %vm273, %v619
      %684 = vst.msk [vmem:[#allocation3 + $0x28] sm:$0xff] %vm273, %v620
      %685 = vst.msk [vmem:[#allocation3 + $0x30] sm:$0xff] %vm273, %v621
      %686 = vst.msk [vmem:[#allocation3 + $0x38] sm:$0xff] %vm273, %v622
      %687 = vst.msk [vmem:[#allocation3 + $0x40] sm:$0xff] %vm273, %v623
      %688 = vst.msk [vmem:[#allocation3 + $0x48] sm:$0xff] %vm273, %v624
      %689 = vst.msk [vmem:[#allocation3 + $0x50] sm:$0xff] %vm273, %v625
      %690 = vst.msk [vmem:[#allocation3 + $0x58] sm:$0xff] %vm273, %v626
      %691 = vst.msk [vmem:[#allocation3 + $0x60] sm:$0xff] %vm273, %v627
      %692 = vst.msk [vmem:[#allocation3 + $0x68] sm:$0xff] %vm273, %v628
      %693 = vst.msk [vmem:[#allocation3 + $0x70] sm:$0xff] %vm273, %v629
      %694 = vst.msk [vmem:[#allocation3 + $0x78] sm:$0xff] %vm273, %v630
      %695 = vst.msk [vmem:[#allocation3 + $0x80] sm:$0xff] %vm273, %v631
      %696 = vst.msk [vmem:[#allocation3 + $0x88] sm:$0xff] %vm273, %v632
      %697 = vst.msk [vmem:[#allocation3 + $0x90] sm:$0xff] %vm273, %v633
      %698 = vst.msk [vmem:[#allocation3 + $0x98] sm:$0xff] %vm273, %v634
      %699 = vst.msk [vmem:[#allocation3 + $0xa0] sm:$0xff] %vm273, %v635
      %700 = vst.msk [vmem:[#allocation3 + $0xa8] sm:$0xff] %vm273, %v636
      %701 = vst.msk [vmem:[#allocation3 + $0xb0] sm:$0xff] %vm273, %v637
      %702 = vst.msk [vmem:[#allocation3 + $0xb8] sm:$0xff] %vm273, %v638
      %703 = vst.msk [vmem:[#allocation3 + $0xc0] sm:$0xff] %vm273, %v639
      %704 = vst.msk [vmem:[#allocation3 + $0xc8] sm:$0xff] %vm273, %v640
      %705 = vst.msk [vmem:[#allocation3 + $0xd0] sm:$0xff] %vm273, %v641
      %706 = vst.msk [vmem:[#allocation3 + $0xd8] sm:$0xff] %vm273, %v642
      %707 = vst.msk [vmem:[#allocation3 + $0xe0] sm:$0xff] %vm273, %v643
      %708 = vst.msk [vmem:[#allocation3 + $0xe8] sm:$0xff] %vm273, %v644
      %709 = vst.msk [vmem:[#allocation3 + $0xf0] sm:$0xff] %vm273, %v645
      %710 = vst.msk [vmem:[#allocation3 + $0xf8] sm:$0xff] %vm273, %v646
      %711 = vst.msk [vmem:[#allocation3 + $0x100] sm:$0xff] %vm273, %v647
      %712 = vst.msk [vmem:[#allocation3 + $0x108] sm:$0xff] %vm273, %v648
      %713 = vst.msk [vmem:[#allocation3 + $0x110] sm:$0xff] %vm273, %v649
      %714 = vst.msk [vmem:[#allocation3 + $0x118] sm:$0xff] %vm273, %v650
      %715 = vst.msk [vmem:[#allocation3 + $0x120] sm:$0xff] %vm273, %v651
      %716 = vst.msk [vmem:[#allocation3 + $0x128] sm:$0xff] %vm273, %v652
      %717 = vst.msk [vmem:[#allocation3 + $0x130] sm:$0xff] %vm273, %v653
      %718 = vst.msk [vmem:[#allocation3 + $0x138] sm:$0xff] %vm273, %v654
      %719 = vst.msk [vmem:[#allocation3 + $0x140] sm:$0xff] %vm273, %v655
      %720 = vst.msk [vmem:[#allocation3 + $0x148] sm:$0xff] %vm273, %v656
      %721 = vst.msk [vmem:[#allocation3 + $0x150] sm:$0xff] %vm273, %v657
      %722 = vst.msk [vmem:[#allocation3 + $0x158] sm:$0xff] %vm273, %v658
      %723 = vst.msk [vmem:[#allocation3 + $0x160] sm:$0xff] %vm273, %v659
      %724 = vst.msk [vmem:[#allocation3 + $0x168] sm:$0xff] %vm273, %v660
      %725 = vst.msk [vmem:[#allocation3 + $0x170] sm:$0xff] %vm273, %v661
      %726 = vst.msk [vmem:[#allocation3 + $0x178] sm:$0xff] %vm273, %v662
      %727 = vst.msk [vmem:[#allocation3 + $0x180] sm:$0xff] %vm273, %v663
      %728 = vst.msk [vmem:[#allocation3 + $0x188] sm:$0xff] %vm273, %v664
      %729 = vst.msk [vmem:[#allocation3 + $0x190] sm:$0xff] %vm273, %v665
      %730 = vst.msk [vmem:[#allocation3 + $0x198] sm:$0xff] %vm273, %v666
      %731 = vst.msk [vmem:[#allocation3 + $0x1a0] sm:$0xff] %vm273, %v667
      %732 = vst.msk [vmem:[#allocation3 + $0x1a8] sm:$0xff] %vm273, %v668
      %733 = vst.msk [vmem:[#allocation3 + $0x1b0] sm:$0xff] %vm273, %v669
      %734 = vst.msk [vmem:[#allocation3 + $0x1b8] sm:$0xff] %vm273, %v670
      %735 = vst.msk [vmem:[#allocation3 + $0x1c0] sm:$0xff] %vm273, %v671
      %736 = vst.msk [vmem:[#allocation3 + $0x1c8] sm:$0xff] %vm273, %v672
      %737 = vst.msk [vmem:[#allocation3 + $0x1d0] sm:$0xff] %vm273, %v673
      %738 = vst.msk [vmem:[#allocation3 + $0x1d8] sm:$0xff] %vm273, %v674
      %739 = vst.msk [vmem:[#allocation3 + $0x1e0] sm:$0xff] %vm273, %v675
      %740 = vst.msk [vmem:[#allocation3 + $0x1e8] sm:$0xff] %vm273, %v676
      %741 = vst.msk [vmem:[#allocation3 + $0x1f0] sm:$0xff] %vm273, %v677
      %742 = vst.msk [vmem:[#allocation3 + $0x1f8] sm:$0xff] %vm273, %v678
      %v743 = vld [vmem:[#allocation2 + $0x1] sm:$0xff]
      %v744 = vld [vmem:[#allocation2 + $0x9] sm:$0xff]
      %v745 = vld [vmem:[#allocation2 + $0x11] sm:$0xff]
      %v746 = vld [vmem:[#allocation2 + $0x19] sm:$0xff]
      %v747 = vld [vmem:[#allocation2 + $0x29] sm:$0xff]
      %v748 = vld [vmem:[#allocation2 + $0x31] sm:$0xff]
      %v749 = vld [vmem:[#allocation2 + $0x39] sm:$0xff]
      %v750 = vld [vmem:[#allocation2 + $0x41] sm:$0xff]
      %v751 = vld [vmem:[#allocation2 + $0x51] sm:$0xff]
      %v752 = vld [vmem:[#allocation2 + $0x59] sm:$0xff]
      %v753 = vld [vmem:[#allocation2 + $0x61] sm:$0xff]
      %v754 = vld [vmem:[#allocation2 + $0x69] sm:$0xff]
      %v755 = vld [vmem:[#allocation2 + $0x79] sm:$0xff]
      %v756 = vld [vmem:[#allocation2 + $0x81] sm:$0xff]
      %v757 = vld [vmem:[#allocation2 + $0x89] sm:$0xff]
      %v758 = vld [vmem:[#allocation2 + $0x91] sm:$0xff]
      %v759 = vld [vmem:[#allocation2 + $0xa1] sm:$0xff]
      %v760 = vld [vmem:[#allocation2 + $0xa9] sm:$0xff]
      %v761 = vld [vmem:[#allocation2 + $0xb1] sm:$0xff]
      %v762 = vld [vmem:[#allocation2 + $0xb9] sm:$0xff]
      %v763 = vld [vmem:[#allocation2 + $0xc9] sm:$0xff]
      %v764 = vld [vmem:[#allocation2 + $0xd1] sm:$0xff]
      %v765 = vld [vmem:[#allocation2 + $0xd9] sm:$0xff]
      %v766 = vld [vmem:[#allocation2 + $0xe1] sm:$0xff]
      %v767 = vld [vmem:[#allocation2 + $0xf1] sm:$0xff]
      %v768 = vld [vmem:[#allocation2 + $0xf9] sm:$0xff]
      %v769 = vld [vmem:[#allocation2 + $0x101] sm:$0xff]
      %v770 = vld [vmem:[#allocation2 + $0x109] sm:$0xff]
      %v771 = vld [vmem:[#allocation2 + $0x119] sm:$0xff]
      %v772 = vld [vmem:[#allocation2 + $0x121] sm:$0xff]
      %v773 = vld [vmem:[#allocation2 + $0x129] sm:$0xff]
      %v774 = vld [vmem:[#allocation2 + $0x131] sm:$0xff]
      %v775 = vld [vmem:[#allocation2 + $0x141] sm:$0xff]
      %v776 = vld [vmem:[#allocation2 + $0x149] sm:$0xff]
      %v777 = vld [vmem:[#allocation2 + $0x151] sm:$0xff]
      %v778 = vld [vmem:[#allocation2 + $0x159] sm:$0xff]
      %v779 = vld [vmem:[#allocation2 + $0x169] sm:$0xff]
      %v780 = vld [vmem:[#allocation2 + $0x171] sm:$0xff]
      %v781 = vld [vmem:[#allocation2 + $0x179] sm:$0xff]
      %v782 = vld [vmem:[#allocation2 + $0x181] sm:$0xff]
      %v783 = vld [vmem:[#allocation2 + $0x191] sm:$0xff]
      %v784 = vld [vmem:[#allocation2 + $0x199] sm:$0xff]
      %v785 = vld [vmem:[#allocation2 + $0x1a1] sm:$0xff]
      %v786 = vld [vmem:[#allocation2 + $0x1a9] sm:$0xff]
      %v787 = vld [vmem:[#allocation2 + $0x1b9] sm:$0xff]
      %v788 = vld [vmem:[#allocation2 + $0x1c1] sm:$0xff]
      %v789 = vld [vmem:[#allocation2 + $0x1c9] sm:$0xff]
      %v790 = vld [vmem:[#allocation2 + $0x1d1] sm:$0xff]
      %v791 = vld [vmem:[#allocation2 + $0x1e1] sm:$0xff]
      %v792 = vld [vmem:[#allocation2 + $0x1e9] sm:$0xff]
      %v793 = vld [vmem:[#allocation2 + $0x1f1] sm:$0xff]
      %v794 = vld [vmem:[#allocation2 + $0x1f9] sm:$0xff]
      %v795 = vld [vmem:[#allocation2 + $0x209] sm:$0xff]
      %v796 = vld [vmem:[#allocation2 + $0x211] sm:$0xff]
      %v797 = vld [vmem:[#allocation2 + $0x219] sm:$0xff]
      %v798 = vld [vmem:[#allocation2 + $0x221] sm:$0xff]
      %v799 = vld [vmem:[#allocation2 + $0x231] sm:$0xff]
      %v800 = vld [vmem:[#allocation2 + $0x239] sm:$0xff]
      %v801 = vld [vmem:[#allocation2 + $0x241] sm:$0xff]
      %v802 = vld [vmem:[#allocation2 + $0x249] sm:$0xff]
      %v803 = vld [vmem:[#allocation2 + $0x259] sm:$0xff]
      %v804 = vld [vmem:[#allocation2 + $0x261] sm:$0xff]
      %v805 = vld [vmem:[#allocation2 + $0x269] sm:$0xff]
      %v806 = vld [vmem:[#allocation2 + $0x271] sm:$0xff]
      %v807 = vld [vmem:[#allocation2 + $0x281] sm:$0xff]
      %v808 = vld [vmem:[#allocation2 + $0x289] sm:$0xff]
      %v809 = vld [vmem:[#allocation2 + $0x291] sm:$0xff]
      %v810 = vld [vmem:[#allocation2 + $0x299] sm:$0xff]
      %v811 = vld [vmem:[#allocation2 + $0x2a9] sm:$0xff]
      %v812 = vld [vmem:[#allocation2 + $0x2b1] sm:$0xff]
      %v813 = vld [vmem:[#allocation2 + $0x2b9] sm:$0xff]
      %v814 = vld [vmem:[#allocation2 + $0x2c1] sm:$0xff]
      %v815 = vld [vmem:[#allocation2 + $0x2d1] sm:$0xff]
      %v816 = vld [vmem:[#allocation2 + $0x2d9] sm:$0xff]
      %v817 = vld [vmem:[#allocation2 + $0x2e1] sm:$0xff]
      %v818 = vld [vmem:[#allocation2 + $0x2e9] sm:$0xff]
      %v819 = vld [vmem:[#allocation2 + $0x2f9] sm:$0xff]
      %v820 = vld [vmem:[#allocation2 + $0x301] sm:$0xff]
      %v821 = vld [vmem:[#allocation2 + $0x309] sm:$0xff]
      %v822 = vld [vmem:[#allocation2 + $0x311] sm:$0xff]
      %v823 = vld [vmem:[#allocation2 + $0x321] sm:$0xff]
      %v824 = vld [vmem:[#allocation2 + $0x329] sm:$0xff]
      %v825 = vld [vmem:[#allocation2 + $0x331] sm:$0xff]
      %v826 = vld [vmem:[#allocation2 + $0x339] sm:$0xff]
      %v827 = vld [vmem:[#allocation2 + $0x349] sm:$0xff]
      %v828 = vld [vmem:[#allocation2 + $0x351] sm:$0xff]
      %v829 = vld [vmem:[#allocation2 + $0x359] sm:$0xff]
      %v830 = vld [vmem:[#allocation2 + $0x361] sm:$0xff]
      %v831 = vld [vmem:[#allocation2 + $0x371] sm:$0xff]
      %v832 = vld [vmem:[#allocation2 + $0x379] sm:$0xff]
      %v833 = vld [vmem:[#allocation2 + $0x381] sm:$0xff]
      %v834 = vld [vmem:[#allocation2 + $0x389] sm:$0xff]
      %v835 = vld [vmem:[#allocation2 + $0x399] sm:$0xff]
      %v836 = vld [vmem:[#allocation2 + $0x3a1] sm:$0xff]
      %v837 = vld [vmem:[#allocation2 + $0x3a9] sm:$0xff]
      %v838 = vld [vmem:[#allocation2 + $0x3b1] sm:$0xff]
      %v839 = vld [vmem:[#allocation2 + $0x3c1] sm:$0xff]
      %v840 = vld [vmem:[#allocation2 + $0x3c9] sm:$0xff]
      %v841 = vld [vmem:[#allocation2 + $0x3d1] sm:$0xff]
      %v842 = vld [vmem:[#allocation2 + $0x3d9] sm:$0xff]
      %v843 = vld [vmem:[#allocation2 + $0x3e9] sm:$0xff]
      %v844 = vld [vmem:[#allocation2 + $0x3f1] sm:$0xff]
      %v845 = vld [vmem:[#allocation2 + $0x3f9] sm:$0xff]
      %v846 = vld [vmem:[#allocation2 + $0x401] sm:$0xff]
      %v847 = vld [vmem:[#allocation2 + $0x411] sm:$0xff]
      %v848 = vld [vmem:[#allocation2 + $0x419] sm:$0xff]
      %v849 = vld [vmem:[#allocation2 + $0x421] sm:$0xff]
      %v850 = vld [vmem:[#allocation2 + $0x429] sm:$0xff]
      %v851 = vld [vmem:[#allocation2 + $0x439] sm:$0xff]
      %v852 = vld [vmem:[#allocation2 + $0x441] sm:$0xff]
      %v853 = vld [vmem:[#allocation2 + $0x449] sm:$0xff]
      %v854 = vld [vmem:[#allocation2 + $0x451] sm:$0xff]
      %v855 = vld [vmem:[#allocation2 + $0x461] sm:$0xff]
      %v856 = vld [vmem:[#allocation2 + $0x469] sm:$0xff]
      %v857 = vld [vmem:[#allocation2 + $0x471] sm:$0xff]
      %v858 = vld [vmem:[#allocation2 + $0x479] sm:$0xff]
      %v859 = vld [vmem:[#allocation2 + $0x489] sm:$0xff]
      %v860 = vld [vmem:[#allocation2 + $0x491] sm:$0xff]
      %v861 = vld [vmem:[#allocation2 + $0x499] sm:$0xff]
      %v862 = vld [vmem:[#allocation2 + $0x4a1] sm:$0xff]
      %v863 = vld [vmem:[#allocation2 + $0x4b1] sm:$0xff]
      %v864 = vld [vmem:[#allocation2 + $0x4b9] sm:$0xff]
      %v865 = vld [vmem:[#allocation2 + $0x4c1] sm:$0xff]
      %v866 = vld [vmem:[#allocation2 + $0x4c9] sm:$0xff]
      %v867 = vld [vmem:[#allocation2 + $0x4d9] sm:$0xff]
      %v868 = vld [vmem:[#allocation2 + $0x4e1] sm:$0xff]
      %v869 = vld [vmem:[#allocation2 + $0x4e9] sm:$0xff]
      %v870 = vld [vmem:[#allocation2 + $0x4f1] sm:$0xff]
      %v871 = vpack.c.bf16 %v744, %v743
      %v872 = vpack.c.bf16 %v746, %v745
      %v873 = vpack.c.bf16 %v748, %v747
      %v874 = vpack.c.bf16 %v750, %v749
      %v875 = vpack.c.bf16 %v752, %v751
      %v876 = vpack.c.bf16 %v754, %v753
      %v877 = vpack.c.bf16 %v756, %v755
      %v878 = vpack.c.bf16 %v758, %v757
      %v879 = vpack.c.bf16 %v760, %v759
      %v880 = vpack.c.bf16 %v762, %v761
      %v881 = vpack.c.bf16 %v764, %v763
      %v882 = vpack.c.bf16 %v766, %v765
      %v883 = vpack.c.bf16 %v768, %v767
      %v884 = vpack.c.bf16 %v770, %v769
      %v885 = vpack.c.bf16 %v772, %v771
      %v886 = vpack.c.bf16 %v774, %v773
      %v887 = vpack.c.bf16 %v776, %v775
      %v888 = vpack.c.bf16 %v778, %v777
      %v889 = vpack.c.bf16 %v780, %v779
      %v890 = vpack.c.bf16 %v782, %v781
      %v891 = vpack.c.bf16 %v784, %v783
      %v892 = vpack.c.bf16 %v786, %v785
      %v893 = vpack.c.bf16 %v788, %v787
      %v894 = vpack.c.bf16 %v790, %v789
      %v895 = vpack.c.bf16 %v792, %v791
      %v896 = vpack.c.bf16 %v794, %v793
      %v897 = vpack.c.bf16 %v796, %v795
      %v898 = vpack.c.bf16 %v798, %v797
      %v899 = vpack.c.bf16 %v800, %v799
      %v900 = vpack.c.bf16 %v802, %v801
      %v901 = vpack.c.bf16 %v804, %v803
      %v902 = vpack.c.bf16 %v806, %v805
      %v903 = vpack.c.bf16 %v808, %v807
      %v904 = vpack.c.bf16 %v810, %v809
      %v905 = vpack.c.bf16 %v812, %v811
      %v906 = vpack.c.bf16 %v814, %v813
      %v907 = vpack.c.bf16 %v816, %v815
      %v908 = vpack.c.bf16 %v818, %v817
      %v909 = vpack.c.bf16 %v820, %v819
      %v910 = vpack.c.bf16 %v822, %v821
      %v911 = vpack.c.bf16 %v824, %v823
      %v912 = vpack.c.bf16 %v826, %v825
      %v913 = vpack.c.bf16 %v828, %v827
      %v914 = vpack.c.bf16 %v830, %v829
      %v915 = vpack.c.bf16 %v832, %v831
      %v916 = vpack.c.bf16 %v834, %v833
      %v917 = vpack.c.bf16 %v836, %v835
      %v918 = vpack.c.bf16 %v838, %v837
      %v919 = vpack.c.bf16 %v840, %v839
      %v920 = vpack.c.bf16 %v842, %v841
      %v921 = vpack.c.bf16 %v844, %v843
      %v922 = vpack.c.bf16 %v846, %v845
      %v923 = vpack.c.bf16 %v848, %v847
      %v924 = vpack.c.bf16 %v850, %v849
      %v925 = vpack.c.bf16 %v852, %v851
      %v926 = vpack.c.bf16 %v854, %v853
      %v927 = vpack.c.bf16 %v856, %v855
      %v928 = vpack.c.bf16 %v858, %v857
      %v929 = vpack.c.bf16 %v860, %v859
      %v930 = vpack.c.bf16 %v862, %v861
      %v931 = vpack.c.bf16 %v864, %v863
      %v932 = vpack.c.bf16 %v866, %v865
      %v933 = vpack.c.bf16 %v868, %v867
      %v934 = vpack.c.bf16 %v870, %v869
      %999 = vrot.lane.b32.xlu0 %v871, 6
      %v1000 = vpop.permute.xlu0 %999
      %1001 = vrot.lane.b32.xlu0 %v872, 6
      %v1002 = vpop.permute.xlu0 %1001
      %1003 = vrot.lane.b32.xlu0 %v873, 6
      %v1004 = vpop.permute.xlu0 %1003
      %1005 = vrot.lane.b32.xlu0 %v874, 6
      %v1006 = vpop.permute.xlu0 %1005
      %1007 = vrot.lane.b32.xlu0 %v875, 6
      %v1008 = vpop.permute.xlu0 %1007
      %1009 = vrot.lane.b32.xlu0 %v876, 6
      %v1010 = vpop.permute.xlu0 %1009
      %1011 = vrot.lane.b32.xlu0 %v877, 6
      %v1012 = vpop.permute.xlu0 %1011
      %1013 = vrot.lane.b32.xlu0 %v878, 6
      %v1014 = vpop.permute.xlu0 %1013
      %1015 = vrot.lane.b32.xlu0 %v879, 6
      %v1016 = vpop.permute.xlu0 %1015
      %1017 = vrot.lane.b32.xlu0 %v880, 6
      %v1018 = vpop.permute.xlu0 %1017
      %1019 = vrot.lane.b32.xlu0 %v881, 6
      %v1020 = vpop.permute.xlu0 %1019
      %1021 = vrot.lane.b32.xlu0 %v882, 6
      %v1022 = vpop.permute.xlu0 %1021
      %1023 = vrot.lane.b32.xlu0 %v883, 6
      %v1024 = vpop.permute.xlu0 %1023
      %1025 = vrot.lane.b32.xlu0 %v884, 6
      %v1026 = vpop.permute.xlu0 %1025
      %1027 = vrot.lane.b32.xlu0 %v885, 6
      %v1028 = vpop.permute.xlu0 %1027
      %1029 = vrot.lane.b32.xlu0 %v886, 6
      %v1030 = vpop.permute.xlu0 %1029
      %1031 = vrot.lane.b32.xlu0 %v887, 6
      %v1032 = vpop.permute.xlu0 %1031
      %1033 = vrot.lane.b32.xlu0 %v888, 6
      %v1034 = vpop.permute.xlu0 %1033
      %1035 = vrot.lane.b32.xlu0 %v889, 6
      %v1036 = vpop.permute.xlu0 %1035
      %1037 = vrot.lane.b32.xlu0 %v890, 6
      %v1038 = vpop.permute.xlu0 %1037
      %1039 = vrot.lane.b32.xlu0 %v891, 6
      %v1040 = vpop.permute.xlu0 %1039
      %1041 = vrot.lane.b32.xlu0 %v892, 6
      %v1042 = vpop.permute.xlu0 %1041
      %1043 = vrot.lane.b32.xlu0 %v893, 6
      %v1044 = vpop.permute.xlu0 %1043
      %1045 = vrot.lane.b32.xlu0 %v894, 6
      %v1046 = vpop.permute.xlu0 %1045
      %1047 = vrot.lane.b32.xlu0 %v895, 6
      %v1048 = vpop.permute.xlu0 %1047
      %1049 = vrot.lane.b32.xlu0 %v896, 6
      %v1050 = vpop.permute.xlu0 %1049
      %1051 = vrot.lane.b32.xlu0 %v897, 6
      %v1052 = vpop.permute.xlu0 %1051
      %1053 = vrot.lane.b32.xlu0 %v898, 6
      %v1054 = vpop.permute.xlu0 %1053
      %1055 = vrot.lane.b32.xlu0 %v899, 6
      %v1056 = vpop.permute.xlu0 %1055
      %1057 = vrot.lane.b32.xlu0 %v900, 6
      %v1058 = vpop.permute.xlu0 %1057
      %1059 = vrot.lane.b32.xlu0 %v901, 6
      %v1060 = vpop.permute.xlu0 %1059
      %1061 = vrot.lane.b32.xlu0 %v902, 6
      %v1062 = vpop.permute.xlu0 %1061
      %1063 = vrot.lane.b32.xlu0 %v903, 6
      %v1064 = vpop.permute.xlu0 %1063
      %1065 = vrot.lane.b32.xlu0 %v904, 6
      %v1066 = vpop.permute.xlu0 %1065
      %1067 = vrot.lane.b32.xlu0 %v905, 6
      %v1068 = vpop.permute.xlu0 %1067
      %1069 = vrot.lane.b32.xlu0 %v906, 6
      %v1070 = vpop.permute.xlu0 %1069
      %1071 = vrot.lane.b32.xlu0 %v907, 6
      %v1072 = vpop.permute.xlu0 %1071
      %1073 = vrot.lane.b32.xlu0 %v908, 6
      %v1074 = vpop.permute.xlu0 %1073
      %1075 = vrot.lane.b32.xlu0 %v909, 6
      %v1076 = vpop.permute.xlu0 %1075
      %1077 = vrot.lane.b32.xlu0 %v910, 6
      %v1078 = vpop.permute.xlu0 %1077
      %1079 = vrot.lane.b32.xlu0 %v911, 6
      %v1080 = vpop.permute.xlu0 %1079
      %1081 = vrot.lane.b32.xlu0 %v912, 6
      %v1082 = vpop.permute.xlu0 %1081
      %1083 = vrot.lane.b32.xlu0 %v913, 6
      %v1084 = vpop.permute.xlu0 %1083
      %1085 = vrot.lane.b32.xlu0 %v914, 6
      %v1086 = vpop.permute.xlu0 %1085
      %1087 = vrot.lane.b32.xlu0 %v915, 6
      %v1088 = vpop.permute.xlu0 %1087
      %1089 = vrot.lane.b32.xlu0 %v916, 6
      %v1090 = vpop.permute.xlu0 %1089
      %1091 = vrot.lane.b32.xlu0 %v917, 6
      %v1092 = vpop.permute.xlu0 %1091
      %1093 = vrot.lane.b32.xlu0 %v918, 6
      %v1094 = vpop.permute.xlu0 %1093
      %1095 = vrot.lane.b32.xlu0 %v919, 6
      %v1096 = vpop.permute.xlu0 %1095
      %1097 = vrot.lane.b32.xlu0 %v920, 6
      %v1098 = vpop.permute.xlu0 %1097
      %1099 = vrot.lane.b32.xlu0 %v921, 6
      %v1100 = vpop.permute.xlu0 %1099
      %1101 = vrot.lane.b32.xlu0 %v922, 6
      %v1102 = vpop.permute.xlu0 %1101
      %1103 = vrot.lane.b32.xlu0 %v923, 6
      %v1104 = vpop.permute.xlu0 %1103
      %1105 = vrot.lane.b32.xlu0 %v924, 6
      %v1106 = vpop.permute.xlu0 %1105
      %1107 = vrot.lane.b32.xlu0 %v925, 6
      %v1108 = vpop.permute.xlu0 %1107
      %1109 = vrot.lane.b32.xlu0 %v926, 6
      %v1110 = vpop.permute.xlu0 %1109
      %1111 = vrot.lane.b32.xlu0 %v927, 6
      %v1112 = vpop.permute.xlu0 %1111
      %1113 = vrot.lane.b32.xlu0 %v928, 6
      %v1114 = vpop.permute.xlu0 %1113
      %1115 = vrot.lane.b32.xlu0 %v929, 6
      %v1116 = vpop.permute.xlu0 %1115
      %1117 = vrot.lane.b32.xlu0 %v930, 6
      %v1118 = vpop.permute.xlu0 %1117
      %1119 = vrot.lane.b32.xlu0 %v931, 6
      %v1120 = vpop.permute.xlu0 %1119
      %1121 = vrot.lane.b32.xlu0 %v932, 6
      %v1122 = vpop.permute.xlu0 %1121
      %1123 = vrot.lane.b32.xlu0 %v933, 6
      %v1124 = vpop.permute.xlu0 %1123
      %1125 = vrot.lane.b32.xlu0 %v934, 6
      %v1126 = vpop.permute.xlu0 %1125
      %vm1191 = vcmask 97328
      %1192 = vst.msk [vmem:[#allocation3] sm:$0xff] %vm1191, %v1000
      %1193 = vst.msk [vmem:[#allocation3 + $0x8] sm:$0xff] %vm1191, %v1002
      %1194 = vst.msk [vmem:[#allocation3 + $0x10] sm:$0xff] %vm1191, %v1004
      %1195 = vst.msk [vmem:[#allocation3 + $0x18] sm:$0xff] %vm1191, %v1006
      %1196 = vst.msk [vmem:[#allocation3 + $0x20] sm:$0xff] %vm1191, %v1008
      %1197 = vst.msk [vmem:[#allocation3 + $0x28] sm:$0xff] %vm1191, %v1010
      %1198 = vst.msk [vmem:[#allocation3 + $0x30] sm:$0xff] %vm1191, %v1012
      %1199 = vst.msk [vmem:[#allocation3 + $0x38] sm:$0xff] %vm1191, %v1014
      %1200 = vst.msk [vmem:[#allocation3 + $0x40] sm:$0xff] %vm1191, %v1016
      %1201 = vst.msk [vmem:[#allocation3 + $0x48] sm:$0xff] %vm1191, %v1018
      %1202 = vst.msk [vmem:[#allocation3 + $0x50] sm:$0xff] %vm1191, %v1020
      %1203 = vst.msk [vmem:[#allocation3 + $0x58] sm:$0xff] %vm1191, %v1022
      %1204 = vst.msk [vmem:[#allocation3 + $0x60] sm:$0xff] %vm1191, %v1024
      %1205 = vst.msk [vmem:[#allocation3 + $0x68] sm:$0xff] %vm1191, %v1026
      %1206 = vst.msk [vmem:[#allocation3 + $0x70] sm:$0xff] %vm1191, %v1028
      %1207 = vst.msk [vmem:[#allocation3 + $0x78] sm:$0xff] %vm1191, %v1030
      %1208 = vst.msk [vmem:[#allocation3 + $0x80] sm:$0xff] %vm1191, %v1032
      %1209 = vst.msk [vmem:[#allocation3 + $0x88] sm:$0xff] %vm1191, %v1034
      %1210 = vst.msk [vmem:[#allocation3 + $0x90] sm:$0xff] %vm1191, %v1036
      %1211 = vst.msk [vmem:[#allocation3 + $0x98] sm:$0xff] %vm1191, %v1038
      %1212 = vst.msk [vmem:[#allocation3 + $0xa0] sm:$0xff] %vm1191, %v1040
      %1213 = vst.msk [vmem:[#allocation3 + $0xa8] sm:$0xff] %vm1191, %v1042
      %1214 = vst.msk [vmem:[#allocation3 + $0xb0] sm:$0xff] %vm1191, %v1044
      %1215 = vst.msk [vmem:[#allocation3 + $0xb8] sm:$0xff] %vm1191, %v1046
      %1216 = vst.msk [vmem:[#allocation3 + $0xc0] sm:$0xff] %vm1191, %v1048
      %1217 = vst.msk [vmem:[#allocation3 + $0xc8] sm:$0xff] %vm1191, %v1050
      %1218 = vst.msk [vmem:[#allocation3 + $0xd0] sm:$0xff] %vm1191, %v1052
      %1219 = vst.msk [vmem:[#allocation3 + $0xd8] sm:$0xff] %vm1191, %v1054
      %1220 = vst.msk [vmem:[#allocation3 + $0xe0] sm:$0xff] %vm1191, %v1056
      %1221 = vst.msk [vmem:[#allocation3 + $0xe8] sm:$0xff] %vm1191, %v1058
      %1222 = vst.msk [vmem:[#allocation3 + $0xf0] sm:$0xff] %vm1191, %v1060
      %1223 = vst.msk [vmem:[#allocation3 + $0xf8] sm:$0xff] %vm1191, %v1062
      %1224 = vst.msk [vmem:[#allocation3 + $0x100] sm:$0xff] %vm1191, %v1064
      %1225 = vst.msk [vmem:[#allocation3 + $0x108] sm:$0xff] %vm1191, %v1066
      %1226 = vst.msk [vmem:[#allocation3 + $0x110] sm:$0xff] %vm1191, %v1068
      %1227 = vst.msk [vmem:[#allocation3 + $0x118] sm:$0xff] %vm1191, %v1070
      %1228 = vst.msk [vmem:[#allocation3 + $0x120] sm:$0xff] %vm1191, %v1072
      %1229 = vst.msk [vmem:[#allocation3 + $0x128] sm:$0xff] %vm1191, %v1074
      %1230 = vst.msk [vmem:[#allocation3 + $0x130] sm:$0xff] %vm1191, %v1076
      %1231 = vst.msk [vmem:[#allocation3 + $0x138] sm:$0xff] %vm1191, %v1078
      %1232 = vst.msk [vmem:[#allocation3 + $0x140] sm:$0xff] %vm1191, %v1080
      %1233 = vst.msk [vmem:[#allocation3 + $0x148] sm:$0xff] %vm1191, %v1082
      %1234 = vst.msk [vmem:[#allocation3 + $0x150] sm:$0xff] %vm1191, %v1084
      %1235 = vst.msk [vmem:[#allocation3 + $0x158] sm:$0xff] %vm1191, %v1086
      %1236 = vst.msk [vmem:[#allocation3 + $0x160] sm:$0xff] %vm1191, %v1088
      %1237 = vst.msk [vmem:[#allocation3 + $0x168] sm:$0xff] %vm1191, %v1090
      %1238 = vst.msk [vmem:[#allocation3 + $0x170] sm:$0xff] %vm1191, %v1092
      %1239 = vst.msk [vmem:[#allocation3 + $0x178] sm:$0xff] %vm1191, %v1094
      %1240 = vst.msk [vmem:[#allocation3 + $0x180] sm:$0xff] %vm1191, %v1096
      %1241 = vst.msk [vmem:[#allocation3 + $0x188] sm:$0xff] %vm1191, %v1098
      %1242 = vst.msk [vmem:[#allocation3 + $0x190] sm:$0xff] %vm1191, %v1100
      %1243 = vst.msk [vmem:[#allocation3 + $0x198] sm:$0xff] %vm1191, %v1102
      %1244 = vst.msk [vmem:[#allocation3 + $0x1a0] sm:$0xff] %vm1191, %v1104
      %1245 = vst.msk [vmem:[#allocation3 + $0x1a8] sm:$0xff] %vm1191, %v1106
      %1246 = vst.msk [vmem:[#allocation3 + $0x1b0] sm:$0xff] %vm1191, %v1108
      %1247 = vst.msk [vmem:[#allocation3 + $0x1b8] sm:$0xff] %vm1191, %v1110
      %1248 = vst.msk [vmem:[#allocation3 + $0x1c0] sm:$0xff] %vm1191, %v1112
      %1249 = vst.msk [vmem:[#allocation3 + $0x1c8] sm:$0xff] %vm1191, %v1114
      %1250 = vst.msk [vmem:[#allocation3 + $0x1d0] sm:$0xff] %vm1191, %v1116
      %1251 = vst.msk [vmem:[#allocation3 + $0x1d8] sm:$0xff] %vm1191, %v1118
      %1252 = vst.msk [vmem:[#allocation3 + $0x1e0] sm:$0xff] %vm1191, %v1120
      %1253 = vst.msk [vmem:[#allocation3 + $0x1e8] sm:$0xff] %vm1191, %v1122
      %1254 = vst.msk [vmem:[#allocation3 + $0x1f0] sm:$0xff] %vm1191, %v1124
      %1255 = vst.msk [vmem:[#allocation3 + $0x1f8] sm:$0xff] %vm1191, %v1126
      %v1256 = vld [vmem:[#allocation2 + $0x2] sm:$0xff]
      %v1257 = vld [vmem:[#allocation2 + $0xa] sm:$0xff]
      %v1258 = vld [vmem:[#allocation2 + $0x12] sm:$0xff]
      %v1259 = vld [vmem:[#allocation2 + $0x1a] sm:$0xff]
      %v1260 = vld [vmem:[#allocation2 + $0x2a] sm:$0xff]
      %v1261 = vld [vmem:[#allocation2 + $0x32] sm:$0xff]
      %v1262 = vld [vmem:[#allocation2 + $0x3a] sm:$0xff]
      %v1263 = vld [vmem:[#allocation2 + $0x42] sm:$0xff]
      %v1264 = vld [vmem:[#allocation2 + $0x52] sm:$0xff]
      %v1265 = vld [vmem:[#allocation2 + $0x5a] sm:$0xff]
      %v1266 = vld [vmem:[#allocation2 + $0x62] sm:$0xff]
      %v1267 = vld [vmem:[#allocation2 + $0x6a] sm:$0xff]
      %v1268 = vld [vmem:[#allocation2 + $0x7a] sm:$0xff]
      %v1269 = vld [vmem:[#allocation2 + $0x82] sm:$0xff]
      %v1270 = vld [vmem:[#allocation2 + $0x8a] sm:$0xff]
      %v1271 = vld [vmem:[#allocation2 + $0x92] sm:$0xff]
      %v1272 = vld [vmem:[#allocation2 + $0xa2] sm:$0xff]
      %v1273 = vld [vmem:[#allocation2 + $0xaa] sm:$0xff]
      %v1274 = vld [vmem:[#allocation2 + $0xb2] sm:$0xff]
      %v1275 = vld [vmem:[#allocation2 + $0xba] sm:$0xff]
      %v1276 = vld [vmem:[#allocation2 + $0xca] sm:$0xff]
      %v1277 = vld [vmem:[#allocation2 + $0xd2] sm:$0xff]
      %v1278 = vld [vmem:[#allocation2 + $0xda] sm:$0xff]
      %v1279 = vld [vmem:[#allocation2 + $0xe2] sm:$0xff]
      %v1280 = vld [vmem:[#allocation2 + $0xf2] sm:$0xff]
      %v1281 = vld [vmem:[#allocation2 + $0xfa] sm:$0xff]
      %v1282 = vld [vmem:[#allocation2 + $0x102] sm:$0xff]
      %v1283 = vld [vmem:[#allocation2 + $0x10a] sm:$0xff]
      %v1284 = vld [vmem:[#allocation2 + $0x11a] sm:$0xff]
      %v1285 = vld [vmem:[#allocation2 + $0x122] sm:$0xff]
      %v1286 = vld [vmem:[#allocation2 + $0x12a] sm:$0xff]
      %v1287 = vld [vmem:[#allocation2 + $0x132] sm:$0xff]
      %v1288 = vld [vmem:[#allocation2 + $0x142] sm:$0xff]
      %v1289 = vld [vmem:[#allocation2 + $0x14a] sm:$0xff]
      %v1290 = vld [vmem:[#allocation2 + $0x152] sm:$0xff]
      %v1291 = vld [vmem:[#allocation2 + $0x15a] sm:$0xff]
      %v1292 = vld [vmem:[#allocation2 + $0x16a] sm:$0xff]
      %v1293 = vld [vmem:[#allocation2 + $0x172] sm:$0xff]
      %v1294 = vld [vmem:[#allocation2 + $0x17a] sm:$0xff]
      %v1295 = vld [vmem:[#allocation2 + $0x182] sm:$0xff]
      %v1296 = vld [vmem:[#allocation2 + $0x192] sm:$0xff]
      %v1297 = vld [vmem:[#allocation2 + $0x19a] sm:$0xff]
      %v1298 = vld [vmem:[#allocation2 + $0x1a2] sm:$0xff]
      %v1299 = vld [vmem:[#allocation2 + $0x1aa] sm:$0xff]
      %v1300 = vld [vmem:[#allocation2 + $0x1ba] sm:$0xff]
      %v1301 = vld [vmem:[#allocation2 + $0x1c2] sm:$0xff]
      %v1302 = vld [vmem:[#allocation2 + $0x1ca] sm:$0xff]
      %v1303 = vld [vmem:[#allocation2 + $0x1d2] sm:$0xff]
      %v1304 = vld [vmem:[#allocation2 + $0x1e2] sm:$0xff]
      %v1305 = vld [vmem:[#allocation2 + $0x1ea] sm:$0xff]
      %v1306 = vld [vmem:[#allocation2 + $0x1f2] sm:$0xff]
      %v1307 = vld [vmem:[#allocation2 + $0x1fa] sm:$0xff]
      %v1308 = vld [vmem:[#allocation2 + $0x20a] sm:$0xff]
      %v1309 = vld [vmem:[#allocation2 + $0x212] sm:$0xff]
      %v1310 = vld [vmem:[#allocation2 + $0x21a] sm:$0xff]
      %v1311 = vld [vmem:[#allocation2 + $0x222] sm:$0xff]
      %v1312 = vld [vmem:[#allocation2 + $0x232] sm:$0xff]
      %v1313 = vld [vmem:[#allocation2 + $0x23a] sm:$0xff]
      %v1314 = vld [vmem:[#allocation2 + $0x242] sm:$0xff]
      %v1315 = vld [vmem:[#allocation2 + $0x24a] sm:$0xff]
      %v1316 = vld [vmem:[#allocation2 + $0x25a] sm:$0xff]
      %v1317 = vld [vmem:[#allocation2 + $0x262] sm:$0xff]
      %v1318 = vld [vmem:[#allocation2 + $0x26a] sm:$0xff]
      %v1319 = vld [vmem:[#allocation2 + $0x272] sm:$0xff]
      %v1320 = vld [vmem:[#allocation2 + $0x282] sm:$0xff]
      %v1321 = vld [vmem:[#allocation2 + $0x28a] sm:$0xff]
      %v1322 = vld [vmem:[#allocation2 + $0x292] sm:$0xff]
      %v1323 = vld [vmem:[#allocation2 + $0x29a] sm:$0xff]
      %v1324 = vld [vmem:[#allocation2 + $0x2aa] sm:$0xff]
      %v1325 = vld [vmem:[#allocation2 + $0x2b2] sm:$0xff]
      %v1326 = vld [vmem:[#allocation2 + $0x2ba] sm:$0xff]
      %v1327 = vld [vmem:[#allocation2 + $0x2c2] sm:$0xff]
      %v1328 = vld [vmem:[#allocation2 + $0x2d2] sm:$0xff]
      %v1329 = vld [vmem:[#allocation2 + $0x2da] sm:$0xff]
      %v1330 = vld [vmem:[#allocation2 + $0x2e2] sm:$0xff]
      %v1331 = vld [vmem:[#allocation2 + $0x2ea] sm:$0xff]
      %v1332 = vld [vmem:[#allocation2 + $0x2fa] sm:$0xff]
      %v1333 = vld [vmem:[#allocation2 + $0x302] sm:$0xff]
      %v1334 = vld [vmem:[#allocation2 + $0x30a] sm:$0xff]
      %v1335 = vld [vmem:[#allocation2 + $0x312] sm:$0xff]
      %v1336 = vld [vmem:[#allocation2 + $0x322] sm:$0xff]
      %v1337 = vld [vmem:[#allocation2 + $0x32a] sm:$0xff]
      %v1338 = vld [vmem:[#allocation2 + $0x332] sm:$0xff]
      %v1339 = vld [vmem:[#allocation2 + $0x33a] sm:$0xff]
      %v1340 = vld [vmem:[#allocation2 + $0x34a] sm:$0xff]
      %v1341 = vld [vmem:[#allocation2 + $0x352] sm:$0xff]
      %v1342 = vld [vmem:[#allocation2 + $0x35a] sm:$0xff]
      %v1343 = vld [vmem:[#allocation2 + $0x362] sm:$0xff]
      %v1344 = vld [vmem:[#allocation2 + $0x372] sm:$0xff]
      %v1345 = vld [vmem:[#allocation2 + $0x37a] sm:$0xff]
      %v1346 = vld [vmem:[#allocation2 + $0x382] sm:$0xff]
      %v1347 = vld [vmem:[#allocation2 + $0x38a] sm:$0xff]
      %v1348 = vld [vmem:[#allocation2 + $0x39a] sm:$0xff]
      %v1349 = vld [vmem:[#allocation2 + $0x3a2] sm:$0xff]
      %v1350 = vld [vmem:[#allocation2 + $0x3aa] sm:$0xff]
      %v1351 = vld [vmem:[#allocation2 + $0x3b2] sm:$0xff]
      %v1352 = vld [vmem:[#allocation2 + $0x3c2] sm:$0xff]
      %v1353 = vld [vmem:[#allocation2 + $0x3ca] sm:$0xff]
      %v1354 = vld [vmem:[#allocation2 + $0x3d2] sm:$0xff]
      %v1355 = vld [vmem:[#allocation2 + $0x3da] sm:$0xff]
      %v1356 = vld [vmem:[#allocation2 + $0x3ea] sm:$0xff]
      %v1357 = vld [vmem:[#allocation2 + $0x3f2] sm:$0xff]
      %v1358 = vld [vmem:[#allocation2 + $0x3fa] sm:$0xff]
      %v1359 = vld [vmem:[#allocation2 + $0x402] sm:$0xff]
      %v1360 = vld [vmem:[#allocation2 + $0x412] sm:$0xff]
      %v1361 = vld [vmem:[#allocation2 + $0x41a] sm:$0xff]
      %v1362 = vld [vmem:[#allocation2 + $0x422] sm:$0xff]
      %v1363 = vld [vmem:[#allocation2 + $0x42a] sm:$0xff]
      %v1364 = vld [vmem:[#allocation2 + $0x43a] sm:$0xff]
      %v1365 = vld [vmem:[#allocation2 + $0x442] sm:$0xff]
      %v1366 = vld [vmem:[#allocation2 + $0x44a] sm:$0xff]
      %v1367 = vld [vmem:[#allocation2 + $0x452] sm:$0xff]
      %v1368 = vld [vmem:[#allocation2 + $0x462] sm:$0xff]
      %v1369 = vld [vmem:[#allocation2 + $0x46a] sm:$0xff]
      %v1370 = vld [vmem:[#allocation2 + $0x472] sm:$0xff]
      %v1371 = vld [vmem:[#allocation2 + $0x47a] sm:$0xff]
      %v1372 = vld [vmem:[#allocation2 + $0x48a] sm:$0xff]
      %v1373 = vld [vmem:[#allocation2 + $0x492] sm:$0xff]
      %v1374 = vld [vmem:[#allocation2 + $0x49a] sm:$0xff]
      %v1375 = vld [vmem:[#allocation2 + $0x4a2] sm:$0xff]
      %v1376 = vld [vmem:[#allocation2 + $0x4b2] sm:$0xff]
      %v1377 = vld [vmem:[#allocation2 + $0x4ba] sm:$0xff]
      %v1378 = vld [vmem:[#allocation2 + $0x4c2] sm:$0xff]
      %v1379 = vld [vmem:[#allocation2 + $0x4ca] sm:$0xff]
      %v1380 = vld [vmem:[#allocation2 + $0x4da] sm:$0xff]
      %v1381 = vld [vmem:[#allocation2 + $0x4e2] sm:$0xff]
      %v1382 = vld [vmem:[#allocation2 + $0x4ea] sm:$0xff]
      %v1383 = vld [vmem:[#allocation2 + $0x4f2] sm:$0xff]
      %v1384 = vpack.c.bf16 %v1257, %v1256
      %v1385 = vpack.c.bf16 %v1259, %v1258
      %v1386 = vpack.c.bf16 %v1261, %v1260
      %v1387 = vpack.c.bf16 %v1263, %v1262
      %v1388 = vpack.c.bf16 %v1265, %v1264
      %v1389 = vpack.c.bf16 %v1267, %v1266
      %v1390 = vpack.c.bf16 %v1269, %v1268
      %v1391 = vpack.c.bf16 %v1271, %v1270
      %v1392 = vpack.c.bf16 %v1273, %v1272
      %v1393 = vpack.c.bf16 %v1275, %v1274
      %v1394 = vpack.c.bf16 %v1277, %v1276
      %v1395 = vpack.c.bf16 %v1279, %v1278
      %v1396 = vpack.c.bf16 %v1281, %v1280
      %v1397 = vpack.c.bf16 %v1283, %v1282
      %v1398 = vpack.c.bf16 %v1285, %v1284
      %v1399 = vpack.c.bf16 %v1287, %v1286
      %v1400 = vpack.c.bf16 %v1289, %v1288
      %v1401 = vpack.c.bf16 %v1291, %v1290
      %v1402 = vpack.c.bf16 %v1293, %v1292
      %v1403 = vpack.c.bf16 %v1295, %v1294
      %v1404 = vpack.c.bf16 %v1297, %v1296
      %v1405 = vpack.c.bf16 %v1299, %v1298
      %v1406 = vpack.c.bf16 %v1301, %v1300
      %v1407 = vpack.c.bf16 %v1303, %v1302
      %v1408 = vpack.c.bf16 %v1305, %v1304
      %v1409 = vpack.c.bf16 %v1307, %v1306
      %v1410 = vpack.c.bf16 %v1309, %v1308
      %v1411 = vpack.c.bf16 %v1311, %v1310
      %v1412 = vpack.c.bf16 %v1313, %v1312
      %v1413 = vpack.c.bf16 %v1315, %v1314
      %v1414 = vpack.c.bf16 %v1317, %v1316
      %v1415 = vpack.c.bf16 %v1319, %v1318
      %v1416 = vpack.c.bf16 %v1321, %v1320
      %v1417 = vpack.c.bf16 %v1323, %v1322
      %v1418 = vpack.c.bf16 %v1325, %v1324
      %v1419 = vpack.c.bf16 %v1327, %v1326
      %v1420 = vpack.c.bf16 %v1329, %v1328
      %v1421 = vpack.c.bf16 %v1331, %v1330
      %v1422 = vpack.c.bf16 %v1333, %v1332
      %v1423 = vpack.c.bf16 %v1335, %v1334
      %v1424 = vpack.c.bf16 %v1337, %v1336
      %v1425 = vpack.c.bf16 %v1339, %v1338
      %v1426 = vpack.c.bf16 %v1341, %v1340
      %v1427 = vpack.c.bf16 %v1343, %v1342
      %v1428 = vpack.c.bf16 %v1345, %v1344
      %v1429 = vpack.c.bf16 %v1347, %v1346
      %v1430 = vpack.c.bf16 %v1349, %v1348
      %v1431 = vpack.c.bf16 %v1351, %v1350
      %v1432 = vpack.c.bf16 %v1353, %v1352
      %v1433 = vpack.c.bf16 %v1355, %v1354
      %v1434 = vpack.c.bf16 %v1357, %v1356
      %v1435 = vpack.c.bf16 %v1359, %v1358
      %v1436 = vpack.c.bf16 %v1361, %v1360
      %v1437 = vpack.c.bf16 %v1363, %v1362
      %v1438 = vpack.c.bf16 %v1365, %v1364
      %v1439 = vpack.c.bf16 %v1367, %v1366
      %v1440 = vpack.c.bf16 %v1369, %v1368
      %v1441 = vpack.c.bf16 %v1371, %v1370
      %v1442 = vpack.c.bf16 %v1373, %v1372
      %v1443 = vpack.c.bf16 %v1375, %v1374
      %v1444 = vpack.c.bf16 %v1377, %v1376
      %v1445 = vpack.c.bf16 %v1379, %v1378
      %v1446 = vpack.c.bf16 %v1381, %v1380
      %v1447 = vpack.c.bf16 %v1383, %v1382
      %1512 = vrot.lane.b32.xlu0 %v1384, 12
      %v1513 = vpop.permute.xlu0 %1512
      %1514 = vrot.lane.b32.xlu0 %v1385, 12
      %v1515 = vpop.permute.xlu0 %1514
      %1516 = vrot.lane.b32.xlu0 %v1386, 12
      %v1517 = vpop.permute.xlu0 %1516
      %1518 = vrot.lane.b32.xlu0 %v1387, 12
      %v1519 = vpop.permute.xlu0 %1518
      %1520 = vrot.lane.b32.xlu0 %v1388, 12
      %v1521 = vpop.permute.xlu0 %1520
      %1522 = vrot.lane.b32.xlu0 %v1389, 12
      %v1523 = vpop.permute.xlu0 %1522
      %1524 = vrot.lane.b32.xlu0 %v1390, 12
      %v1525 = vpop.permute.xlu0 %1524
      %1526 = vrot.lane.b32.xlu0 %v1391, 12
      %v1527 = vpop.permute.xlu0 %1526
      %1528 = vrot.lane.b32.xlu0 %v1392, 12
      %v1529 = vpop.permute.xlu0 %1528
      %1530 = vrot.lane.b32.xlu0 %v1393, 12
      %v1531 = vpop.permute.xlu0 %1530
      %1532 = vrot.lane.b32.xlu0 %v1394, 12
      %v1533 = vpop.permute.xlu0 %1532
      %1534 = vrot.lane.b32.xlu0 %v1395, 12
      %v1535 = vpop.permute.xlu0 %1534
      %1536 = vrot.lane.b32.xlu0 %v1396, 12
      %v1537 = vpop.permute.xlu0 %1536
      %1538 = vrot.lane.b32.xlu0 %v1397, 12
      %v1539 = vpop.permute.xlu0 %1538
      %1540 = vrot.lane.b32.xlu0 %v1398, 12
      %v1541 = vpop.permute.xlu0 %1540
      %1542 = vrot.lane.b32.xlu0 %v1399, 12
      %v1543 = vpop.permute.xlu0 %1542
      %1544 = vrot.lane.b32.xlu0 %v1400, 12
      %v1545 = vpop.permute.xlu0 %1544
      %1546 = vrot.lane.b32.xlu0 %v1401, 12
      %v1547 = vpop.permute.xlu0 %1546
      %1548 = vrot.lane.b32.xlu0 %v1402, 12
      %v1549 = vpop.permute.xlu0 %1548
      %1550 = vrot.lane.b32.xlu0 %v1403, 12
      %v1551 = vpop.permute.xlu0 %1550
      %1552 = vrot.lane.b32.xlu0 %v1404, 12
      %v1553 = vpop.permute.xlu0 %1552
      %1554 = vrot.lane.b32.xlu0 %v1405, 12
      %v1555 = vpop.permute.xlu0 %1554
      %1556 = vrot.lane.b32.xlu0 %v1406, 12
      %v1557 = vpop.permute.xlu0 %1556
      %1558 = vrot.lane.b32.xlu0 %v1407, 12
      %v1559 = vpop.permute.xlu0 %1558
      %1560 = vrot.lane.b32.xlu0 %v1408, 12
      %v1561 = vpop.permute.xlu0 %1560
      %1562 = vrot.lane.b32.xlu0 %v1409, 12
      %v1563 = vpop.permute.xlu0 %1562
      %1564 = vrot.lane.b32.xlu0 %v1410, 12
      %v1565 = vpop.permute.xlu0 %1564
      %1566 = vrot.lane.b32.xlu0 %v1411, 12
      %v1567 = vpop.permute.xlu0 %1566
      %1568 = vrot.lane.b32.xlu0 %v1412, 12
      %v1569 = vpop.permute.xlu0 %1568
      %1570 = vrot.lane.b32.xlu0 %v1413, 12
      %v1571 = vpop.permute.xlu0 %1570
      %1572 = vrot.lane.b32.xlu0 %v1414, 12
      %v1573 = vpop.permute.xlu0 %1572
      %1574 = vrot.lane.b32.xlu0 %v1415, 12
      %v1575 = vpop.permute.xlu0 %1574
      %1576 = vrot.lane.b32.xlu0 %v1416, 12
      %v1577 = vpop.permute.xlu0 %1576
      %1578 = vrot.lane.b32.xlu0 %v1417, 12
      %v1579 = vpop.permute.xlu0 %1578
      %1580 = vrot.lane.b32.xlu0 %v1418, 12
      %v1581 = vpop.permute.xlu0 %1580
      %1582 = vrot.lane.b32.xlu0 %v1419, 12
      %v1583 = vpop.permute.xlu0 %1582
      %1584 = vrot.lane.b32.xlu0 %v1420, 12
      %v1585 = vpop.permute.xlu0 %1584
      %1586 = vrot.lane.b32.xlu0 %v1421, 12
      %v1587 = vpop.permute.xlu0 %1586
      %1588 = vrot.lane.b32.xlu0 %v1422, 12
      %v1589 = vpop.permute.xlu0 %1588
      %1590 = vrot.lane.b32.xlu0 %v1423, 12
      %v1591 = vpop.permute.xlu0 %1590
      %1592 = vrot.lane.b32.xlu0 %v1424, 12
      %v1593 = vpop.permute.xlu0 %1592
      %1594 = vrot.lane.b32.xlu0 %v1425, 12
      %v1595 = vpop.permute.xlu0 %1594
      %1596 = vrot.lane.b32.xlu0 %v1426, 12
      %v1597 = vpop.permute.xlu0 %1596
      %1598 = vrot.lane.b32.xlu0 %v1427, 12
      %v1599 = vpop.permute.xlu0 %1598
      %1600 = vrot.lane.b32.xlu0 %v1428, 12
      %v1601 = vpop.permute.xlu0 %1600
      %1602 = vrot.lane.b32.xlu0 %v1429, 12
      %v1603 = vpop.permute.xlu0 %1602
      %1604 = vrot.lane.b32.xlu0 %v1430, 12
      %v1605 = vpop.permute.xlu0 %1604
      %1606 = vrot.lane.b32.xlu0 %v1431, 12
      %v1607 = vpop.permute.xlu0 %1606
      %1608 = vrot.lane.b32.xlu0 %v1432, 12
      %v1609 = vpop.permute.xlu0 %1608
      %1610 = vrot.lane.b32.xlu0 %v1433, 12
      %v1611 = vpop.permute.xlu0 %1610
      %1612 = vrot.lane.b32.xlu0 %v1434, 12
      %v1613 = vpop.permute.xlu0 %1612
      %1614 = vrot.lane.b32.xlu0 %v1435, 12
      %v1615 = vpop.permute.xlu0 %1614
      %1616 = vrot.lane.b32.xlu0 %v1436, 12
      %v1617 = vpop.permute.xlu0 %1616
      %1618 = vrot.lane.b32.xlu0 %v1437, 12
      %v1619 = vpop.permute.xlu0 %1618
      %1620 = vrot.lane.b32.xlu0 %v1438, 12
      %v1621 = vpop.permute.xlu0 %1620
      %1622 = vrot.lane.b32.xlu0 %v1439, 12
      %v1623 = vpop.permute.xlu0 %1622
      %1624 = vrot.lane.b32.xlu0 %v1440, 12
      %v1625 = vpop.permute.xlu0 %1624
      %1626 = vrot.lane.b32.xlu0 %v1441, 12
      %v1627 = vpop.permute.xlu0 %1626
      %1628 = vrot.lane.b32.xlu0 %v1442, 12
      %v1629 = vpop.permute.xlu0 %1628
      %1630 = vrot.lane.b32.xlu0 %v1443, 12
      %v1631 = vpop.permute.xlu0 %1630
      %1632 = vrot.lane.b32.xlu0 %v1444, 12
      %v1633 = vpop.permute.xlu0 %1632
      %1634 = vrot.lane.b32.xlu0 %v1445, 12
      %v1635 = vpop.permute.xlu0 %1634
      %1636 = vrot.lane.b32.xlu0 %v1446, 12
      %v1637 = vpop.permute.xlu0 %1636
      %1638 = vrot.lane.b32.xlu0 %v1447, 12
      %v1639 = vpop.permute.xlu0 %1638
      %vm1704 = vcmask 146528
      %1705 = vst.msk [vmem:[#allocation3] sm:$0xff] %vm1704, %v1513
      %1706 = vst.msk [vmem:[#allocation3 + $0x8] sm:$0xff] %vm1704, %v1515
      %1707 = vst.msk [vmem:[#allocation3 + $0x10] sm:$0xff] %vm1704, %v1517
      %1708 = vst.msk [vmem:[#allocation3 + $0x18] sm:$0xff] %vm1704, %v1519
      %1709 = vst.msk [vmem:[#allocation3 + $0x20] sm:$0xff] %vm1704, %v1521
      %1710 = vst.msk [vmem:[#allocation3 + $0x28] sm:$0xff] %vm1704, %v1523
      %1711 = vst.msk [vmem:[#allocation3 + $0x30] sm:$0xff] %vm1704, %v1525
      %1712 = vst.msk [vmem:[#allocation3 + $0x38] sm:$0xff] %vm1704, %v1527
      %1713 = vst.msk [vmem:[#allocation3 + $0x40] sm:$0xff] %vm1704, %v1529
      %1714 = vst.msk [vmem:[#allocation3 + $0x48] sm:$0xff] %vm1704, %v1531
      %1715 = vst.msk [vmem:[#allocation3 + $0x50] sm:$0xff] %vm1704, %v1533
      %1716 = vst.msk [vmem:[#allocation3 + $0x58] sm:$0xff] %vm1704, %v1535
      %1717 = vst.msk [vmem:[#allocation3 + $0x60] sm:$0xff] %vm1704, %v1537
      %1718 = vst.msk [vmem:[#allocation3 + $0x68] sm:$0xff] %vm1704, %v1539
      %1719 = vst.msk [vmem:[#allocation3 + $0x70] sm:$0xff] %vm1704, %v1541
      %1720 = vst.msk [vmem:[#allocation3 + $0x78] sm:$0xff] %vm1704, %v1543
      %1721 = vst.msk [vmem:[#allocation3 + $0x80] sm:$0xff] %vm1704, %v1545
      %1722 = vst.msk [vmem:[#allocation3 + $0x88] sm:$0xff] %vm1704, %v1547
      %1723 = vst.msk [vmem:[#allocation3 + $0x90] sm:$0xff] %vm1704, %v1549
      %1724 = vst.msk [vmem:[#allocation3 + $0x98] sm:$0xff] %vm1704, %v1551
      %1725 = vst.msk [vmem:[#allocation3 + $0xa0] sm:$0xff] %vm1704, %v1553
      %1726 = vst.msk [vmem:[#allocation3 + $0xa8] sm:$0xff] %vm1704, %v1555
      %1727 = vst.msk [vmem:[#allocation3 + $0xb0] sm:$0xff] %vm1704, %v1557
      %1728 = vst.msk [vmem:[#allocation3 + $0xb8] sm:$0xff] %vm1704, %v1559
      %1729 = vst.msk [vmem:[#allocation3 + $0xc0] sm:$0xff] %vm1704, %v1561
      %1730 = vst.msk [vmem:[#allocation3 + $0xc8] sm:$0xff] %vm1704, %v1563
      %1731 = vst.msk [vmem:[#allocation3 + $0xd0] sm:$0xff] %vm1704, %v1565
      %1732 = vst.msk [vmem:[#allocation3 + $0xd8] sm:$0xff] %vm1704, %v1567
      %1733 = vst.msk [vmem:[#allocation3 + $0xe0] sm:$0xff] %vm1704, %v1569
      %1734 = vst.msk [vmem:[#allocation3 + $0xe8] sm:$0xff] %vm1704, %v1571
      %1735 = vst.msk [vmem:[#allocation3 + $0xf0] sm:$0xff] %vm1704, %v1573
      %1736 = vst.msk [vmem:[#allocation3 + $0xf8] sm:$0xff] %vm1704, %v1575
      %1737 = vst.msk [vmem:[#allocation3 + $0x100] sm:$0xff] %vm1704, %v1577
      %1738 = vst.msk [vmem:[#allocation3 + $0x108] sm:$0xff] %vm1704, %v1579
      %1739 = vst.msk [vmem:[#allocation3 + $0x110] sm:$0xff] %vm1704, %v1581
      %1740 = vst.msk [vmem:[#allocation3 + $0x118] sm:$0xff] %vm1704, %v1583
      %1741 = vst.msk [vmem:[#allocation3 + $0x120] sm:$0xff] %vm1704, %v1585
      %1742 = vst.msk [vmem:[#allocation3 + $0x128] sm:$0xff] %vm1704, %v1587
      %1743 = vst.msk [vmem:[#allocation3 + $0x130] sm:$0xff] %vm1704, %v1589
      %1744 = vst.msk [vmem:[#allocation3 + $0x138] sm:$0xff] %vm1704, %v1591
      %1745 = vst.msk [vmem:[#allocation3 + $0x140] sm:$0xff] %vm1704, %v1593
      %1746 = vst.msk [vmem:[#allocation3 + $0x148] sm:$0xff] %vm1704, %v1595
      %1747 = vst.msk [vmem:[#allocation3 + $0x150] sm:$0xff] %vm1704, %v1597
      %1748 = vst.msk [vmem:[#allocation3 + $0x158] sm:$0xff] %vm1704, %v1599
      %1749 = vst.msk [vmem:[#allocation3 + $0x160] sm:$0xff] %vm1704, %v1601
      %1750 = vst.msk [vmem:[#allocation3 + $0x168] sm:$0xff] %vm1704, %v1603
      %1751 = vst.msk [vmem:[#allocation3 + $0x170] sm:$0xff] %vm1704, %v1605
      %1752 = vst.msk [vmem:[#allocation3 + $0x178] sm:$0xff] %vm1704, %v1607
      %1753 = vst.msk [vmem:[#allocation3 + $0x180] sm:$0xff] %vm1704, %v1609
      %1754 = vst.msk [vmem:[#allocation3 + $0x188] sm:$0xff] %vm1704, %v1611
      %1755 = vst.msk [vmem:[#allocation3 + $0x190] sm:$0xff] %vm1704, %v1613
      %1756 = vst.msk [vmem:[#allocation3 + $0x198] sm:$0xff] %vm1704, %v1615
      %1757 = vst.msk [vmem:[#allocation3 + $0x1a0] sm:$0xff] %vm1704, %v1617
      %1758 = vst.msk [vmem:[#allocation3 + $0x1a8] sm:$0xff] %vm1704, %v1619
      %1759 = vst.msk [vmem:[#allocation3 + $0x1b0] sm:$0xff] %vm1704, %v1621
      %1760 = vst.msk [vmem:[#allocation3 + $0x1b8] sm:$0xff] %vm1704, %v1623
      %1761 = vst.msk [vmem:[#allocation3 + $0x1c0] sm:$0xff] %vm1704, %v1625
      %1762 = vst.msk [vmem:[#allocation3 + $0x1c8] sm:$0xff] %vm1704, %v1627
      %1763 = vst.msk [vmem:[#allocation3 + $0x1d0] sm:$0xff] %vm1704, %v1629
      %1764 = vst.msk [vmem:[#allocation3 + $0x1d8] sm:$0xff] %vm1704, %v1631
      %1765 = vst.msk [vmem:[#allocation3 + $0x1e0] sm:$0xff] %vm1704, %v1633
      %1766 = vst.msk [vmem:[#allocation3 + $0x1e8] sm:$0xff] %vm1704, %v1635
      %1767 = vst.msk [vmem:[#allocation3 + $0x1f0] sm:$0xff] %vm1704, %v1637
      %1768 = vst.msk [vmem:[#allocation3 + $0x1f8] sm:$0xff] %vm1704, %v1639
      %v1769 = vld [vmem:[%s286] sm:$0xff]
      %v1770 = vld [vmem:[%s286 + $0x8] sm:$0xff]
      %v1771 = vld [vmem:[%s286 + $0x10] sm:$0xff]
      %v1772 = vld [vmem:[%s286 + $0x18] sm:$0xff]
      %v1773 = vld [vmem:[%s286 + $0x28] sm:$0xff]
      %v1774 = vld [vmem:[%s286 + $0x30] sm:$0xff]
      %v1775 = vld [vmem:[%s286 + $0x38] sm:$0xff]
      %v1776 = vld [vmem:[%s286 + $0x40] sm:$0xff]
      %v1777 = vld [vmem:[%s286 + $0x50] sm:$0xff]
      %v1778 = vld [vmem:[%s286 + $0x58] sm:$0xff]
      %v1779 = vld [vmem:[%s286 + $0x60] sm:$0xff]
      %v1780 = vld [vmem:[%s286 + $0x68] sm:$0xff]
      %v1781 = vld [vmem:[%s286 + $0x78] sm:$0xff]
      %v1782 = vld [vmem:[%s286 + $0x80] sm:$0xff]
      %v1783 = vld [vmem:[%s286 + $0x88] sm:$0xff]
      %v1784 = vld [vmem:[%s286 + $0x90] sm:$0xff]
      %v1785 = vld [vmem:[%s286 + $0xa0] sm:$0xff]
      %v1786 = vld [vmem:[%s286 + $0xa8] sm:$0xff]
      %v1787 = vld [vmem:[%s286 + $0xb0] sm:$0xff]
      %v1788 = vld [vmem:[%s286 + $0xb8] sm:$0xff]
      %v1789 = vld [vmem:[%s286 + $0xc8] sm:$0xff]
      %v1790 = vld [vmem:[%s286 + $0xd0] sm:$0xff]
      %v1791 = vld [vmem:[%s286 + $0xd8] sm:$0xff]
      %v1792 = vld [vmem:[%s286 + $0xe0] sm:$0xff]
      %v1793 = vld [vmem:[%s286 + $0xf0] sm:$0xff]
      %v1794 = vld [vmem:[%s286 + $0xf8] sm:$0xff]
      %v1795 = vld [vmem:[%s286 + $0x100] sm:$0xff]
      %v1796 = vld [vmem:[%s286 + $0x108] sm:$0xff]
      %v1797 = vld [vmem:[%s286 + $0x118] sm:$0xff]
      %v1798 = vld [vmem:[%s286 + $0x120] sm:$0xff]
      %v1799 = vld [vmem:[%s286 + $0x128] sm:$0xff]
      %v1800 = vld [vmem:[%s286 + $0x130] sm:$0xff]
      %v1801 = vld [vmem:[%s286 + $0x140] sm:$0xff]
      %v1802 = vld [vmem:[%s286 + $0x148] sm:$0xff]
      %v1803 = vld [vmem:[%s286 + $0x150] sm:$0xff]
      %v1804 = vld [vmem:[%s286 + $0x158] sm:$0xff]
      %v1805 = vld [vmem:[%s286 + $0x168] sm:$0xff]
      %v1806 = vld [vmem:[%s286 + $0x170] sm:$0xff]
      %v1807 = vld [vmem:[%s286 + $0x178] sm:$0xff]
      %v1808 = vld [vmem:[%s286 + $0x180] sm:$0xff]
      %v1809 = vld [vmem:[%s286 + $0x190] sm:$0xff]
      %v1810 = vld [vmem:[%s286 + $0x198] sm:$0xff]
      %v1811 = vld [vmem:[%s286 + $0x1a0] sm:$0xff]
      %v1812 = vld [vmem:[%s286 + $0x1a8] sm:$0xff]
      %v1813 = vld [vmem:[%s286 + $0x1b8] sm:$0xff]
      %v1814 = vld [vmem:[%s286 + $0x1c0] sm:$0xff]
      %v1815 = vld [vmem:[%s286 + $0x1c8] sm:$0xff]
      %v1816 = vld [vmem:[%s286 + $0x1d0] sm:$0xff]
      %v1817 = vld [vmem:[%s286 + $0x1e0] sm:$0xff]
      %v1818 = vld [vmem:[%s286 + $0x1e8] sm:$0xff]
      %v1819 = vld [vmem:[%s286 + $0x1f0] sm:$0xff]
      %v1820 = vld [vmem:[%s286 + $0x1f8] sm:$0xff]
      %v1821 = vld [vmem:[%s286 + $0x208] sm:$0xff]
      %v1822 = vld [vmem:[%s286 + $0x210] sm:$0xff]
      %v1823 = vld [vmem:[%s286 + $0x218] sm:$0xff]
      %v1824 = vld [vmem:[%s286 + $0x220] sm:$0xff]
      %v1825 = vld [vmem:[%s286 + $0x230] sm:$0xff]
      %v1826 = vld [vmem:[%s286 + $0x238] sm:$0xff]
      %v1827 = vld [vmem:[%s286 + $0x240] sm:$0xff]
      %v1828 = vld [vmem:[%s286 + $0x248] sm:$0xff]
      %v1829 = vld [vmem:[%s286 + $0x258] sm:$0xff]
      %v1830 = vld [vmem:[%s286 + $0x260] sm:$0xff]
      %v1831 = vld [vmem:[%s286 + $0x268] sm:$0xff]
      %v1832 = vld [vmem:[%s286 + $0x270] sm:$0xff]
      %v1833 = vld [vmem:[%s286 + $0x280] sm:$0xff]
      %v1834 = vld [vmem:[%s286 + $0x288] sm:$0xff]
      %v1835 = vld [vmem:[%s286 + $0x290] sm:$0xff]
      %v1836 = vld [vmem:[%s286 + $0x298] sm:$0xff]
      %v1837 = vld [vmem:[%s286 + $0x2a8] sm:$0xff]
      %v1838 = vld [vmem:[%s286 + $0x2b0] sm:$0xff]
      %v1839 = vld [vmem:[%s286 + $0x2b8] sm:$0xff]
      %v1840 = vld [vmem:[%s286 + $0x2c0] sm:$0xff]
      %v1841 = vld [vmem:[%s286 + $0x2d0] sm:$0xff]
      %v1842 = vld [vmem:[%s286 + $0x2d8] sm:$0xff]
      %v1843 = vld [vmem:[%s286 + $0x2e0] sm:$0xff]
      %v1844 = vld [vmem:[%s286 + $0x2e8] sm:$0xff]
      %v1845 = vld [vmem:[%s286 + $0x2f8] sm:$0xff]
      %v1846 = vld [vmem:[%s286 + $0x300] sm:$0xff]
      %v1847 = vld [vmem:[%s286 + $0x308] sm:$0xff]
      %v1848 = vld [vmem:[%s286 + $0x310] sm:$0xff]
      %v1849 = vld [vmem:[%s286 + $0x320] sm:$0xff]
      %v1850 = vld [vmem:[%s286 + $0x328] sm:$0xff]
      %v1851 = vld [vmem:[%s286 + $0x330] sm:$0xff]
      %v1852 = vld [vmem:[%s286 + $0x338] sm:$0xff]
      %v1853 = vld [vmem:[%s286 + $0x348] sm:$0xff]
      %v1854 = vld [vmem:[%s286 + $0x350] sm:$0xff]
      %v1855 = vld [vmem:[%s286 + $0x358] sm:$0xff]
      %v1856 = vld [vmem:[%s286 + $0x360] sm:$0xff]
      %v1857 = vld [vmem:[%s286 + $0x370] sm:$0xff]
      %v1858 = vld [vmem:[%s286 + $0x378] sm:$0xff]
      %v1859 = vld [vmem:[%s286 + $0x380] sm:$0xff]
      %v1860 = vld [vmem:[%s286 + $0x388] sm:$0xff]
      %v1861 = vld [vmem:[%s286 + $0x398] sm:$0xff]
      %v1862 = vld [vmem:[%s286 + $0x3a0] sm:$0xff]
      %v1863 = vld [vmem:[%s286 + $0x3a8] sm:$0xff]
      %v1864 = vld [vmem:[%s286 + $0x3b0] sm:$0xff]
      %v1865 = vld [vmem:[%s286 + $0x3c0] sm:$0xff]
      %v1866 = vld [vmem:[%s286 + $0x3c8] sm:$0xff]
      %v1867 = vld [vmem:[%s286 + $0x3d0] sm:$0xff]
      %v1868 = vld [vmem:[%s286 + $0x3d8] sm:$0xff]
      %v1869 = vld [vmem:[%s286 + $0x3e8] sm:$0xff]
      %v1870 = vld [vmem:[%s286 + $0x3f0] sm:$0xff]
      %v1871 = vld [vmem:[%s286 + $0x3f8] sm:$0xff]
      %v1872 = vld [vmem:[%s286 + $0x400] sm:$0xff]
      %v1873 = vld [vmem:[%s286 + $0x410] sm:$0xff]
      %v1874 = vld [vmem:[%s286 + $0x418] sm:$0xff]
      %v1875 = vld [vmem:[%s286 + $0x420] sm:$0xff]
      %v1876 = vld [vmem:[%s286 + $0x428] sm:$0xff]
      %v1877 = vld [vmem:[%s286 + $0x438] sm:$0xff]
      %v1878 = vld [vmem:[%s286 + $0x440] sm:$0xff]
      %v1879 = vld [vmem:[%s286 + $0x448] sm:$0xff]
      %v1880 = vld [vmem:[%s286 + $0x450] sm:$0xff]
      %v1881 = vld [vmem:[%s286 + $0x460] sm:$0xff]
      %v1882 = vld [vmem:[%s286 + $0x468] sm:$0xff]
      %v1883 = vld [vmem:[%s286 + $0x470] sm:$0xff]
      %v1884 = vld [vmem:[%s286 + $0x478] sm:$0xff]
      %v1885 = vld [vmem:[%s286 + $0x488] sm:$0xff]
      %v1886 = vld [vmem:[%s286 + $0x490] sm:$0xff]
      %v1887 = vld [vmem:[%s286 + $0x498] sm:$0xff]
      %v1888 = vld [vmem:[%s286 + $0x4a0] sm:$0xff]
      %v1889 = vld [vmem:[%s286 + $0x4b0] sm:$0xff]
      %v1890 = vld [vmem:[%s286 + $0x4b8] sm:$0xff]
      %v1891 = vld [vmem:[%s286 + $0x4c0] sm:$0xff]
      %v1892 = vld [vmem:[%s286 + $0x4c8] sm:$0xff]
      %v1893 = vld [vmem:[%s286 + $0x4d8] sm:$0xff]
      %v1894 = vld [vmem:[%s286 + $0x4e0] sm:$0xff]
      %v1895 = vld [vmem:[%s286 + $0x4e8] sm:$0xff]
      %v1896 = vld [vmem:[%s286 + $0x4f0] sm:$0xff]
      %v1897 = vpack.c.bf16 %v1770, %v1769
      %v1898 = vpack.c.bf16 %v1772, %v1771
      %v1899 = vpack.c.bf16 %v1774, %v1773
      %v1900 = vpack.c.bf16 %v1776, %v1775
      %v1901 = vpack.c.bf16 %v1778, %v1777
      %v1902 = vpack.c.bf16 %v1780, %v1779
      %v1903 = vpack.c.bf16 %v1782, %v1781
      %v1904 = vpack.c.bf16 %v1784, %v1783
      %v1905 = vpack.c.bf16 %v1786, %v1785
      %v1906 = vpack.c.bf16 %v1788, %v1787
      %v1907 = vpack.c.bf16 %v1790, %v1789
      %v1908 = vpack.c.bf16 %v1792, %v1791
      %v1909 = vpack.c.bf16 %v1794, %v1793
      %v1910 = vpack.c.bf16 %v1796, %v1795
      %v1911 = vpack.c.bf16 %v1798, %v1797
      %v1912 = vpack.c.bf16 %v1800, %v1799
      %v1913 = vpack.c.bf16 %v1802, %v1801
      %v1914 = vpack.c.bf16 %v1804, %v1803
      %v1915 = vpack.c.bf16 %v1806, %v1805
      %v1916 = vpack.c.bf16 %v1808, %v1807
      %v1917 = vpack.c.bf16 %v1810, %v1809
      %v1918 = vpack.c.bf16 %v1812, %v1811
      %v1919 = vpack.c.bf16 %v1814, %v1813
      %v1920 = vpack.c.bf16 %v1816, %v1815
      %v1921 = vpack.c.bf16 %v1818, %v1817
      %v1922 = vpack.c.bf16 %v1820, %v1819
      %v1923 = vpack.c.bf16 %v1822, %v1821
      %v1924 = vpack.c.bf16 %v1824, %v1823
      %v1925 = vpack.c.bf16 %v1826, %v1825
      %v1926 = vpack.c.bf16 %v1828, %v1827
      %v1927 = vpack.c.bf16 %v1830, %v1829
      %v1928 = vpack.c.bf16 %v1832, %v1831
      %v1929 = vpack.c.bf16 %v1834, %v1833
      %v1930 = vpack.c.bf16 %v1836, %v1835
      %v1931 = vpack.c.bf16 %v1838, %v1837
      %v1932 = vpack.c.bf16 %v1840, %v1839
      %v1933 = vpack.c.bf16 %v1842, %v1841
      %v1934 = vpack.c.bf16 %v1844, %v1843
      %v1935 = vpack.c.bf16 %v1846, %v1845
      %v1936 = vpack.c.bf16 %v1848, %v1847
      %v1937 = vpack.c.bf16 %v1850, %v1849
      %v1938 = vpack.c.bf16 %v1852, %v1851
      %v1939 = vpack.c.bf16 %v1854, %v1853
      %v1940 = vpack.c.bf16 %v1856, %v1855
      %v1941 = vpack.c.bf16 %v1858, %v1857
      %v1942 = vpack.c.bf16 %v1860, %v1859
      %v1943 = vpack.c.bf16 %v1862, %v1861
      %v1944 = vpack.c.bf16 %v1864, %v1863
      %v1945 = vpack.c.bf16 %v1866, %v1865
      %v1946 = vpack.c.bf16 %v1868, %v1867
      %v1947 = vpack.c.bf16 %v1870, %v1869
      %v1948 = vpack.c.bf16 %v1872, %v1871
      %v1949 = vpack.c.bf16 %v1874, %v1873
      %v1950 = vpack.c.bf16 %v1876, %v1875
      %v1951 = vpack.c.bf16 %v1878, %v1877
      %v1952 = vpack.c.bf16 %v1880, %v1879
      %v1953 = vpack.c.bf16 %v1882, %v1881
      %v1954 = vpack.c.bf16 %v1884, %v1883
      %v1955 = vpack.c.bf16 %v1886, %v1885
      %v1956 = vpack.c.bf16 %v1888, %v1887
      %v1957 = vpack.c.bf16 %v1890, %v1889
      %v1958 = vpack.c.bf16 %v1892, %v1891
      %v1959 = vpack.c.bf16 %v1894, %v1893
      %v1960 = vpack.c.bf16 %v1896, %v1895
      %2025 = vrot.lane.b32.xlu0 %v1897, 18
      %v2026 = vpop.permute.xlu0 %2025
      %2027 = vrot.lane.b32.xlu0 %v1898, 18
      %v2028 = vpop.permute.xlu0 %2027
      %2029 = vrot.lane.b32.xlu0 %v1899, 18
      %v2030 = vpop.permute.xlu0 %2029
      %2031 = vrot.lane.b32.xlu0 %v1900, 18
      %v2032 = vpop.permute.xlu0 %2031
      %2033 = vrot.lane.b32.xlu0 %v1901, 18
      %v2034 = vpop.permute.xlu0 %2033
      %2035 = vrot.lane.b32.xlu0 %v1902, 18
      %v2036 = vpop.permute.xlu0 %2035
      %2037 = vrot.lane.b32.xlu0 %v1903, 18
      %v2038 = vpop.permute.xlu0 %2037
      %2039 = vrot.lane.b32.xlu0 %v1904, 18
      %v2040 = vpop.permute.xlu0 %2039
      %2041 = vrot.lane.b32.xlu0 %v1905, 18
      %v2042 = vpop.permute.xlu0 %2041
      %2043 = vrot.lane.b32.xlu0 %v1906, 18
      %v2044 = vpop.permute.xlu0 %2043
      %2045 = vrot.lane.b32.xlu0 %v1907, 18
      %v2046 = vpop.permute.xlu0 %2045
      %2047 = vrot.lane.b32.xlu0 %v1908, 18
      %v2048 = vpop.permute.xlu0 %2047
      %2049 = vrot.lane.b32.xlu0 %v1909, 18
      %v2050 = vpop.permute.xlu0 %2049
      %2051 = vrot.lane.b32.xlu0 %v1910, 18
      %v2052 = vpop.permute.xlu0 %2051
      %2053 = vrot.lane.b32.xlu0 %v1911, 18
      %v2054 = vpop.permute.xlu0 %2053
      %2055 = vrot.lane.b32.xlu0 %v1912, 18
      %v2056 = vpop.permute.xlu0 %2055
      %2057 = vrot.lane.b32.xlu0 %v1913, 18
      %v2058 = vpop.permute.xlu0 %2057
      %2059 = vrot.lane.b32.xlu0 %v1914, 18
      %v2060 = vpop.permute.xlu0 %2059
      %2061 = vrot.lane.b32.xlu0 %v1915, 18
      %v2062 = vpop.permute.xlu0 %2061
      %2063 = vrot.lane.b32.xlu0 %v1916, 18
      %v2064 = vpop.permute.xlu0 %2063
      %2065 = vrot.lane.b32.xlu0 %v1917, 18
      %v2066 = vpop.permute.xlu0 %2065
      %2067 = vrot.lane.b32.xlu0 %v1918, 18
      %v2068 = vpop.permute.xlu0 %2067
      %2069 = vrot.lane.b32.xlu0 %v1919, 18
      %v2070 = vpop.permute.xlu0 %2069
      %2071 = vrot.lane.b32.xlu0 %v1920, 18
      %v2072 = vpop.permute.xlu0 %2071
      %2073 = vrot.lane.b32.xlu0 %v1921, 18
      %v2074 = vpop.permute.xlu0 %2073
      %2075 = vrot.lane.b32.xlu0 %v1922, 18
      %v2076 = vpop.permute.xlu0 %2075
      %2077 = vrot.lane.b32.xlu0 %v1923, 18
      %v2078 = vpop.permute.xlu0 %2077
      %2079 = vrot.lane.b32.xlu0 %v1924, 18
      %v2080 = vpop.permute.xlu0 %2079
      %2081 = vrot.lane.b32.xlu0 %v1925, 18
      %v2082 = vpop.permute.xlu0 %2081
      %2083 = vrot.lane.b32.xlu0 %v1926, 18
      %v2084 = vpop.permute.xlu0 %2083
      %2085 = vrot.lane.b32.xlu0 %v1927, 18
      %v2086 = vpop.permute.xlu0 %2085
      %2087 = vrot.lane.b32.xlu0 %v1928, 18
      %v2088 = vpop.permute.xlu0 %2087
      %2089 = vrot.lane.b32.xlu0 %v1929, 18
      %v2090 = vpop.permute.xlu0 %2089
      %2091 = vrot.lane.b32.xlu0 %v1930, 18
      %v2092 = vpop.permute.xlu0 %2091
      %2093 = vrot.lane.b32.xlu0 %v1931, 18
      %v2094 = vpop.permute.xlu0 %2093
      %2095 = vrot.lane.b32.xlu0 %v1932, 18
      %v2096 = vpop.permute.xlu0 %2095
      %2097 = vrot.lane.b32.xlu0 %v1933, 18
      %v2098 = vpop.permute.xlu0 %2097
      %2099 = vrot.lane.b32.xlu0 %v1934, 18
      %v2100 = vpop.permute.xlu0 %2099
      %2101 = vrot.lane.b32.xlu0 %v1935, 18
      %v2102 = vpop.permute.xlu0 %2101
      %2103 = vrot.lane.b32.xlu0 %v1936, 18
      %v2104 = vpop.permute.xlu0 %2103
      %2105 = vrot.lane.b32.xlu0 %v1937, 18
      %v2106 = vpop.permute.xlu0 %2105
      %2107 = vrot.lane.b32.xlu0 %v1938, 18
      %v2108 = vpop.permute.xlu0 %2107
      %2109 = vrot.lane.b32.xlu0 %v1939, 18
      %v2110 = vpop.permute.xlu0 %2109
      %2111 = vrot.lane.b32.xlu0 %v1940, 18
      %v2112 = vpop.permute.xlu0 %2111
      %2113 = vrot.lane.b32.xlu0 %v1941, 18
      %v2114 = vpop.permute.xlu0 %2113
      %2115 = vrot.lane.b32.xlu0 %v1942, 18
      %v2116 = vpop.permute.xlu0 %2115
      %2117 = vrot.lane.b32.xlu0 %v1943, 18
      %v2118 = vpop.permute.xlu0 %2117
      %2119 = vrot.lane.b32.xlu0 %v1944, 18
      %v2120 = vpop.permute.xlu0 %2119
      %2121 = vrot.lane.b32.xlu0 %v1945, 18
      %v2122 = vpop.permute.xlu0 %2121
      %2123 = vrot.lane.b32.xlu0 %v1946, 18
      %v2124 = vpop.permute.xlu0 %2123
      %2125 = vrot.lane.b32.xlu0 %v1947, 18
      %v2126 = vpop.permute.xlu0 %2125
      %2127 = vrot.lane.b32.xlu0 %v1948, 18
      %v2128 = vpop.permute.xlu0 %2127
      %2129 = vrot.lane.b32.xlu0 %v1949, 18
      %v2130 = vpop.permute.xlu0 %2129
      %2131 = vrot.lane.b32.xlu0 %v1950, 18
      %v2132 = vpop.permute.xlu0 %2131
      %2133 = vrot.lane.b32.xlu0 %v1951, 18
      %v2134 = vpop.permute.xlu0 %2133
      %2135 = vrot.lane.b32.xlu0 %v1952, 18
      %v2136 = vpop.permute.xlu0 %2135
      %2137 = vrot.lane.b32.xlu0 %v1953, 18
      %v2138 = vpop.permute.xlu0 %2137
      %2139 = vrot.lane.b32.xlu0 %v1954, 18
      %v2140 = vpop.permute.xlu0 %2139
      %2141 = vrot.lane.b32.xlu0 %v1955, 18
      %v2142 = vpop.permute.xlu0 %2141
      %2143 = vrot.lane.b32.xlu0 %v1956, 18
      %v2144 = vpop.permute.xlu0 %2143
      %2145 = vrot.lane.b32.xlu0 %v1957, 18
      %v2146 = vpop.permute.xlu0 %2145
      %2147 = vrot.lane.b32.xlu0 %v1958, 18
      %v2148 = vpop.permute.xlu0 %2147
      %2149 = vrot.lane.b32.xlu0 %v1959, 18
      %v2150 = vpop.permute.xlu0 %2149
      %2151 = vrot.lane.b32.xlu0 %v1960, 18
      %v2152 = vpop.permute.xlu0 %2151
      %vm2217 = vcmask 195728
      %2218 = vst.msk [vmem:[#allocation3] sm:$0xff] %vm2217, %v2026
      %2219 = vst.msk [vmem:[#allocation3 + $0x8] sm:$0xff] %vm2217, %v2028
      %2220 = vst.msk [vmem:[#allocation3 + $0x10] sm:$0xff] %vm2217, %v2030
      %2221 = vst.msk [vmem:[#allocation3 + $0x18] sm:$0xff] %vm2217, %v2032
      %2222 = vst.msk [vmem:[#allocation3 + $0x20] sm:$0xff] %vm2217, %v2034
      %2223 = vst.msk [vmem:[#allocation3 + $0x28] sm:$0xff] %vm2217, %v2036
      %2224 = vst.msk [vmem:[#allocation3 + $0x30] sm:$0xff] %vm2217, %v2038
      %2225 = vst.msk [vmem:[#allocation3 + $0x38] sm:$0xff] %vm2217, %v2040
      %2226 = vst.msk [vmem:[#allocation3 + $0x40] sm:$0xff] %vm2217, %v2042
      %2227 = vst.msk [vmem:[#allocation3 + $0x48] sm:$0xff] %vm2217, %v2044
      %2228 = vst.msk [vmem:[#allocation3 + $0x50] sm:$0xff] %vm2217, %v2046
      %2229 = vst.msk [vmem:[#allocation3 + $0x58] sm:$0xff] %vm2217, %v2048
      %2230 = vst.msk [vmem:[#allocation3 + $0x60] sm:$0xff] %vm2217, %v2050
      %2231 = vst.msk [vmem:[#allocation3 + $0x68] sm:$0xff] %vm2217, %v2052
      %2232 = vst.msk [vmem:[#allocation3 + $0x70] sm:$0xff] %vm2217, %v2054
      %2233 = vst.msk [vmem:[#allocation3 + $0x78] sm:$0xff] %vm2217, %v2056
      %2234 = vst.msk [vmem:[#allocation3 + $0x80] sm:$0xff] %vm2217, %v2058
      %2235 = vst.msk [vmem:[#allocation3 + $0x88] sm:$0xff] %vm2217, %v2060
      %2236 = vst.msk [vmem:[#allocation3 + $0x90] sm:$0xff] %vm2217, %v2062
      %2237 = vst.msk [vmem:[#allocation3 + $0x98] sm:$0xff] %vm2217, %v2064
      %2238 = vst.msk [vmem:[#allocation3 + $0xa0] sm:$0xff] %vm2217, %v2066
      %2239 = vst.msk [vmem:[#allocation3 + $0xa8] sm:$0xff] %vm2217, %v2068
      %2240 = vst.msk [vmem:[#allocation3 + $0xb0] sm:$0xff] %vm2217, %v2070
      %2241 = vst.msk [vmem:[#allocation3 + $0xb8] sm:$0xff] %vm2217, %v2072
      %2242 = vst.msk [vmem:[#allocation3 + $0xc0] sm:$0xff] %vm2217, %v2074
      %2243 = vst.msk [vmem:[#allocation3 + $0xc8] sm:$0xff] %vm2217, %v2076
      %2244 = vst.msk [vmem:[#allocation3 + $0xd0] sm:$0xff] %vm2217, %v2078
      %2245 = vst.msk [vmem:[#allocation3 + $0xd8] sm:$0xff] %vm2217, %v2080
      %2246 = vst.msk [vmem:[#allocation3 + $0xe0] sm:$0xff] %vm2217, %v2082
      %2247 = vst.msk [vmem:[#allocation3 + $0xe8] sm:$0xff] %vm2217, %v2084
      %2248 = vst.msk [vmem:[#allocation3 + $0xf0] sm:$0xff] %vm2217, %v2086
      %2249 = vst.msk [vmem:[#allocation3 + $0xf8] sm:$0xff] %vm2217, %v2088
      %2250 = vst.msk [vmem:[#allocation3 + $0x100] sm:$0xff] %vm2217, %v2090
      %2251 = vst.msk [vmem:[#allocation3 + $0x108] sm:$0xff] %vm2217, %v2092
      %2252 = vst.msk [vmem:[#allocation3 + $0x110] sm:$0xff] %vm2217, %v2094
      %2253 = vst.msk [vmem:[#allocation3 + $0x118] sm:$0xff] %vm2217, %v2096
      %2254 = vst.msk [vmem:[#allocation3 + $0x120] sm:$0xff] %vm2217, %v2098
      %2255 = vst.msk [vmem:[#allocation3 + $0x128] sm:$0xff] %vm2217, %v2100
      %2256 = vst.msk [vmem:[#allocation3 + $0x130] sm:$0xff] %vm2217, %v2102
      %2257 = vst.msk [vmem:[#allocation3 + $0x138] sm:$0xff] %vm2217, %v2104
      %2258 = vst.msk [vmem:[#allocation3 + $0x140] sm:$0xff] %vm2217, %v2106
      %2259 = vst.msk [vmem:[#allocation3 + $0x148] sm:$0xff] %vm2217, %v2108
      %2260 = vst.msk [vmem:[#allocation3 + $0x150] sm:$0xff] %vm2217, %v2110
      %2261 = vst.msk [vmem:[#allocation3 + $0x158] sm:$0xff] %vm2217, %v2112
      %2262 = vst.msk [vmem:[#allocation3 + $0x160] sm:$0xff] %vm2217, %v2114
      %2263 = vst.msk [vmem:[#allocation3 + $0x168] sm:$0xff] %vm2217, %v2116
      %2264 = vst.msk [vmem:[#allocation3 + $0x170] sm:$0xff] %vm2217, %v2118
      %2265 = vst.msk [vmem:[#allocation3 + $0x178] sm:$0xff] %vm2217, %v2120
      %2266 = vst.msk [vmem:[#allocation3 + $0x180] sm:$0xff] %vm2217, %v2122
      %2267 = vst.msk [vmem:[#allocation3 + $0x188] sm:$0xff] %vm2217, %v2124
      %2268 = vst.msk [vmem:[#allocation3 + $0x190] sm:$0xff] %vm2217, %v2126
      %2269 = vst.msk [vmem:[#allocation3 + $0x198] sm:$0xff] %vm2217, %v2128
      %2270 = vst.msk [vmem:[#allocation3 + $0x1a0] sm:$0xff] %vm2217, %v2130
      %2271 = vst.msk [vmem:[#allocation3 + $0x1a8] sm:$0xff] %vm2217, %v2132
      %2272 = vst.msk [vmem:[#allocation3 + $0x1b0] sm:$0xff] %vm2217, %v2134
      %2273 = vst.msk [vmem:[#allocation3 + $0x1b8] sm:$0xff] %vm2217, %v2136
      %2274 = vst.msk [vmem:[#allocation3 + $0x1c0] sm:$0xff] %vm2217, %v2138
      %2275 = vst.msk [vmem:[#allocation3 + $0x1c8] sm:$0xff] %vm2217, %v2140
      %2276 = vst.msk [vmem:[#allocation3 + $0x1d0] sm:$0xff] %vm2217, %v2142
      %2277 = vst.msk [vmem:[#allocation3 + $0x1d8] sm:$0xff] %vm2217, %v2144
      %2278 = vst.msk [vmem:[#allocation3 + $0x1e0] sm:$0xff] %vm2217, %v2146
      %2279 = vst.msk [vmem:[#allocation3 + $0x1e8] sm:$0xff] %vm2217, %v2148
      %2280 = vst.msk [vmem:[#allocation3 + $0x1f0] sm:$0xff] %vm2217, %v2150
      %2281 = vst.msk [vmem:[#allocation3 + $0x1f8] sm:$0xff] %vm2217, %v2152
      %v2282 = vld [vmem:[%s286 + $0x1] sm:$0xff]
      %v2283 = vld [vmem:[%s286 + $0x9] sm:$0xff]
      %v2284 = vld [vmem:[%s286 + $0x11] sm:$0xff]
      %v2285 = vld [vmem:[%s286 + $0x19] sm:$0xff]
      %v2286 = vld [vmem:[%s286 + $0x29] sm:$0xff]
      %v2287 = vld [vmem:[%s286 + $0x31] sm:$0xff]
      %v2288 = vld [vmem:[%s286 + $0x39] sm:$0xff]
      %v2289 = vld [vmem:[%s286 + $0x41] sm:$0xff]
      %v2290 = vld [vmem:[%s286 + $0x51] sm:$0xff]
      %v2291 = vld [vmem:[%s286 + $0x59] sm:$0xff]
      %v2292 = vld [vmem:[%s286 + $0x61] sm:$0xff]
      %v2293 = vld [vmem:[%s286 + $0x69] sm:$0xff]
      %v2294 = vld [vmem:[%s286 + $0x79] sm:$0xff]
      %v2295 = vld [vmem:[%s286 + $0x81] sm:$0xff]
      %v2296 = vld [vmem:[%s286 + $0x89] sm:$0xff]
      %v2297 = vld [vmem:[%s286 + $0x91] sm:$0xff]
      %v2298 = vld [vmem:[%s286 + $0xa1] sm:$0xff]
      %v2299 = vld [vmem:[%s286 + $0xa9] sm:$0xff]
      %v2300 = vld [vmem:[%s286 + $0xb1] sm:$0xff]
      %v2301 = vld [vmem:[%s286 + $0xb9] sm:$0xff]
      %v2302 = vld [vmem:[%s286 + $0xc9] sm:$0xff]
      %v2303 = vld [vmem:[%s286 + $0xd1] sm:$0xff]
      %v2304 = vld [vmem:[%s286 + $0xd9] sm:$0xff]
      %v2305 = vld [vmem:[%s286 + $0xe1] sm:$0xff]
      %v2306 = vld [vmem:[%s286 + $0xf1] sm:$0xff]
      %v2307 = vld [vmem:[%s286 + $0xf9] sm:$0xff]
      %v2308 = vld [vmem:[%s286 + $0x101] sm:$0xff]
      %v2309 = vld [vmem:[%s286 + $0x109] sm:$0xff]
      %v2310 = vld [vmem:[%s286 + $0x119] sm:$0xff]
      %v2311 = vld [vmem:[%s286 + $0x121] sm:$0xff]
      %v2312 = vld [vmem:[%s286 + $0x129] sm:$0xff]
      %v2313 = vld [vmem:[%s286 + $0x131] sm:$0xff]
      %v2314 = vld [vmem:[%s286 + $0x141] sm:$0xff]
      %v2315 = vld [vmem:[%s286 + $0x149] sm:$0xff]
      %v2316 = vld [vmem:[%s286 + $0x151] sm:$0xff]
      %v2317 = vld [vmem:[%s286 + $0x159] sm:$0xff]
      %v2318 = vld [vmem:[%s286 + $0x169] sm:$0xff]
      %v2319 = vld [vmem:[%s286 + $0x171] sm:$0xff]
      %v2320 = vld [vmem:[%s286 + $0x179] sm:$0xff]
      %v2321 = vld [vmem:[%s286 + $0x181] sm:$0xff]
      %v2322 = vld [vmem:[%s286 + $0x191] sm:$0xff]
      %v2323 = vld [vmem:[%s286 + $0x199] sm:$0xff]
      %v2324 = vld [vmem:[%s286 + $0x1a1] sm:$0xff]
      %v2325 = vld [vmem:[%s286 + $0x1a9] sm:$0xff]
      %v2326 = vld [vmem:[%s286 + $0x1b9] sm:$0xff]
      %v2327 = vld [vmem:[%s286 + $0x1c1] sm:$0xff]
      %v2328 = vld [vmem:[%s286 + $0x1c9] sm:$0xff]
      %v2329 = vld [vmem:[%s286 + $0x1d1] sm:$0xff]
      %v2330 = vld [vmem:[%s286 + $0x1e1] sm:$0xff]
      %v2331 = vld [vmem:[%s286 + $0x1e9] sm:$0xff]
      %v2332 = vld [vmem:[%s286 + $0x1f1] sm:$0xff]
      %v2333 = vld [vmem:[%s286 + $0x1f9] sm:$0xff]
      %v2334 = vld [vmem:[%s286 + $0x209] sm:$0xff]
      %v2335 = vld [vmem:[%s286 + $0x211] sm:$0xff]
      %v2336 = vld [vmem:[%s286 + $0x219] sm:$0xff]
      %v2337 = vld [vmem:[%s286 + $0x221] sm:$0xff]
      %v2338 = vld [vmem:[%s286 + $0x231] sm:$0xff]
      %v2339 = vld [vmem:[%s286 + $0x239] sm:$0xff]
      %v2340 = vld [vmem:[%s286 + $0x241] sm:$0xff]
      %v2341 = vld [vmem:[%s286 + $0x249] sm:$0xff]
      %v2342 = vld [vmem:[%s286 + $0x259] sm:$0xff]
      %v2343 = vld [vmem:[%s286 + $0x261] sm:$0xff]
      %v2344 = vld [vmem:[%s286 + $0x269] sm:$0xff]
      %v2345 = vld [vmem:[%s286 + $0x271] sm:$0xff]
      %v2346 = vld [vmem:[%s286 + $0x281] sm:$0xff]
      %v2347 = vld [vmem:[%s286 + $0x289] sm:$0xff]
      %v2348 = vld [vmem:[%s286 + $0x291] sm:$0xff]
      %v2349 = vld [vmem:[%s286 + $0x299] sm:$0xff]
      %v2350 = vld [vmem:[%s286 + $0x2a9] sm:$0xff]
      %v2351 = vld [vmem:[%s286 + $0x2b1] sm:$0xff]
      %v2352 = vld [vmem:[%s286 + $0x2b9] sm:$0xff]
      %v2353 = vld [vmem:[%s286 + $0x2c1] sm:$0xff]
      %v2354 = vld [vmem:[%s286 + $0x2d1] sm:$0xff]
      %v2355 = vld [vmem:[%s286 + $0x2d9] sm:$0xff]
      %v2356 = vld [vmem:[%s286 + $0x2e1] sm:$0xff]
      %v2357 = vld [vmem:[%s286 + $0x2e9] sm:$0xff]
      %v2358 = vld [vmem:[%s286 + $0x2f9] sm:$0xff]
      %v2359 = vld [vmem:[%s286 + $0x301] sm:$0xff]
      %v2360 = vld [vmem:[%s286 + $0x309] sm:$0xff]
      %v2361 = vld [vmem:[%s286 + $0x311] sm:$0xff]
      %v2362 = vld [vmem:[%s286 + $0x321] sm:$0xff]
      %v2363 = vld [vmem:[%s286 + $0x329] sm:$0xff]
      %v2364 = vld [vmem:[%s286 + $0x331] sm:$0xff]
      %v2365 = vld [vmem:[%s286 + $0x339] sm:$0xff]
      %v2366 = vld [vmem:[%s286 + $0x349] sm:$0xff]
      %v2367 = vld [vmem:[%s286 + $0x351] sm:$0xff]
      %v2368 = vld [vmem:[%s286 + $0x359] sm:$0xff]
      %v2369 = vld [vmem:[%s286 + $0x361] sm:$0xff]
      %v2370 = vld [vmem:[%s286 + $0x371] sm:$0xff]
      %v2371 = vld [vmem:[%s286 + $0x379] sm:$0xff]
      %v2372 = vld [vmem:[%s286 + $0x381] sm:$0xff]
      %v2373 = vld [vmem:[%s286 + $0x389] sm:$0xff]
      %v2374 = vld [vmem:[%s286 + $0x399] sm:$0xff]
      %v2375 = vld [vmem:[%s286 + $0x3a1] sm:$0xff]
      %v2376 = vld [vmem:[%s286 + $0x3a9] sm:$0xff]
      %v2377 = vld [vmem:[%s286 + $0x3b1] sm:$0xff]
      %v2378 = vld [vmem:[%s286 + $0x3c1] sm:$0xff]
      %v2379 = vld [vmem:[%s286 + $0x3c9] sm:$0xff]
      %v2380 = vld [vmem:[%s286 + $0x3d1] sm:$0xff]
      %v2381 = vld [vmem:[%s286 + $0x3d9] sm:$0xff]
      %v2382 = vld [vmem:[%s286 + $0x3e9] sm:$0xff]
      %v2383 = vld [vmem:[%s286 + $0x3f1] sm:$0xff]
      %v2384 = vld [vmem:[%s286 + $0x3f9] sm:$0xff]
      %v2385 = vld [vmem:[%s286 + $0x401] sm:$0xff]
      %v2386 = vld [vmem:[%s286 + $0x411] sm:$0xff]
      %v2387 = vld [vmem:[%s286 + $0x419] sm:$0xff]
      %v2388 = vld [vmem:[%s286 + $0x421] sm:$0xff]
      %v2389 = vld [vmem:[%s286 + $0x429] sm:$0xff]
      %v2390 = vld [vmem:[%s286 + $0x439] sm:$0xff]
      %v2391 = vld [vmem:[%s286 + $0x441] sm:$0xff]
      %v2392 = vld [vmem:[%s286 + $0x449] sm:$0xff]
      %v2393 = vld [vmem:[%s286 + $0x451] sm:$0xff]
      %v2394 = vld [vmem:[%s286 + $0x461] sm:$0xff]
      %v2395 = vld [vmem:[%s286 + $0x469] sm:$0xff]
      %v2396 = vld [vmem:[%s286 + $0x471] sm:$0xff]
      %v2397 = vld [vmem:[%s286 + $0x479] sm:$0xff]
      %v2398 = vld [vmem:[%s286 + $0x489] sm:$0xff]
      %v2399 = vld [vmem:[%s286 + $0x491] sm:$0xff]
      %v2400 = vld [vmem:[%s286 + $0x499] sm:$0xff]
      %v2401 = vld [vmem:[%s286 + $0x4a1] sm:$0xff]
      %v2402 = vld [vmem:[%s286 + $0x4b1] sm:$0xff]
      %v2403 = vld [vmem:[%s286 + $0x4b9] sm:$0xff]
      %v2404 = vld [vmem:[%s286 + $0x4c1] sm:$0xff]
      %v2405 = vld [vmem:[%s286 + $0x4c9] sm:$0xff]
      %v2406 = vld [vmem:[%s286 + $0x4d9] sm:$0xff]
      %v2407 = vld [vmem:[%s286 + $0x4e1] sm:$0xff]
      %v2408 = vld [vmem:[%s286 + $0x4e9] sm:$0xff]
      %v2409 = vld [vmem:[%s286 + $0x4f1] sm:$0xff]
      %v2410 = vpack.c.bf16 %v2283, %v2282
      %v2411 = vpack.c.bf16 %v2285, %v2284
      %v2412 = vpack.c.bf16 %v2287, %v2286
      %v2413 = vpack.c.bf16 %v2289, %v2288
      %v2414 = vpack.c.bf16 %v2291, %v2290
      %v2415 = vpack.c.bf16 %v2293, %v2292
      %v2416 = vpack.c.bf16 %v2295, %v2294
      %v2417 = vpack.c.bf16 %v2297, %v2296
      %v2418 = vpack.c.bf16 %v2299, %v2298
      %v2419 = vpack.c.bf16 %v2301, %v2300
      %v2420 = vpack.c.bf16 %v2303, %v2302
      %v2421 = vpack.c.bf16 %v2305, %v2304
      %v2422 = vpack.c.bf16 %v2307, %v2306
      %v2423 = vpack.c.bf16 %v2309, %v2308
      %v2424 = vpack.c.bf16 %v2311, %v2310
      %v2425 = vpack.c.bf16 %v2313, %v2312
      %v2426 = vpack.c.bf16 %v2315, %v2314
      %v2427 = vpack.c.bf16 %v2317, %v2316
      %v2428 = vpack.c.bf16 %v2319, %v2318
      %v2429 = vpack.c.bf16 %v2321, %v2320
      %v2430 = vpack.c.bf16 %v2323, %v2322
      %v2431 = vpack.c.bf16 %v2325, %v2324
      %v2432 = vpack.c.bf16 %v2327, %v2326
      %v2433 = vpack.c.bf16 %v2329, %v2328
      %v2434 = vpack.c.bf16 %v2331, %v2330
      %v2435 = vpack.c.bf16 %v2333, %v2332
      %v2436 = vpack.c.bf16 %v2335, %v2334
      %v2437 = vpack.c.bf16 %v2337, %v2336
      %v2438 = vpack.c.bf16 %v2339, %v2338
      %v2439 = vpack.c.bf16 %v2341, %v2340
      %v2440 = vpack.c.bf16 %v2343, %v2342
      %v2441 = vpack.c.bf16 %v2345, %v2344
      %v2442 = vpack.c.bf16 %v2347, %v2346
      %v2443 = vpack.c.bf16 %v2349, %v2348
      %v2444 = vpack.c.bf16 %v2351, %v2350
      %v2445 = vpack.c.bf16 %v2353, %v2352
      %v2446 = vpack.c.bf16 %v2355, %v2354
      %v2447 = vpack.c.bf16 %v2357, %v2356
      %v2448 = vpack.c.bf16 %v2359, %v2358
      %v2449 = vpack.c.bf16 %v2361, %v2360
      %v2450 = vpack.c.bf16 %v2363, %v2362
      %v2451 = vpack.c.bf16 %v2365, %v2364
      %v2452 = vpack.c.bf16 %v2367, %v2366
      %v2453 = vpack.c.bf16 %v2369, %v2368
      %v2454 = vpack.c.bf16 %v2371, %v2370
      %v2455 = vpack.c.bf16 %v2373, %v2372
      %v2456 = vpack.c.bf16 %v2375, %v2374
      %v2457 = vpack.c.bf16 %v2377, %v2376
      %v2458 = vpack.c.bf16 %v2379, %v2378
      %v2459 = vpack.c.bf16 %v2381, %v2380
      %v2460 = vpack.c.bf16 %v2383, %v2382
      %v2461 = vpack.c.bf16 %v2385, %v2384
      %v2462 = vpack.c.bf16 %v2387, %v2386
      %v2463 = vpack.c.bf16 %v2389, %v2388
      %v2464 = vpack.c.bf16 %v2391, %v2390
      %v2465 = vpack.c.bf16 %v2393, %v2392
      %v2466 = vpack.c.bf16 %v2395, %v2394
      %v2467 = vpack.c.bf16 %v2397, %v2396
      %v2468 = vpack.c.bf16 %v2399, %v2398
      %v2469 = vpack.c.bf16 %v2401, %v2400
      %v2470 = vpack.c.bf16 %v2403, %v2402
      %v2471 = vpack.c.bf16 %v2405, %v2404
      %v2472 = vpack.c.bf16 %v2407, %v2406
      %v2473 = vpack.c.bf16 %v2409, %v2408
      %2538 = vrot.lane.b32.xlu0 %v2410, 24
      %v2539 = vpop.permute.xlu0 %2538
      %2540 = vrot.lane.b32.xlu0 %v2411, 24
      %v2541 = vpop.permute.xlu0 %2540
      %2542 = vrot.lane.b32.xlu0 %v2412, 24
      %v2543 = vpop.permute.xlu0 %2542
      %2544 = vrot.lane.b32.xlu0 %v2413, 24
      %v2545 = vpop.permute.xlu0 %2544
      %2546 = vrot.lane.b32.xlu0 %v2414, 24
      %v2547 = vpop.permute.xlu0 %2546
      %2548 = vrot.lane.b32.xlu0 %v2415, 24
      %v2549 = vpop.permute.xlu0 %2548
      %2550 = vrot.lane.b32.xlu0 %v2416, 24
      %v2551 = vpop.permute.xlu0 %2550
      %2552 = vrot.lane.b32.xlu0 %v2417, 24
      %v2553 = vpop.permute.xlu0 %2552
      %2554 = vrot.lane.b32.xlu0 %v2418, 24
      %v2555 = vpop.permute.xlu0 %2554
      %2556 = vrot.lane.b32.xlu0 %v2419, 24
      %v2557 = vpop.permute.xlu0 %2556
      %2558 = vrot.lane.b32.xlu0 %v2420, 24
      %v2559 = vpop.permute.xlu0 %2558
      %2560 = vrot.lane.b32.xlu0 %v2421, 24
      %v2561 = vpop.permute.xlu0 %2560
      %2562 = vrot.lane.b32.xlu0 %v2422, 24
      %v2563 = vpop.permute.xlu0 %2562
      %2564 = vrot.lane.b32.xlu0 %v2423, 24
      %v2565 = vpop.permute.xlu0 %2564
      %2566 = vrot.lane.b32.xlu0 %v2424, 24
      %v2567 = vpop.permute.xlu0 %2566
      %2568 = vrot.lane.b32.xlu0 %v2425, 24
      %v2569 = vpop.permute.xlu0 %2568
      %2570 = vrot.lane.b32.xlu0 %v2426, 24
      %v2571 = vpop.permute.xlu0 %2570
      %2572 = vrot.lane.b32.xlu0 %v2427, 24
      %v2573 = vpop.permute.xlu0 %2572
      %2574 = vrot.lane.b32.xlu0 %v2428, 24
      %v2575 = vpop.permute.xlu0 %2574
      %2576 = vrot.lane.b32.xlu0 %v2429, 24
      %v2577 = vpop.permute.xlu0 %2576
      %2578 = vrot.lane.b32.xlu0 %v2430, 24
      %v2579 = vpop.permute.xlu0 %2578
      %2580 = vrot.lane.b32.xlu0 %v2431, 24
      %v2581 = vpop.permute.xlu0 %2580
      %2582 = vrot.lane.b32.xlu0 %v2432, 24
      %v2583 = vpop.permute.xlu0 %2582
      %2584 = vrot.lane.b32.xlu0 %v2433, 24
      %v2585 = vpop.permute.xlu0 %2584
      %2586 = vrot.lane.b32.xlu0 %v2434, 24
      %v2587 = vpop.permute.xlu0 %2586
      %2588 = vrot.lane.b32.xlu0 %v2435, 24
      %v2589 = vpop.permute.xlu0 %2588
      %2590 = vrot.lane.b32.xlu0 %v2436, 24
      %v2591 = vpop.permute.xlu0 %2590
      %2592 = vrot.lane.b32.xlu0 %v2437, 24
      %v2593 = vpop.permute.xlu0 %2592
      %2594 = vrot.lane.b32.xlu0 %v2438, 24
      %v2595 = vpop.permute.xlu0 %2594
      %2596 = vrot.lane.b32.xlu0 %v2439, 24
      %v2597 = vpop.permute.xlu0 %2596
      %2598 = vrot.lane.b32.xlu0 %v2440, 24
      %v2599 = vpop.permute.xlu0 %2598
      %2600 = vrot.lane.b32.xlu0 %v2441, 24
      %v2601 = vpop.permute.xlu0 %2600
      %2602 = vrot.lane.b32.xlu0 %v2442, 24
      %v2603 = vpop.permute.xlu0 %2602
      %2604 = vrot.lane.b32.xlu0 %v2443, 24
      %v2605 = vpop.permute.xlu0 %2604
      %2606 = vrot.lane.b32.xlu0 %v2444, 24
      %v2607 = vpop.permute.xlu0 %2606
      %2608 = vrot.lane.b32.xlu0 %v2445, 24
      %v2609 = vpop.permute.xlu0 %2608
      %2610 = vrot.lane.b32.xlu0 %v2446, 24
      %v2611 = vpop.permute.xlu0 %2610
      %2612 = vrot.lane.b32.xlu0 %v2447, 24
      %v2613 = vpop.permute.xlu0 %2612
      %2614 = vrot.lane.b32.xlu0 %v2448, 24
      %v2615 = vpop.permute.xlu0 %2614
      %2616 = vrot.lane.b32.xlu0 %v2449, 24
      %v2617 = vpop.permute.xlu0 %2616
      %2618 = vrot.lane.b32.xlu0 %v2450, 24
      %v2619 = vpop.permute.xlu0 %2618
      %2620 = vrot.lane.b32.xlu0 %v2451, 24
      %v2621 = vpop.permute.xlu0 %2620
      %2622 = vrot.lane.b32.xlu0 %v2452, 24
      %v2623 = vpop.permute.xlu0 %2622
      %2624 = vrot.lane.b32.xlu0 %v2453, 24
      %v2625 = vpop.permute.xlu0 %2624
      %2626 = vrot.lane.b32.xlu0 %v2454, 24
      %v2627 = vpop.permute.xlu0 %2626
      %2628 = vrot.lane.b32.xlu0 %v2455, 24
      %v2629 = vpop.permute.xlu0 %2628
      %2630 = vrot.lane.b32.xlu0 %v2456, 24
      %v2631 = vpop.permute.xlu0 %2630
      %2632 = vrot.lane.b32.xlu0 %v2457, 24
      %v2633 = vpop.permute.xlu0 %2632
      %2634 = vrot.lane.b32.xlu0 %v2458, 24
      %v2635 = vpop.permute.xlu0 %2634
      %2636 = vrot.lane.b32.xlu0 %v2459, 24
      %v2637 = vpop.permute.xlu0 %2636
      %2638 = vrot.lane.b32.xlu0 %v2460, 24
      %v2639 = vpop.permute.xlu0 %2638
      %2640 = vrot.lane.b32.xlu0 %v2461, 24
      %v2641 = vpop.permute.xlu0 %2640
      %2642 = vrot.lane.b32.xlu0 %v2462, 24
      %v2643 = vpop.permute.xlu0 %2642
      %2644 = vrot.lane.b32.xlu0 %v2463, 24
      %v2645 = vpop.permute.xlu0 %2644
      %2646 = vrot.lane.b32.xlu0 %v2464, 24
      %v2647 = vpop.permute.xlu0 %2646
      %2648 = vrot.lane.b32.xlu0 %v2465, 24
      %v2649 = vpop.permute.xlu0 %2648
      %2650 = vrot.lane.b32.xlu0 %v2466, 24
      %v2651 = vpop.permute.xlu0 %2650
      %2652 = vrot.lane.b32.xlu0 %v2467, 24
      %v2653 = vpop.permute.xlu0 %2652
      %2654 = vrot.lane.b32.xlu0 %v2468, 24
      %v2655 = vpop.permute.xlu0 %2654
      %2656 = vrot.lane.b32.xlu0 %v2469, 24
      %v2657 = vpop.permute.xlu0 %2656
      %2658 = vrot.lane.b32.xlu0 %v2470, 24
      %v2659 = vpop.permute.xlu0 %2658
      %2660 = vrot.lane.b32.xlu0 %v2471, 24
      %v2661 = vpop.permute.xlu0 %2660
      %2662 = vrot.lane.b32.xlu0 %v2472, 24
      %v2663 = vpop.permute.xlu0 %2662
      %2664 = vrot.lane.b32.xlu0 %v2473, 24
      %v2665 = vpop.permute.xlu0 %2664
      %vm2730 = vcmask 244928
      %2731 = vst.msk [vmem:[#allocation3] sm:$0xff] %vm2730, %v2539
      %2732 = vst.msk [vmem:[#allocation3 + $0x8] sm:$0xff] %vm2730, %v2541
      %2733 = vst.msk [vmem:[#allocation3 + $0x10] sm:$0xff] %vm2730, %v2543
      %2734 = vst.msk [vmem:[#allocation3 + $0x18] sm:$0xff] %vm2730, %v2545
      %2735 = vst.msk [vmem:[#allocation3 + $0x20] sm:$0xff] %vm2730, %v2547
      %2736 = vst.msk [vmem:[#allocation3 + $0x28] sm:$0xff] %vm2730, %v2549
      %2737 = vst.msk [vmem:[#allocation3 + $0x30] sm:$0xff] %vm2730, %v2551
      %2738 = vst.msk [vmem:[#allocation3 + $0x38] sm:$0xff] %vm2730, %v2553
      %2739 = vst.msk [vmem:[#allocation3 + $0x40] sm:$0xff] %vm2730, %v2555
      %2740 = vst.msk [vmem:[#allocation3 + $0x48] sm:$0xff] %vm2730, %v2557
      %2741 = vst.msk [vmem:[#allocation3 + $0x50] sm:$0xff] %vm2730, %v2559
      %2742 = vst.msk [vmem:[#allocation3 + $0x58] sm:$0xff] %vm2730, %v2561
      %2743 = vst.msk [vmem:[#allocation3 + $0x60] sm:$0xff] %vm2730, %v2563
      %2744 = vst.msk [vmem:[#allocation3 + $0x68] sm:$0xff] %vm2730, %v2565
      %2745 = vst.msk [vmem:[#allocation3 + $0x70] sm:$0xff] %vm2730, %v2567
      %2746 = vst.msk [vmem:[#allocation3 + $0x78] sm:$0xff] %vm2730, %v2569
      %2747 = vst.msk [vmem:[#allocation3 + $0x80] sm:$0xff] %vm2730, %v2571
      %2748 = vst.msk [vmem:[#allocation3 + $0x88] sm:$0xff] %vm2730, %v2573
      %2749 = vst.msk [vmem:[#allocation3 + $0x90] sm:$0xff] %vm2730, %v2575
      %2750 = vst.msk [vmem:[#allocation3 + $0x98] sm:$0xff] %vm2730, %v2577
      %2751 = vst.msk [vmem:[#allocation3 + $0xa0] sm:$0xff] %vm2730, %v2579
      %2752 = vst.msk [vmem:[#allocation3 + $0xa8] sm:$0xff] %vm2730, %v2581
      %2753 = vst.msk [vmem:[#allocation3 + $0xb0] sm:$0xff] %vm2730, %v2583
      %2754 = vst.msk [vmem:[#allocation3 + $0xb8] sm:$0xff] %vm2730, %v2585
      %2755 = vst.msk [vmem:[#allocation3 + $0xc0] sm:$0xff] %vm2730, %v2587
      %2756 = vst.msk [vmem:[#allocation3 + $0xc8] sm:$0xff] %vm2730, %v2589
      %2757 = vst.msk [vmem:[#allocation3 + $0xd0] sm:$0xff] %vm2730, %v2591
      %2758 = vst.msk [vmem:[#allocation3 + $0xd8] sm:$0xff] %vm2730, %v2593
      %2759 = vst.msk [vmem:[#allocation3 + $0xe0] sm:$0xff] %vm2730, %v2595
      %2760 = vst.msk [vmem:[#allocation3 + $0xe8] sm:$0xff] %vm2730, %v2597
      %2761 = vst.msk [vmem:[#allocation3 + $0xf0] sm:$0xff] %vm2730, %v2599
      %2762 = vst.msk [vmem:[#allocation3 + $0xf8] sm:$0xff] %vm2730, %v2601
      %2763 = vst.msk [vmem:[#allocation3 + $0x100] sm:$0xff] %vm2730, %v2603
      %2764 = vst.msk [vmem:[#allocation3 + $0x108] sm:$0xff] %vm2730, %v2605
      %2765 = vst.msk [vmem:[#allocation3 + $0x110] sm:$0xff] %vm2730, %v2607
      %2766 = vst.msk [vmem:[#allocation3 + $0x118] sm:$0xff] %vm2730, %v2609
      %2767 = vst.msk [vmem:[#allocation3 + $0x120] sm:$0xff] %vm2730, %v2611
      %2768 = vst.msk [vmem:[#allocation3 + $0x128] sm:$0xff] %vm2730, %v2613
      %2769 = vst.msk [vmem:[#allocation3 + $0x130] sm:$0xff] %vm2730, %v2615
      %2770 = vst.msk [vmem:[#allocation3 + $0x138] sm:$0xff] %vm2730, %v2617
      %2771 = vst.msk [vmem:[#allocation3 + $0x140] sm:$0xff] %vm2730, %v2619
      %2772 = vst.msk [vmem:[#allocation3 + $0x148] sm:$0xff] %vm2730, %v2621
      %2773 = vst.msk [vmem:[#allocation3 + $0x150] sm:$0xff] %vm2730, %v2623
      %2774 = vst.msk [vmem:[#allocation3 + $0x158] sm:$0xff] %vm2730, %v2625
      %2775 = vst.msk [vmem:[#allocation3 + $0x160] sm:$0xff] %vm2730, %v2627
      %2776 = vst.msk [vmem:[#allocation3 + $0x168] sm:$0xff] %vm2730, %v2629
      %2777 = vst.msk [vmem:[#allocation3 + $0x170] sm:$0xff] %vm2730, %v2631
      %2778 = vst.msk [vmem:[#allocation3 + $0x178] sm:$0xff] %vm2730, %v2633
      %2779 = vst.msk [vmem:[#allocation3 + $0x180] sm:$0xff] %vm2730, %v2635
      %2780 = vst.msk [vmem:[#allocation3 + $0x188] sm:$0xff] %vm2730, %v2637
      %2781 = vst.msk [vmem:[#allocation3 + $0x190] sm:$0xff] %vm2730, %v2639
      %2782 = vst.msk [vmem:[#allocation3 + $0x198] sm:$0xff] %vm2730, %v2641
      %2783 = vst.msk [vmem:[#allocation3 + $0x1a0] sm:$0xff] %vm2730, %v2643
      %2784 = vst.msk [vmem:[#allocation3 + $0x1a8] sm:$0xff] %vm2730, %v2645
      %2785 = vst.msk [vmem:[#allocation3 + $0x1b0] sm:$0xff] %vm2730, %v2647
      %2786 = vst.msk [vmem:[#allocation3 + $0x1b8] sm:$0xff] %vm2730, %v2649
      %2787 = vst.msk [vmem:[#allocation3 + $0x1c0] sm:$0xff] %vm2730, %v2651
      %2788 = vst.msk [vmem:[#allocation3 + $0x1c8] sm:$0xff] %vm2730, %v2653
      %2789 = vst.msk [vmem:[#allocation3 + $0x1d0] sm:$0xff] %vm2730, %v2655
      %2790 = vst.msk [vmem:[#allocation3 + $0x1d8] sm:$0xff] %vm2730, %v2657
      %2791 = vst.msk [vmem:[#allocation3 + $0x1e0] sm:$0xff] %vm2730, %v2659
      %2792 = vst.msk [vmem:[#allocation3 + $0x1e8] sm:$0xff] %vm2730, %v2661
      %2793 = vst.msk [vmem:[#allocation3 + $0x1f0] sm:$0xff] %vm2730, %v2663
      %2794 = vst.msk [vmem:[#allocation3 + $0x1f8] sm:$0xff] %vm2730, %v2665
      %v2795 = vld [vmem:[%s286 + $0x2] sm:$0xff]
      %v2796 = vld [vmem:[%s286 + $0xa] sm:$0xff]
      %v2797 = vld [vmem:[%s286 + $0x12] sm:$0xff]
      %v2798 = vld [vmem:[%s286 + $0x1a] sm:$0xff]
      %v2799 = vld [vmem:[%s286 + $0x2a] sm:$0xff]
      %v2800 = vld [vmem:[%s286 + $0x32] sm:$0xff]
      %v2801 = vld [vmem:[%s286 + $0x3a] sm:$0xff]
      %v2802 = vld [vmem:[%s286 + $0x42] sm:$0xff]
      %v2803 = vld [vmem:[%s286 + $0x52] sm:$0xff]
      %v2804 = vld [vmem:[%s286 + $0x5a] sm:$0xff]
      %v2805 = vld [vmem:[%s286 + $0x62] sm:$0xff]
      %v2806 = vld [vmem:[%s286 + $0x6a] sm:$0xff]
      %v2807 = vld [vmem:[%s286 + $0x7a] sm:$0xff]
      %v2808 = vld [vmem:[%s286 + $0x82] sm:$0xff]
      %v2809 = vld [vmem:[%s286 + $0x8a] sm:$0xff]
      %v2810 = vld [vmem:[%s286 + $0x92] sm:$0xff]
      %v2811 = vld [vmem:[%s286 + $0xa2] sm:$0xff]
      %v2812 = vld [vmem:[%s286 + $0xaa] sm:$0xff]
      %v2813 = vld [vmem:[%s286 + $0xb2] sm:$0xff]
      %v2814 = vld [vmem:[%s286 + $0xba] sm:$0xff]
      %v2815 = vld [vmem:[%s286 + $0xca] sm:$0xff]
      %v2816 = vld [vmem:[%s286 + $0xd2] sm:$0xff]
      %v2817 = vld [vmem:[%s286 + $0xda] sm:$0xff]
      %v2818 = vld [vmem:[%s286 + $0xe2] sm:$0xff]
      %v2819 = vld [vmem:[%s286 + $0xf2] sm:$0xff]
      %v2820 = vld [vmem:[%s286 + $0xfa] sm:$0xff]
      %v2821 = vld [vmem:[%s286 + $0x102] sm:$0xff]
      %v2822 = vld [vmem:[%s286 + $0x10a] sm:$0xff]
      %v2823 = vld [vmem:[%s286 + $0x11a] sm:$0xff]
      %v2824 = vld [vmem:[%s286 + $0x122] sm:$0xff]
      %v2825 = vld [vmem:[%s286 + $0x12a] sm:$0xff]
      %v2826 = vld [vmem:[%s286 + $0x132] sm:$0xff]
      %v2827 = vld [vmem:[%s286 + $0x142] sm:$0xff]
      %v2828 = vld [vmem:[%s286 + $0x14a] sm:$0xff]
      %v2829 = vld [vmem:[%s286 + $0x152] sm:$0xff]
      %v2830 = vld [vmem:[%s286 + $0x15a] sm:$0xff]
      %v2831 = vld [vmem:[%s286 + $0x16a] sm:$0xff]
      %v2832 = vld [vmem:[%s286 + $0x172] sm:$0xff]
      %v2833 = vld [vmem:[%s286 + $0x17a] sm:$0xff]
      %v2834 = vld [vmem:[%s286 + $0x182] sm:$0xff]
      %v2835 = vld [vmem:[%s286 + $0x192] sm:$0xff]
      %v2836 = vld [vmem:[%s286 + $0x19a] sm:$0xff]
      %v2837 = vld [vmem:[%s286 + $0x1a2] sm:$0xff]
      %v2838 = vld [vmem:[%s286 + $0x1aa] sm:$0xff]
      %v2839 = vld [vmem:[%s286 + $0x1ba] sm:$0xff]
      %v2840 = vld [vmem:[%s286 + $0x1c2] sm:$0xff]
      %v2841 = vld [vmem:[%s286 + $0x1ca] sm:$0xff]
      %v2842 = vld [vmem:[%s286 + $0x1d2] sm:$0xff]
      %v2843 = vld [vmem:[%s286 + $0x1e2] sm:$0xff]
      %v2844 = vld [vmem:[%s286 + $0x1ea] sm:$0xff]
      %v2845 = vld [vmem:[%s286 + $0x1f2] sm:$0xff]
      %v2846 = vld [vmem:[%s286 + $0x1fa] sm:$0xff]
      %v2847 = vld [vmem:[%s286 + $0x20a] sm:$0xff]
      %v2848 = vld [vmem:[%s286 + $0x212] sm:$0xff]
      %v2849 = vld [vmem:[%s286 + $0x21a] sm:$0xff]
      %v2850 = vld [vmem:[%s286 + $0x222] sm:$0xff]
      %v2851 = vld [vmem:[%s286 + $0x232] sm:$0xff]
      %v2852 = vld [vmem:[%s286 + $0x23a] sm:$0xff]
      %v2853 = vld [vmem:[%s286 + $0x242] sm:$0xff]
      %v2854 = vld [vmem:[%s286 + $0x24a] sm:$0xff]
      %v2855 = vld [vmem:[%s286 + $0x25a] sm:$0xff]
      %v2856 = vld [vmem:[%s286 + $0x262] sm:$0xff]
      %v2857 = vld [vmem:[%s286 + $0x26a] sm:$0xff]
      %v2858 = vld [vmem:[%s286 + $0x272] sm:$0xff]
      %v2859 = vld [vmem:[%s286 + $0x282] sm:$0xff]
      %v2860 = vld [vmem:[%s286 + $0x28a] sm:$0xff]
      %v2861 = vld [vmem:[%s286 + $0x292] sm:$0xff]
      %v2862 = vld [vmem:[%s286 + $0x29a] sm:$0xff]
      %v2863 = vld [vmem:[%s286 + $0x2aa] sm:$0xff]
      %v2864 = vld [vmem:[%s286 + $0x2b2] sm:$0xff]
      %v2865 = vld [vmem:[%s286 + $0x2ba] sm:$0xff]
      %v2866 = vld [vmem:[%s286 + $0x2c2] sm:$0xff]
      %v2867 = vld [vmem:[%s286 + $0x2d2] sm:$0xff]
      %v2868 = vld [vmem:[%s286 + $0x2da] sm:$0xff]
      %v2869 = vld [vmem:[%s286 + $0x2e2] sm:$0xff]
      %v2870 = vld [vmem:[%s286 + $0x2ea] sm:$0xff]
      %v2871 = vld [vmem:[%s286 + $0x2fa] sm:$0xff]
      %v2872 = vld [vmem:[%s286 + $0x302] sm:$0xff]
      %v2873 = vld [vmem:[%s286 + $0x30a] sm:$0xff]
      %v2874 = vld [vmem:[%s286 + $0x312] sm:$0xff]
      %v2875 = vld [vmem:[%s286 + $0x322] sm:$0xff]
      %v2876 = vld [vmem:[%s286 + $0x32a] sm:$0xff]
      %v2877 = vld [vmem:[%s286 + $0x332] sm:$0xff]
      %v2878 = vld [vmem:[%s286 + $0x33a] sm:$0xff]
      %v2879 = vld [vmem:[%s286 + $0x34a] sm:$0xff]
      %v2880 = vld [vmem:[%s286 + $0x352] sm:$0xff]
      %v2881 = vld [vmem:[%s286 + $0x35a] sm:$0xff]
      %v2882 = vld [vmem:[%s286 + $0x362] sm:$0xff]
      %v2883 = vld [vmem:[%s286 + $0x372] sm:$0xff]
      %v2884 = vld [vmem:[%s286 + $0x37a] sm:$0xff]
      %v2885 = vld [vmem:[%s286 + $0x382] sm:$0xff]
      %v2886 = vld [vmem:[%s286 + $0x38a] sm:$0xff]
      %v2887 = vld [vmem:[%s286 + $0x39a] sm:$0xff]
      %v2888 = vld [vmem:[%s286 + $0x3a2] sm:$0xff]
      %v2889 = vld [vmem:[%s286 + $0x3aa] sm:$0xff]
      %v2890 = vld [vmem:[%s286 + $0x3b2] sm:$0xff]
      %v2891 = vld [vmem:[%s286 + $0x3c2] sm:$0xff]
      %v2892 = vld [vmem:[%s286 + $0x3ca] sm:$0xff]
      %v2893 = vld [vmem:[%s286 + $0x3d2] sm:$0xff]
      %v2894 = vld [vmem:[%s286 + $0x3da] sm:$0xff]
      %v2895 = vld [vmem:[%s286 + $0x3ea] sm:$0xff]
      %v2896 = vld [vmem:[%s286 + $0x3f2] sm:$0xff]
      %v2897 = vld [vmem:[%s286 + $0x3fa] sm:$0xff]
      %v2898 = vld [vmem:[%s286 + $0x402] sm:$0xff]
      %v2899 = vld [vmem:[%s286 + $0x412] sm:$0xff]
      %v2900 = vld [vmem:[%s286 + $0x41a] sm:$0xff]
      %v2901 = vld [vmem:[%s286 + $0x422] sm:$0xff]
      %v2902 = vld [vmem:[%s286 + $0x42a] sm:$0xff]
      %v2903 = vld [vmem:[%s286 + $0x43a] sm:$0xff]
      %v2904 = vld [vmem:[%s286 + $0x442] sm:$0xff]
      %v2905 = vld [vmem:[%s286 + $0x44a] sm:$0xff]
      %v2906 = vld [vmem:[%s286 + $0x452] sm:$0xff]
      %v2907 = vld [vmem:[%s286 + $0x462] sm:$0xff]
      %v2908 = vld [vmem:[%s286 + $0x46a] sm:$0xff]
      %v2909 = vld [vmem:[%s286 + $0x472] sm:$0xff]
      %v2910 = vld [vmem:[%s286 + $0x47a] sm:$0xff]
      %v2911 = vld [vmem:[%s286 + $0x48a] sm:$0xff]
      %v2912 = vld [vmem:[%s286 + $0x492] sm:$0xff]
      %v2913 = vld [vmem:[%s286 + $0x49a] sm:$0xff]
      %v2914 = vld [vmem:[%s286 + $0x4a2] sm:$0xff]
      %v2915 = vld [vmem:[%s286 + $0x4b2] sm:$0xff]
      %v2916 = vld [vmem:[%s286 + $0x4ba] sm:$0xff]
      %v2917 = vld [vmem:[%s286 + $0x4c2] sm:$0xff]
      %v2918 = vld [vmem:[%s286 + $0x4ca] sm:$0xff]
      %v2919 = vld [vmem:[%s286 + $0x4da] sm:$0xff]
      %v2920 = vld [vmem:[%s286 + $0x4e2] sm:$0xff]
      %v2921 = vld [vmem:[%s286 + $0x4ea] sm:$0xff]
      %v2922 = vld [vmem:[%s286 + $0x4f2] sm:$0xff]
      %v2923 = vpack.c.bf16 %v2796, %v2795
      %v2924 = vpack.c.bf16 %v2798, %v2797
      %v2925 = vpack.c.bf16 %v2800, %v2799
      %v2926 = vpack.c.bf16 %v2802, %v2801
      %v2927 = vpack.c.bf16 %v2804, %v2803
      %v2928 = vpack.c.bf16 %v2806, %v2805
      %v2929 = vpack.c.bf16 %v2808, %v2807
      %v2930 = vpack.c.bf16 %v2810, %v2809
      %v2931 = vpack.c.bf16 %v2812, %v2811
      %v2932 = vpack.c.bf16 %v2814, %v2813
      %v2933 = vpack.c.bf16 %v2816, %v2815
      %v2934 = vpack.c.bf16 %v2818, %v2817
      %v2935 = vpack.c.bf16 %v2820, %v2819
      %v2936 = vpack.c.bf16 %v2822, %v2821
      %v2937 = vpack.c.bf16 %v2824, %v2823
      %v2938 = vpack.c.bf16 %v2826, %v2825
      %v2939 = vpack.c.bf16 %v2828, %v2827
      %v2940 = vpack.c.bf16 %v2830, %v2829
      %v2941 = vpack.c.bf16 %v2832, %v2831
      %v2942 = vpack.c.bf16 %v2834, %v2833
      %v2943 = vpack.c.bf16 %v2836, %v2835
      %v2944 = vpack.c.bf16 %v2838, %v2837
      %v2945 = vpack.c.bf16 %v2840, %v2839
      %v2946 = vpack.c.bf16 %v2842, %v2841
      %v2947 = vpack.c.bf16 %v2844, %v2843
      %v2948 = vpack.c.bf16 %v2846, %v2845
      %v2949 = vpack.c.bf16 %v2848, %v2847
      %v2950 = vpack.c.bf16 %v2850, %v2849
      %v2951 = vpack.c.bf16 %v2852, %v2851
      %v2952 = vpack.c.bf16 %v2854, %v2853
      %v2953 = vpack.c.bf16 %v2856, %v2855
      %v2954 = vpack.c.bf16 %v2858, %v2857
      %v2955 = vpack.c.bf16 %v2860, %v2859
      %v2956 = vpack.c.bf16 %v2862, %v2861
      %v2957 = vpack.c.bf16 %v2864, %v2863
      %v2958 = vpack.c.bf16 %v2866, %v2865
      %v2959 = vpack.c.bf16 %v2868, %v2867
      %v2960 = vpack.c.bf16 %v2870, %v2869
      %v2961 = vpack.c.bf16 %v2872, %v2871
      %v2962 = vpack.c.bf16 %v2874, %v2873
      %v2963 = vpack.c.bf16 %v2876, %v2875
      %v2964 = vpack.c.bf16 %v2878, %v2877
      %v2965 = vpack.c.bf16 %v2880, %v2879
      %v2966 = vpack.c.bf16 %v2882, %v2881
      %v2967 = vpack.c.bf16 %v2884, %v2883
      %v2968 = vpack.c.bf16 %v2886, %v2885
      %v2969 = vpack.c.bf16 %v2888, %v2887
      %v2970 = vpack.c.bf16 %v2890, %v2889
      %v2971 = vpack.c.bf16 %v2892, %v2891
      %v2972 = vpack.c.bf16 %v2894, %v2893
      %v2973 = vpack.c.bf16 %v2896, %v2895
      %v2974 = vpack.c.bf16 %v2898, %v2897
      %v2975 = vpack.c.bf16 %v2900, %v2899
      %v2976 = vpack.c.bf16 %v2902, %v2901
      %v2977 = vpack.c.bf16 %v2904, %v2903
      %v2978 = vpack.c.bf16 %v2906, %v2905
      %v2979 = vpack.c.bf16 %v2908, %v2907
      %v2980 = vpack.c.bf16 %v2910, %v2909
      %v2981 = vpack.c.bf16 %v2912, %v2911
      %v2982 = vpack.c.bf16 %v2914, %v2913
      %v2983 = vpack.c.bf16 %v2916, %v2915
      %v2984 = vpack.c.bf16 %v2918, %v2917
      %v2985 = vpack.c.bf16 %v2920, %v2919
      %v2986 = vpack.c.bf16 %v2922, %v2921
      %3051 = vrot.lane.b32.xlu0 %v2923, 30
      %v3052 = vpop.permute.xlu0 %3051
      %3053 = vrot.lane.b32.xlu0 %v2924, 30
      %v3054 = vpop.permute.xlu0 %3053
      %3055 = vrot.lane.b32.xlu0 %v2925, 30
      %v3056 = vpop.permute.xlu0 %3055
      %3057 = vrot.lane.b32.xlu0 %v2926, 30
      %v3058 = vpop.permute.xlu0 %3057
      %3059 = vrot.lane.b32.xlu0 %v2927, 30
      %v3060 = vpop.permute.xlu0 %3059
      %3061 = vrot.lane.b32.xlu0 %v2928, 30
      %v3062 = vpop.permute.xlu0 %3061
      %3063 = vrot.lane.b32.xlu0 %v2929, 30
      %v3064 = vpop.permute.xlu0 %3063
      %3065 = vrot.lane.b32.xlu0 %v2930, 30
      %v3066 = vpop.permute.xlu0 %3065
      %3067 = vrot.lane.b32.xlu0 %v2931, 30
      %v3068 = vpop.permute.xlu0 %3067
      %3069 = vrot.lane.b32.xlu0 %v2932, 30
      %v3070 = vpop.permute.xlu0 %3069
      %3071 = vrot.lane.b32.xlu0 %v2933, 30
      %v3072 = vpop.permute.xlu0 %3071
      %3073 = vrot.lane.b32.xlu0 %v2934, 30
      %v3074 = vpop.permute.xlu0 %3073
      %3075 = vrot.lane.b32.xlu0 %v2935, 30
      %v3076 = vpop.permute.xlu0 %3075
      %3077 = vrot.lane.b32.xlu0 %v2936, 30
      %v3078 = vpop.permute.xlu0 %3077
      %3079 = vrot.lane.b32.xlu0 %v2937, 30
      %v3080 = vpop.permute.xlu0 %3079
      %3081 = vrot.lane.b32.xlu0 %v2938, 30
      %v3082 = vpop.permute.xlu0 %3081
      %3083 = vrot.lane.b32.xlu0 %v2939, 30
      %v3084 = vpop.permute.xlu0 %3083
      %3085 = vrot.lane.b32.xlu0 %v2940, 30
      %v3086 = vpop.permute.xlu0 %3085
      %3087 = vrot.lane.b32.xlu0 %v2941, 30
      %v3088 = vpop.permute.xlu0 %3087
      %3089 = vrot.lane.b32.xlu0 %v2942, 30
      %v3090 = vpop.permute.xlu0 %3089
      %3091 = vrot.lane.b32.xlu0 %v2943, 30
      %v3092 = vpop.permute.xlu0 %3091
      %3093 = vrot.lane.b32.xlu0 %v2944, 30
      %v3094 = vpop.permute.xlu0 %3093
      %3095 = vrot.lane.b32.xlu0 %v2945, 30
      %v3096 = vpop.permute.xlu0 %3095
      %3097 = vrot.lane.b32.xlu0 %v2946, 30
      %v3098 = vpop.permute.xlu0 %3097
      %3099 = vrot.lane.b32.xlu0 %v2947, 30
      %v3100 = vpop.permute.xlu0 %3099
      %3101 = vrot.lane.b32.xlu0 %v2948, 30
      %v3102 = vpop.permute.xlu0 %3101
      %3103 = vrot.lane.b32.xlu0 %v2949, 30
      %v3104 = vpop.permute.xlu0 %3103
      %3105 = vrot.lane.b32.xlu0 %v2950, 30
      %v3106 = vpop.permute.xlu0 %3105
      %3107 = vrot.lane.b32.xlu0 %v2951, 30
      %v3108 = vpop.permute.xlu0 %3107
      %3109 = vrot.lane.b32.xlu0 %v2952, 30
      %v3110 = vpop.permute.xlu0 %3109
      %3111 = vrot.lane.b32.xlu0 %v2953, 30
      %v3112 = vpop.permute.xlu0 %3111
      %3113 = vrot.lane.b32.xlu0 %v2954, 30
      %v3114 = vpop.permute.xlu0 %3113
      %3115 = vrot.lane.b32.xlu0 %v2955, 30
      %v3116 = vpop.permute.xlu0 %3115
      %3117 = vrot.lane.b32.xlu0 %v2956, 30
      %v3118 = vpop.permute.xlu0 %3117
      %3119 = vrot.lane.b32.xlu0 %v2957, 30
      %v3120 = vpop.permute.xlu0 %3119
      %3121 = vrot.lane.b32.xlu0 %v2958, 30
      %v3122 = vpop.permute.xlu0 %3121
      %3123 = vrot.lane.b32.xlu0 %v2959, 30
      %v3124 = vpop.permute.xlu0 %3123
      %3125 = vrot.lane.b32.xlu0 %v2960, 30
      %v3126 = vpop.permute.xlu0 %3125
      %3127 = vrot.lane.b32.xlu0 %v2961, 30
      %v3128 = vpop.permute.xlu0 %3127
      %3129 = vrot.lane.b32.xlu0 %v2962, 30
      %v3130 = vpop.permute.xlu0 %3129
      %3131 = vrot.lane.b32.xlu0 %v2963, 30
      %v3132 = vpop.permute.xlu0 %3131
      %3133 = vrot.lane.b32.xlu0 %v2964, 30
      %v3134 = vpop.permute.xlu0 %3133
      %3135 = vrot.lane.b32.xlu0 %v2965, 30
      %v3136 = vpop.permute.xlu0 %3135
      %3137 = vrot.lane.b32.xlu0 %v2966, 30
      %v3138 = vpop.permute.xlu0 %3137
      %3139 = vrot.lane.b32.xlu0 %v2967, 30
      %v3140 = vpop.permute.xlu0 %3139
      %3141 = vrot.lane.b32.xlu0 %v2968, 30
      %v3142 = vpop.permute.xlu0 %3141
      %3143 = vrot.lane.b32.xlu0 %v2969, 30
      %v3144 = vpop.permute.xlu0 %3143
      %3145 = vrot.lane.b32.xlu0 %v2970, 30
      %v3146 = vpop.permute.xlu0 %3145
      %3147 = vrot.lane.b32.xlu0 %v2971, 30
      %v3148 = vpop.permute.xlu0 %3147
      %3149 = vrot.lane.b32.xlu0 %v2972, 30
      %v3150 = vpop.permute.xlu0 %3149
      %3151 = vrot.lane.b32.xlu0 %v2973, 30
      %v3152 = vpop.permute.xlu0 %3151
      %3153 = vrot.lane.b32.xlu0 %v2974, 30
      %v3154 = vpop.permute.xlu0 %3153
      %3155 = vrot.lane.b32.xlu0 %v2975, 30
      %v3156 = vpop.permute.xlu0 %3155
      %3157 = vrot.lane.b32.xlu0 %v2976, 30
      %v3158 = vpop.permute.xlu0 %3157
      %3159 = vrot.lane.b32.xlu0 %v2977, 30
      %v3160 = vpop.permute.xlu0 %3159
      %3161 = vrot.lane.b32.xlu0 %v2978, 30
      %v3162 = vpop.permute.xlu0 %3161
      %3163 = vrot.lane.b32.xlu0 %v2979, 30
      %v3164 = vpop.permute.xlu0 %3163
      %3165 = vrot.lane.b32.xlu0 %v2980, 30
      %v3166 = vpop.permute.xlu0 %3165
      %3167 = vrot.lane.b32.xlu0 %v2981, 30
      %v3168 = vpop.permute.xlu0 %3167
      %3169 = vrot.lane.b32.xlu0 %v2982, 30
      %v3170 = vpop.permute.xlu0 %3169
      %3171 = vrot.lane.b32.xlu0 %v2983, 30
      %v3172 = vpop.permute.xlu0 %3171
      %3173 = vrot.lane.b32.xlu0 %v2984, 30
      %v3174 = vpop.permute.xlu0 %3173
      %3175 = vrot.lane.b32.xlu0 %v2985, 30
      %v3176 = vpop.permute.xlu0 %3175
      %3177 = vrot.lane.b32.xlu0 %v2986, 30
      %v3178 = vpop.permute.xlu0 %3177
      %vm3243 = vcmask 294128
      %3244 = vst.msk [vmem:[#allocation3] sm:$0xff] %vm3243, %v3052
      %3245 = vst.msk [vmem:[#allocation3 + $0x8] sm:$0xff] %vm3243, %v3054
      %3246 = vst.msk [vmem:[#allocation3 + $0x10] sm:$0xff] %vm3243, %v3056
      %3247 = vst.msk [vmem:[#allocation3 + $0x18] sm:$0xff] %vm3243, %v3058
      %3248 = vst.msk [vmem:[#allocation3 + $0x20] sm:$0xff] %vm3243, %v3060
      %3249 = vst.msk [vmem:[#allocation3 + $0x28] sm:$0xff] %vm3243, %v3062
      %3250 = vst.msk [vmem:[#allocation3 + $0x30] sm:$0xff] %vm3243, %v3064
      %3251 = vst.msk [vmem:[#allocation3 + $0x38] sm:$0xff] %vm3243, %v3066
      %3252 = vst.msk [vmem:[#allocation3 + $0x40] sm:$0xff] %vm3243, %v3068
      %3253 = vst.msk [vmem:[#allocation3 + $0x48] sm:$0xff] %vm3243, %v3070
      %3254 = vst.msk [vmem:[#allocation3 + $0x50] sm:$0xff] %vm3243, %v3072
      %3255 = vst.msk [vmem:[#allocation3 + $0x58] sm:$0xff] %vm3243, %v3074
      %3256 = vst.msk [vmem:[#allocation3 + $0x60] sm:$0xff] %vm3243, %v3076
      %3257 = vst.msk [vmem:[#allocation3 + $0x68] sm:$0xff] %vm3243, %v3078
      %3258 = vst.msk [vmem:[#allocation3 + $0x70] sm:$0xff] %vm3243, %v3080
      %3259 = vst.msk [vmem:[#allocation3 + $0x78] sm:$0xff] %vm3243, %v3082
      %3260 = vst.msk [vmem:[#allocation3 + $0x80] sm:$0xff] %vm3243, %v3084
      %3261 = vst.msk [vmem:[#allocation3 + $0x88] sm:$0xff] %vm3243, %v3086
      %3262 = vst.msk [vmem:[#allocation3 + $0x90] sm:$0xff] %vm3243, %v3088
      %3263 = vst.msk [vmem:[#allocation3 + $0x98] sm:$0xff] %vm3243, %v3090
      %3264 = vst.msk [vmem:[#allocation3 + $0xa0] sm:$0xff] %vm3243, %v3092
      %3265 = vst.msk [vmem:[#allocation3 + $0xa8] sm:$0xff] %vm3243, %v3094
      %3266 = vst.msk [vmem:[#allocation3 + $0xb0] sm:$0xff] %vm3243, %v3096
      %3267 = vst.msk [vmem:[#allocation3 + $0xb8] sm:$0xff] %vm3243, %v3098
      %3268 = vst.msk [vmem:[#allocation3 + $0xc0] sm:$0xff] %vm3243, %v3100
      %3269 = vst.msk [vmem:[#allocation3 + $0xc8] sm:$0xff] %vm3243, %v3102
      %3270 = vst.msk [vmem:[#allocation3 + $0xd0] sm:$0xff] %vm3243, %v3104
      %3271 = vst.msk [vmem:[#allocation3 + $0xd8] sm:$0xff] %vm3243, %v3106
      %3272 = vst.msk [vmem:[#allocation3 + $0xe0] sm:$0xff] %vm3243, %v3108
      %3273 = vst.msk [vmem:[#allocation3 + $0xe8] sm:$0xff] %vm3243, %v3110
      %3274 = vst.msk [vmem:[#allocation3 + $0xf0] sm:$0xff] %vm3243, %v3112
      %3275 = vst.msk [vmem:[#allocation3 + $0xf8] sm:$0xff] %vm3243, %v3114
      %3276 = vst.msk [vmem:[#allocation3 + $0x100] sm:$0xff] %vm3243, %v3116
      %3277 = vst.msk [vmem:[#allocation3 + $0x108] sm:$0xff] %vm3243, %v3118
      %3278 = vst.msk [vmem:[#allocation3 + $0x110] sm:$0xff] %vm3243, %v3120
      %3279 = vst.msk [vmem:[#allocation3 + $0x118] sm:$0xff] %vm3243, %v3122
      %3280 = vst.msk [vmem:[#allocation3 + $0x120] sm:$0xff] %vm3243, %v3124
      %3281 = vst.msk [vmem:[#allocation3 + $0x128] sm:$0xff] %vm3243, %v3126
      %3282 = vst.msk [vmem:[#allocation3 + $0x130] sm:$0xff] %vm3243, %v3128
      %3283 = vst.msk [vmem:[#allocation3 + $0x138] sm:$0xff] %vm3243, %v3130
      %3284 = vst.msk [vmem:[#allocation3 + $0x140] sm:$0xff] %vm3243, %v3132
      %3285 = vst.msk [vmem:[#allocation3 + $0x148] sm:$0xff] %vm3243, %v3134
      %3286 = vst.msk [vmem:[#allocation3 + $0x150] sm:$0xff] %vm3243, %v3136
      %3287 = vst.msk [vmem:[#allocation3 + $0x158] sm:$0xff] %vm3243, %v3138
      %3288 = vst.msk [vmem:[#allocation3 + $0x160] sm:$0xff] %vm3243, %v3140
      %3289 = vst.msk [vmem:[#allocation3 + $0x168] sm:$0xff] %vm3243, %v3142
      %3290 = vst.msk [vmem:[#allocation3 + $0x170] sm:$0xff] %vm3243, %v3144
      %3291 = vst.msk [vmem:[#allocation3 + $0x178] sm:$0xff] %vm3243, %v3146
      %3292 = vst.msk [vmem:[#allocation3 + $0x180] sm:$0xff] %vm3243, %v3148
      %3293 = vst.msk [vmem:[#allocation3 + $0x188] sm:$0xff] %vm3243, %v3150
      %3294 = vst.msk [vmem:[#allocation3 + $0x190] sm:$0xff] %vm3243, %v3152
      %3295 = vst.msk [vmem:[#allocation3 + $0x198] sm:$0xff] %vm3243, %v3154
      %3296 = vst.msk [vmem:[#allocation3 + $0x1a0] sm:$0xff] %vm3243, %v3156
      %3297 = vst.msk [vmem:[#allocation3 + $0x1a8] sm:$0xff] %vm3243, %v3158
      %3298 = vst.msk [vmem:[#allocation3 + $0x1b0] sm:$0xff] %vm3243, %v3160
      %3299 = vst.msk [vmem:[#allocation3 + $0x1b8] sm:$0xff] %vm3243, %v3162
      %3300 = vst.msk [vmem:[#allocation3 + $0x1c0] sm:$0xff] %vm3243, %v3164
      %3301 = vst.msk [vmem:[#allocation3 + $0x1c8] sm:$0xff] %vm3243, %v3166
      %3302 = vst.msk [vmem:[#allocation3 + $0x1d0] sm:$0xff] %vm3243, %v3168
      %3303 = vst.msk [vmem:[#allocation3 + $0x1d8] sm:$0xff] %vm3243, %v3170
      %3304 = vst.msk [vmem:[#allocation3 + $0x1e0] sm:$0xff] %vm3243, %v3172
      %3305 = vst.msk [vmem:[#allocation3 + $0x1e8] sm:$0xff] %vm3243, %v3174
      %3306 = vst.msk [vmem:[#allocation3 + $0x1f0] sm:$0xff] %vm3243, %v3176
      %3307 = vst.msk [vmem:[#allocation3 + $0x1f8] sm:$0xff] %vm3243, %v3178
      %s3308 = scalar_lea.vmem [#allocation2], 80
      %v3309 = vld [vmem:[%s3308] sm:$0xff]
      %v3310 = vld [vmem:[%s3308 + $0x8] sm:$0xff]
      %v3311 = vld [vmem:[%s3308 + $0x10] sm:$0xff]
      %v3312 = vld [vmem:[%s3308 + $0x18] sm:$0xff]
      %v3313 = vld [vmem:[%s3308 + $0x28] sm:$0xff]
      %v3314 = vld [vmem:[%s3308 + $0x30] sm:$0xff]
      %v3315 = vld [vmem:[%s3308 + $0x38] sm:$0xff]
      %v3316 = vld [vmem:[%s3308 + $0x40] sm:$0xff]
      %v3317 = vld [vmem:[%s3308 + $0x50] sm:$0xff]
      %v3318 = vld [vmem:[%s3308 + $0x58] sm:$0xff]
      %v3319 = vld [vmem:[%s3308 + $0x60] sm:$0xff]
      %v3320 = vld [vmem:[%s3308 + $0x68] sm:$0xff]
      %v3321 = vld [vmem:[%s3308 + $0x78] sm:$0xff]
      %v3322 = vld [vmem:[%s3308 + $0x80] sm:$0xff]
      %v3323 = vld [vmem:[%s3308 + $0x88] sm:$0xff]
      %v3324 = vld [vmem:[%s3308 + $0x90] sm:$0xff]
      %v3325 = vld [vmem:[%s3308 + $0xa0] sm:$0xff]
      %v3326 = vld [vmem:[%s3308 + $0xa8] sm:$0xff]
      %v3327 = vld [vmem:[%s3308 + $0xb0] sm:$0xff]
      %v3328 = vld [vmem:[%s3308 + $0xb8] sm:$0xff]
      %v3329 = vld [vmem:[%s3308 + $0xc8] sm:$0xff]
      %v3330 = vld [vmem:[%s3308 + $0xd0] sm:$0xff]
      %v3331 = vld [vmem:[%s3308 + $0xd8] sm:$0xff]
      %v3332 = vld [vmem:[%s3308 + $0xe0] sm:$0xff]
      %v3333 = vld [vmem:[%s3308 + $0xf0] sm:$0xff]
      %v3334 = vld [vmem:[%s3308 + $0xf8] sm:$0xff]
      %v3335 = vld [vmem:[%s3308 + $0x100] sm:$0xff]
      %v3336 = vld [vmem:[%s3308 + $0x108] sm:$0xff]
      %v3337 = vld [vmem:[%s3308 + $0x118] sm:$0xff]
      %v3338 = vld [vmem:[%s3308 + $0x120] sm:$0xff]
      %v3339 = vld [vmem:[%s3308 + $0x128] sm:$0xff]
      %v3340 = vld [vmem:[%s3308 + $0x130] sm:$0xff]
      %v3341 = vld [vmem:[%s3308 + $0x140] sm:$0xff]
      %v3342 = vld [vmem:[%s3308 + $0x148] sm:$0xff]
      %v3343 = vld [vmem:[%s3308 + $0x150] sm:$0xff]
      %v3344 = vld [vmem:[%s3308 + $0x158] sm:$0xff]
      %v3345 = vld [vmem:[%s3308 + $0x168] sm:$0xff]
      %v3346 = vld [vmem:[%s3308 + $0x170] sm:$0xff]
      %v3347 = vld [vmem:[%s3308 + $0x178] sm:$0xff]
      %v3348 = vld [vmem:[%s3308 + $0x180] sm:$0xff]
      %v3349 = vld [vmem:[%s3308 + $0x190] sm:$0xff]
      %v3350 = vld [vmem:[%s3308 + $0x198] sm:$0xff]
      %v3351 = vld [vmem:[%s3308 + $0x1a0] sm:$0xff]
      %v3352 = vld [vmem:[%s3308 + $0x1a8] sm:$0xff]
      %v3353 = vld [vmem:[%s3308 + $0x1b8] sm:$0xff]
      %v3354 = vld [vmem:[%s3308 + $0x1c0] sm:$0xff]
      %v3355 = vld [vmem:[%s3308 + $0x1c8] sm:$0xff]
      %v3356 = vld [vmem:[%s3308 + $0x1d0] sm:$0xff]
      %v3357 = vld [vmem:[%s3308 + $0x1e0] sm:$0xff]
      %v3358 = vld [vmem:[%s3308 + $0x1e8] sm:$0xff]
      %v3359 = vld [vmem:[%s3308 + $0x1f0] sm:$0xff]
      %v3360 = vld [vmem:[%s3308 + $0x1f8] sm:$0xff]
      %v3361 = vld [vmem:[%s3308 + $0x208] sm:$0xff]
      %v3362 = vld [vmem:[%s3308 + $0x210] sm:$0xff]
      %v3363 = vld [vmem:[%s3308 + $0x218] sm:$0xff]
      %v3364 = vld [vmem:[%s3308 + $0x220] sm:$0xff]
      %v3365 = vld [vmem:[%s3308 + $0x230] sm:$0xff]
      %v3366 = vld [vmem:[%s3308 + $0x238] sm:$0xff]
      %v3367 = vld [vmem:[%s3308 + $0x240] sm:$0xff]
      %v3368 = vld [vmem:[%s3308 + $0x248] sm:$0xff]
      %v3369 = vld [vmem:[%s3308 + $0x258] sm:$0xff]
      %v3370 = vld [vmem:[%s3308 + $0x260] sm:$0xff]
      %v3371 = vld [vmem:[%s3308 + $0x268] sm:$0xff]
      %v3372 = vld [vmem:[%s3308 + $0x270] sm:$0xff]
      %v3373 = vld [vmem:[%s3308 + $0x280] sm:$0xff]
      %v3374 = vld [vmem:[%s3308 + $0x288] sm:$0xff]
      %v3375 = vld [vmem:[%s3308 + $0x290] sm:$0xff]
      %v3376 = vld [vmem:[%s3308 + $0x298] sm:$0xff]
      %v3377 = vld [vmem:[%s3308 + $0x2a8] sm:$0xff]
      %v3378 = vld [vmem:[%s3308 + $0x2b0] sm:$0xff]
      %v3379 = vld [vmem:[%s3308 + $0x2b8] sm:$0xff]
      %v3380 = vld [vmem:[%s3308 + $0x2c0] sm:$0xff]
      %v3381 = vld [vmem:[%s3308 + $0x2d0] sm:$0xff]
      %v3382 = vld [vmem:[%s3308 + $0x2d8] sm:$0xff]
      %v3383 = vld [vmem:[%s3308 + $0x2e0] sm:$0xff]
      %v3384 = vld [vmem:[%s3308 + $0x2e8] sm:$0xff]
      %v3385 = vld [vmem:[%s3308 + $0x2f8] sm:$0xff]
      %v3386 = vld [vmem:[%s3308 + $0x300] sm:$0xff]
      %v3387 = vld [vmem:[%s3308 + $0x308] sm:$0xff]
      %v3388 = vld [vmem:[%s3308 + $0x310] sm:$0xff]
      %v3389 = vld [vmem:[%s3308 + $0x320] sm:$0xff]
      %v3390 = vld [vmem:[%s3308 + $0x328] sm:$0xff]
      %v3391 = vld [vmem:[%s3308 + $0x330] sm:$0xff]
      %v3392 = vld [vmem:[%s3308 + $0x338] sm:$0xff]
      %v3393 = vld [vmem:[%s3308 + $0x348] sm:$0xff]
      %v3394 = vld [vmem:[%s3308 + $0x350] sm:$0xff]
      %v3395 = vld [vmem:[%s3308 + $0x358] sm:$0xff]
      %v3396 = vld [vmem:[%s3308 + $0x360] sm:$0xff]
      %v3397 = vld [vmem:[%s3308 + $0x370] sm:$0xff]
      %v3398 = vld [vmem:[%s3308 + $0x378] sm:$0xff]
      %v3399 = vld [vmem:[%s3308 + $0x380] sm:$0xff]
      %v3400 = vld [vmem:[%s3308 + $0x388] sm:$0xff]
      %v3401 = vld [vmem:[%s3308 + $0x398] sm:$0xff]
      %v3402 = vld [vmem:[%s3308 + $0x3a0] sm:$0xff]
      %v3403 = vld [vmem:[%s3308 + $0x3a8] sm:$0xff]
      %v3404 = vld [vmem:[%s3308 + $0x3b0] sm:$0xff]
      %v3405 = vld [vmem:[%s3308 + $0x3c0] sm:$0xff]
      %v3406 = vld [vmem:[%s3308 + $0x3c8] sm:$0xff]
      %v3407 = vld [vmem:[%s3308 + $0x3d0] sm:$0xff]
      %v3408 = vld [vmem:[%s3308 + $0x3d8] sm:$0xff]
      %v3409 = vld [vmem:[%s3308 + $0x3e8] sm:$0xff]
      %v3410 = vld [vmem:[%s3308 + $0x3f0] sm:$0xff]
      %v3411 = vld [vmem:[%s3308 + $0x3f8] sm:$0xff]
      %v3412 = vld [vmem:[%s3308 + $0x400] sm:$0xff]
      %v3413 = vld [vmem:[%s3308 + $0x410] sm:$0xff]
      %v3414 = vld [vmem:[%s3308 + $0x418] sm:$0xff]
      %v3415 = vld [vmem:[%s3308 + $0x420] sm:$0xff]
      %v3416 = vld [vmem:[%s3308 + $0x428] sm:$0xff]
      %v3417 = vld [vmem:[%s3308 + $0x438] sm:$0xff]
      %v3418 = vld [vmem:[%s3308 + $0x440] sm:$0xff]
      %v3419 = vld [vmem:[%s3308 + $0x448] sm:$0xff]
      %v3420 = vld [vmem:[%s3308 + $0x450] sm:$0xff]
      %v3421 = vld [vmem:[%s3308 + $0x460] sm:$0xff]
      %v3422 = vld [vmem:[%s3308 + $0x468] sm:$0xff]
      %v3423 = vld [vmem:[%s3308 + $0x470] sm:$0xff]
      %v3424 = vld [vmem:[%s3308 + $0x478] sm:$0xff]
      %v3425 = vld [vmem:[%s3308 + $0x488] sm:$0xff]
      %v3426 = vld [vmem:[%s3308 + $0x490] sm:$0xff]
      %v3427 = vld [vmem:[%s3308 + $0x498] sm:$0xff]
      %v3428 = vld [vmem:[%s3308 + $0x4a0] sm:$0xff]
      %v3429 = vld [vmem:[%s3308 + $0x4b0] sm:$0xff]
      %v3430 = vld [vmem:[%s3308 + $0x4b8] sm:$0xff]
      %v3431 = vld [vmem:[%s3308 + $0x4c0] sm:$0xff]
      %v3432 = vld [vmem:[%s3308 + $0x4c8] sm:$0xff]
      %v3433 = vld [vmem:[%s3308 + $0x4d8] sm:$0xff]
      %v3434 = vld [vmem:[%s3308 + $0x4e0] sm:$0xff]
      %v3435 = vld [vmem:[%s3308 + $0x4e8] sm:$0xff]
      %v3436 = vld [vmem:[%s3308 + $0x4f0] sm:$0xff]
      %v3437 = vpack.c.bf16 %v3310, %v3309
      %v3438 = vpack.c.bf16 %v3312, %v3311
      %v3439 = vpack.c.bf16 %v3314, %v3313
      %v3440 = vpack.c.bf16 %v3316, %v3315
      %v3441 = vpack.c.bf16 %v3318, %v3317
      %v3442 = vpack.c.bf16 %v3320, %v3319
      %v3443 = vpack.c.bf16 %v3322, %v3321
      %v3444 = vpack.c.bf16 %v3324, %v3323
      %v3445 = vpack.c.bf16 %v3326, %v3325
      %v3446 = vpack.c.bf16 %v3328, %v3327
      %v3447 = vpack.c.bf16 %v3330, %v3329
      %v3448 = vpack.c.bf16 %v3332, %v3331
      %v3449 = vpack.c.bf16 %v3334, %v3333
      %v3450 = vpack.c.bf16 %v3336, %v3335
      %v3451 = vpack.c.bf16 %v3338, %v3337
      %v3452 = vpack.c.bf16 %v3340, %v3339
      %v3453 = vpack.c.bf16 %v3342, %v3341
      %v3454 = vpack.c.bf16 %v3344, %v3343
      %v3455 = vpack.c.bf16 %v3346, %v3345
      %v3456 = vpack.c.bf16 %v3348, %v3347
      %v3457 = vpack.c.bf16 %v3350, %v3349
      %v3458 = vpack.c.bf16 %v3352, %v3351
      %v3459 = vpack.c.bf16 %v3354, %v3353
      %v3460 = vpack.c.bf16 %v3356, %v3355
      %v3461 = vpack.c.bf16 %v3358, %v3357
      %v3462 = vpack.c.bf16 %v3360, %v3359
      %v3463 = vpack.c.bf16 %v3362, %v3361
      %v3464 = vpack.c.bf16 %v3364, %v3363
      %v3465 = vpack.c.bf16 %v3366, %v3365
      %v3466 = vpack.c.bf16 %v3368, %v3367
      %v3467 = vpack.c.bf16 %v3370, %v3369
      %v3468 = vpack.c.bf16 %v3372, %v3371
      %v3469 = vpack.c.bf16 %v3374, %v3373
      %v3470 = vpack.c.bf16 %v3376, %v3375
      %v3471 = vpack.c.bf16 %v3378, %v3377
      %v3472 = vpack.c.bf16 %v3380, %v3379
      %v3473 = vpack.c.bf16 %v3382, %v3381
      %v3474 = vpack.c.bf16 %v3384, %v3383
      %v3475 = vpack.c.bf16 %v3386, %v3385
      %v3476 = vpack.c.bf16 %v3388, %v3387
      %v3477 = vpack.c.bf16 %v3390, %v3389
      %v3478 = vpack.c.bf16 %v3392, %v3391
      %v3479 = vpack.c.bf16 %v3394, %v3393
      %v3480 = vpack.c.bf16 %v3396, %v3395
      %v3481 = vpack.c.bf16 %v3398, %v3397
      %v3482 = vpack.c.bf16 %v3400, %v3399
      %v3483 = vpack.c.bf16 %v3402, %v3401
      %v3484 = vpack.c.bf16 %v3404, %v3403
      %v3485 = vpack.c.bf16 %v3406, %v3405
      %v3486 = vpack.c.bf16 %v3408, %v3407
      %v3487 = vpack.c.bf16 %v3410, %v3409
      %v3488 = vpack.c.bf16 %v3412, %v3411
      %v3489 = vpack.c.bf16 %v3414, %v3413
      %v3490 = vpack.c.bf16 %v3416, %v3415
      %v3491 = vpack.c.bf16 %v3418, %v3417
      %v3492 = vpack.c.bf16 %v3420, %v3419
      %v3493 = vpack.c.bf16 %v3422, %v3421
      %v3494 = vpack.c.bf16 %v3424, %v3423
      %v3495 = vpack.c.bf16 %v3426, %v3425
      %v3496 = vpack.c.bf16 %v3428, %v3427
      %v3497 = vpack.c.bf16 %v3430, %v3429
      %v3498 = vpack.c.bf16 %v3432, %v3431
      %v3499 = vpack.c.bf16 %v3434, %v3433
      %v3500 = vpack.c.bf16 %v3436, %v3435
      %3565 = vrot.lane.b32.xlu0 %v3437, 36
      %v3566 = vpop.permute.xlu0 %3565
      %3567 = vrot.lane.b32.xlu0 %v3438, 36
      %v3568 = vpop.permute.xlu0 %3567
      %3569 = vrot.lane.b32.xlu0 %v3439, 36
      %v3570 = vpop.permute.xlu0 %3569
      %3571 = vrot.lane.b32.xlu0 %v3440, 36
      %v3572 = vpop.permute.xlu0 %3571
      %3573 = vrot.lane.b32.xlu0 %v3441, 36
      %v3574 = vpop.permute.xlu0 %3573
      %3575 = vrot.lane.b32.xlu0 %v3442, 36
      %v3576 = vpop.permute.xlu0 %3575
      %3577 = vrot.lane.b32.xlu0 %v3443, 36
      %v3578 = vpop.permute.xlu0 %3577
      %3579 = vrot.lane.b32.xlu0 %v3444, 36
      %v3580 = vpop.permute.xlu0 %3579
      %3581 = vrot.lane.b32.xlu0 %v3445, 36
      %v3582 = vpop.permute.xlu0 %3581
      %3583 = vrot.lane.b32.xlu0 %v3446, 36
      %v3584 = vpop.permute.xlu0 %3583
      %3585 = vrot.lane.b32.xlu0 %v3447, 36
      %v3586 = vpop.permute.xlu0 %3585
      %3587 = vrot.lane.b32.xlu0 %v3448, 36
      %v3588 = vpop.permute.xlu0 %3587
      %3589 = vrot.lane.b32.xlu0 %v3449, 36
      %v3590 = vpop.permute.xlu0 %3589
      %3591 = vrot.lane.b32.xlu0 %v3450, 36
      %v3592 = vpop.permute.xlu0 %3591
      %3593 = vrot.lane.b32.xlu0 %v3451, 36
      %v3594 = vpop.permute.xlu0 %3593
      %3595 = vrot.lane.b32.xlu0 %v3452, 36
      %v3596 = vpop.permute.xlu0 %3595
      %3597 = vrot.lane.b32.xlu0 %v3453, 36
      %v3598 = vpop.permute.xlu0 %3597
      %3599 = vrot.lane.b32.xlu0 %v3454, 36
      %v3600 = vpop.permute.xlu0 %3599
      %3601 = vrot.lane.b32.xlu0 %v3455, 36
      %v3602 = vpop.permute.xlu0 %3601
      %3603 = vrot.lane.b32.xlu0 %v3456, 36
      %v3604 = vpop.permute.xlu0 %3603
      %3605 = vrot.lane.b32.xlu0 %v3457, 36
      %v3606 = vpop.permute.xlu0 %3605
      %3607 = vrot.lane.b32.xlu0 %v3458, 36
      %v3608 = vpop.permute.xlu0 %3607
      %3609 = vrot.lane.b32.xlu0 %v3459, 36
      %v3610 = vpop.permute.xlu0 %3609
      %3611 = vrot.lane.b32.xlu0 %v3460, 36
      %v3612 = vpop.permute.xlu0 %3611
      %3613 = vrot.lane.b32.xlu0 %v3461, 36
      %v3614 = vpop.permute.xlu0 %3613
      %3615 = vrot.lane.b32.xlu0 %v3462, 36
      %v3616 = vpop.permute.xlu0 %3615
      %3617 = vrot.lane.b32.xlu0 %v3463, 36
      %v3618 = vpop.permute.xlu0 %3617
      %3619 = vrot.lane.b32.xlu0 %v3464, 36
      %v3620 = vpop.permute.xlu0 %3619
      %3621 = vrot.lane.b32.xlu0 %v3465, 36
      %v3622 = vpop.permute.xlu0 %3621
      %3623 = vrot.lane.b32.xlu0 %v3466, 36
      %v3624 = vpop.permute.xlu0 %3623
      %3625 = vrot.lane.b32.xlu0 %v3467, 36
      %v3626 = vpop.permute.xlu0 %3625
      %3627 = vrot.lane.b32.xlu0 %v3468, 36
      %v3628 = vpop.permute.xlu0 %3627
      %3629 = vrot.lane.b32.xlu0 %v3469, 36
      %v3630 = vpop.permute.xlu0 %3629
      %3631 = vrot.lane.b32.xlu0 %v3470, 36
      %v3632 = vpop.permute.xlu0 %3631
      %3633 = vrot.lane.b32.xlu0 %v3471, 36
      %v3634 = vpop.permute.xlu0 %3633
      %3635 = vrot.lane.b32.xlu0 %v3472, 36
      %v3636 = vpop.permute.xlu0 %3635
      %3637 = vrot.lane.b32.xlu0 %v3473, 36
      %v3638 = vpop.permute.xlu0 %3637
      %3639 = vrot.lane.b32.xlu0 %v3474, 36
      %v3640 = vpop.permute.xlu0 %3639
      %3641 = vrot.lane.b32.xlu0 %v3475, 36
      %v3642 = vpop.permute.xlu0 %3641
      %3643 = vrot.lane.b32.xlu0 %v3476, 36
      %v3644 = vpop.permute.xlu0 %3643
      %3645 = vrot.lane.b32.xlu0 %v3477, 36
      %v3646 = vpop.permute.xlu0 %3645
      %3647 = vrot.lane.b32.xlu0 %v3478, 36
      %v3648 = vpop.permute.xlu0 %3647
      %3649 = vrot.lane.b32.xlu0 %v3479, 36
      %v3650 = vpop.permute.xlu0 %3649
      %3651 = vrot.lane.b32.xlu0 %v3480, 36
      %v3652 = vpop.permute.xlu0 %3651
      %3653 = vrot.lane.b32.xlu0 %v3481, 36
      %v3654 = vpop.permute.xlu0 %3653
      %3655 = vrot.lane.b32.xlu0 %v3482, 36
      %v3656 = vpop.permute.xlu0 %3655
      %3657 = vrot.lane.b32.xlu0 %v3483, 36
      %v3658 = vpop.permute.xlu0 %3657
      %3659 = vrot.lane.b32.xlu0 %v3484, 36
      %v3660 = vpop.permute.xlu0 %3659
      %3661 = vrot.lane.b32.xlu0 %v3485, 36
      %v3662 = vpop.permute.xlu0 %3661
      %3663 = vrot.lane.b32.xlu0 %v3486, 36
      %v3664 = vpop.permute.xlu0 %3663
      %3665 = vrot.lane.b32.xlu0 %v3487, 36
      %v3666 = vpop.permute.xlu0 %3665
      %3667 = vrot.lane.b32.xlu0 %v3488, 36
      %v3668 = vpop.permute.xlu0 %3667
      %3669 = vrot.lane.b32.xlu0 %v3489, 36
      %v3670 = vpop.permute.xlu0 %3669
      %3671 = vrot.lane.b32.xlu0 %v3490, 36
      %v3672 = vpop.permute.xlu0 %3671
      %3673 = vrot.lane.b32.xlu0 %v3491, 36
      %v3674 = vpop.permute.xlu0 %3673
      %3675 = vrot.lane.b32.xlu0 %v3492, 36
      %v3676 = vpop.permute.xlu0 %3675
      %3677 = vrot.lane.b32.xlu0 %v3493, 36
      %v3678 = vpop.permute.xlu0 %3677
      %3679 = vrot.lane.b32.xlu0 %v3494, 36
      %v3680 = vpop.permute.xlu0 %3679
      %3681 = vrot.lane.b32.xlu0 %v3495, 36
      %v3682 = vpop.permute.xlu0 %3681
      %3683 = vrot.lane.b32.xlu0 %v3496, 36
      %v3684 = vpop.permute.xlu0 %3683
      %3685 = vrot.lane.b32.xlu0 %v3497, 36
      %v3686 = vpop.permute.xlu0 %3685
      %3687 = vrot.lane.b32.xlu0 %v3498, 36
      %v3688 = vpop.permute.xlu0 %3687
      %3689 = vrot.lane.b32.xlu0 %v3499, 36
      %v3690 = vpop.permute.xlu0 %3689
      %3691 = vrot.lane.b32.xlu0 %v3500, 36
      %v3692 = vpop.permute.xlu0 %3691
      %vm3757 = vcmask 343328
      %3758 = vst.msk [vmem:[#allocation3] sm:$0xff] %vm3757, %v3566
      %3759 = vst.msk [vmem:[#allocation3 + $0x8] sm:$0xff] %vm3757, %v3568
      %3760 = vst.msk [vmem:[#allocation3 + $0x10] sm:$0xff] %vm3757, %v3570
      %3761 = vst.msk [vmem:[#allocation3 + $0x18] sm:$0xff] %vm3757, %v3572
      %3762 = vst.msk [vmem:[#allocation3 + $0x20] sm:$0xff] %vm3757, %v3574
      %3763 = vst.msk [vmem:[#allocation3 + $0x28] sm:$0xff] %vm3757, %v3576
      %3764 = vst.msk [vmem:[#allocation3 + $0x30] sm:$0xff] %vm3757, %v3578
      %3765 = vst.msk [vmem:[#allocation3 + $0x38] sm:$0xff] %vm3757, %v3580
      %3766 = vst.msk [vmem:[#allocation3 + $0x40] sm:$0xff] %vm3757, %v3582
      %3767 = vst.msk [vmem:[#allocation3 + $0x48] sm:$0xff] %vm3757, %v3584
      %3768 = vst.msk [vmem:[#allocation3 + $0x50] sm:$0xff] %vm3757, %v3586
      %3769 = vst.msk [vmem:[#allocation3 + $0x58] sm:$0xff] %vm3757, %v3588
      %3770 = vst.msk [vmem:[#allocation3 + $0x60] sm:$0xff] %vm3757, %v3590
      %3771 = vst.msk [vmem:[#allocation3 + $0x68] sm:$0xff] %vm3757, %v3592
      %3772 = vst.msk [vmem:[#allocation3 + $0x70] sm:$0xff] %vm3757, %v3594
      %3773 = vst.msk [vmem:[#allocation3 + $0x78] sm:$0xff] %vm3757, %v3596
      %3774 = vst.msk [vmem:[#allocation3 + $0x80] sm:$0xff] %vm3757, %v3598
      %3775 = vst.msk [vmem:[#allocation3 + $0x88] sm:$0xff] %vm3757, %v3600
      %3776 = vst.msk [vmem:[#allocation3 + $0x90] sm:$0xff] %vm3757, %v3602
      %3777 = vst.msk [vmem:[#allocation3 + $0x98] sm:$0xff] %vm3757, %v3604
      %3778 = vst.msk [vmem:[#allocation3 + $0xa0] sm:$0xff] %vm3757, %v3606
      %3779 = vst.msk [vmem:[#allocation3 + $0xa8] sm:$0xff] %vm3757, %v3608
      %3780 = vst.msk [vmem:[#allocation3 + $0xb0] sm:$0xff] %vm3757, %v3610
      %3781 = vst.msk [vmem:[#allocation3 + $0xb8] sm:$0xff] %vm3757, %v3612
      %3782 = vst.msk [vmem:[#allocation3 + $0xc0] sm:$0xff] %vm3757, %v3614
      %3783 = vst.msk [vmem:[#allocation3 + $0xc8] sm:$0xff] %vm3757, %v3616
      %3784 = vst.msk [vmem:[#allocation3 + $0xd0] sm:$0xff] %vm3757, %v3618
      %3785 = vst.msk [vmem:[#allocation3 + $0xd8] sm:$0xff] %vm3757, %v3620
      %3786 = vst.msk [vmem:[#allocation3 + $0xe0] sm:$0xff] %vm3757, %v3622
      %3787 = vst.msk [vmem:[#allocation3 + $0xe8] sm:$0xff] %vm3757, %v3624
      %3788 = vst.msk [vmem:[#allocation3 + $0xf0] sm:$0xff] %vm3757, %v3626
      %3789 = vst.msk [vmem:[#allocation3 + $0xf8] sm:$0xff] %vm3757, %v3628
      %3790 = vst.msk [vmem:[#allocation3 + $0x100] sm:$0xff] %vm3757, %v3630
      %3791 = vst.msk [vmem:[#allocation3 + $0x108] sm:$0xff] %vm3757, %v3632
      %3792 = vst.msk [vmem:[#allocation3 + $0x110] sm:$0xff] %vm3757, %v3634
      %3793 = vst.msk [vmem:[#allocation3 + $0x118] sm:$0xff] %vm3757, %v3636
      %3794 = vst.msk [vmem:[#allocation3 + $0x120] sm:$0xff] %vm3757, %v3638
      %3795 = vst.msk [vmem:[#allocation3 + $0x128] sm:$0xff] %vm3757, %v3640
      %3796 = vst.msk [vmem:[#allocation3 + $0x130] sm:$0xff] %vm3757, %v3642
      %3797 = vst.msk [vmem:[#allocation3 + $0x138] sm:$0xff] %vm3757, %v3644
      %3798 = vst.msk [vmem:[#allocation3 + $0x140] sm:$0xff] %vm3757, %v3646
      %3799 = vst.msk [vmem:[#allocation3 + $0x148] sm:$0xff] %vm3757, %v3648
      %3800 = vst.msk [vmem:[#allocation3 + $0x150] sm:$0xff] %vm3757, %v3650
      %3801 = vst.msk [vmem:[#allocation3 + $0x158] sm:$0xff] %vm3757, %v3652
      %3802 = vst.msk [vmem:[#allocation3 + $0x160] sm:$0xff] %vm3757, %v3654
      %3803 = vst.msk [vmem:[#allocation3 + $0x168] sm:$0xff] %vm3757, %v3656
      %3804 = vst.msk [vmem:[#allocation3 + $0x170] sm:$0xff] %vm3757, %v3658
      %3805 = vst.msk [vmem:[#allocation3 + $0x178] sm:$0xff] %vm3757, %v3660
      %3806 = vst.msk [vmem:[#allocation3 + $0x180] sm:$0xff] %vm3757, %v3662
      %3807 = vst.msk [vmem:[#allocation3 + $0x188] sm:$0xff] %vm3757, %v3664
      %3808 = vst.msk [vmem:[#allocation3 + $0x190] sm:$0xff] %vm3757, %v3666
      %3809 = vst.msk [vmem:[#allocation3 + $0x198] sm:$0xff] %vm3757, %v3668
      %3810 = vst.msk [vmem:[#allocation3 + $0x1a0] sm:$0xff] %vm3757, %v3670
      %3811 = vst.msk [vmem:[#allocation3 + $0x1a8] sm:$0xff] %vm3757, %v3672
      %3812 = vst.msk [vmem:[#allocation3 + $0x1b0] sm:$0xff] %vm3757, %v3674
      %3813 = vst.msk [vmem:[#allocation3 + $0x1b8] sm:$0xff] %vm3757, %v3676
      %3814 = vst.msk [vmem:[#allocation3 + $0x1c0] sm:$0xff] %vm3757, %v3678
      %3815 = vst.msk [vmem:[#allocation3 + $0x1c8] sm:$0xff] %vm3757, %v3680
      %3816 = vst.msk [vmem:[#allocation3 + $0x1d0] sm:$0xff] %vm3757, %v3682
      %3817 = vst.msk [vmem:[#allocation3 + $0x1d8] sm:$0xff] %vm3757, %v3684
      %3818 = vst.msk [vmem:[#allocation3 + $0x1e0] sm:$0xff] %vm3757, %v3686
      %3819 = vst.msk [vmem:[#allocation3 + $0x1e8] sm:$0xff] %vm3757, %v3688
      %3820 = vst.msk [vmem:[#allocation3 + $0x1f0] sm:$0xff] %vm3757, %v3690
      %3821 = vst.msk [vmem:[#allocation3 + $0x1f8] sm:$0xff] %vm3757, %v3692
      %v3822 = vld [vmem:[%s3308 + $0x1] sm:$0xff]
      %v3823 = vld [vmem:[%s3308 + $0x9] sm:$0xff]
      %v3824 = vld [vmem:[%s3308 + $0x11] sm:$0xff]
      %v3825 = vld [vmem:[%s3308 + $0x19] sm:$0xff]
      %v3826 = vld [vmem:[%s3308 + $0x29] sm:$0xff]
      %v3827 = vld [vmem:[%s3308 + $0x31] sm:$0xff]
      %v3828 = vld [vmem:[%s3308 + $0x39] sm:$0xff]
      %v3829 = vld [vmem:[%s3308 + $0x41] sm:$0xff]
      %v3830 = vld [vmem:[%s3308 + $0x51] sm:$0xff]
      %v3831 = vld [vmem:[%s3308 + $0x59] sm:$0xff]
      %v3832 = vld [vmem:[%s3308 + $0x61] sm:$0xff]
      %v3833 = vld [vmem:[%s3308 + $0x69] sm:$0xff]
      %v3834 = vld [vmem:[%s3308 + $0x79] sm:$0xff]
      %v3835 = vld [vmem:[%s3308 + $0x81] sm:$0xff]
      %v3836 = vld [vmem:[%s3308 + $0x89] sm:$0xff]
      %v3837 = vld [vmem:[%s3308 + $0x91] sm:$0xff]
      %v3838 = vld [vmem:[%s3308 + $0xa1] sm:$0xff]
      %v3839 = vld [vmem:[%s3308 + $0xa9] sm:$0xff]
      %v3840 = vld [vmem:[%s3308 + $0xb1] sm:$0xff]
      %v3841 = vld [vmem:[%s3308 + $0xb9] sm:$0xff]
      %v3842 = vld [vmem:[%s3308 + $0xc9] sm:$0xff]
      %v3843 = vld [vmem:[%s3308 + $0xd1] sm:$0xff]
      %v3844 = vld [vmem:[%s3308 + $0xd9] sm:$0xff]
      %v3845 = vld [vmem:[%s3308 + $0xe1] sm:$0xff]
      %v3846 = vld [vmem:[%s3308 + $0xf1] sm:$0xff]
      %v3847 = vld [vmem:[%s3308 + $0xf9] sm:$0xff]
      %v3848 = vld [vmem:[%s3308 + $0x101] sm:$0xff]
      %v3849 = vld [vmem:[%s3308 + $0x109] sm:$0xff]
      %v3850 = vld [vmem:[%s3308 + $0x119] sm:$0xff]
      %v3851 = vld [vmem:[%s3308 + $0x121] sm:$0xff]
      %v3852 = vld [vmem:[%s3308 + $0x129] sm:$0xff]
      %v3853 = vld [vmem:[%s3308 + $0x131] sm:$0xff]
      %v3854 = vld [vmem:[%s3308 + $0x141] sm:$0xff]
      %v3855 = vld [vmem:[%s3308 + $0x149] sm:$0xff]
      %v3856 = vld [vmem:[%s3308 + $0x151] sm:$0xff]
      %v3857 = vld [vmem:[%s3308 + $0x159] sm:$0xff]
      %v3858 = vld [vmem:[%s3308 + $0x169] sm:$0xff]
      %v3859 = vld [vmem:[%s3308 + $0x171] sm:$0xff]
      %v3860 = vld [vmem:[%s3308 + $0x179] sm:$0xff]
      %v3861 = vld [vmem:[%s3308 + $0x181] sm:$0xff]
      %v3862 = vld [vmem:[%s3308 + $0x191] sm:$0xff]
      %v3863 = vld [vmem:[%s3308 + $0x199] sm:$0xff]
      %v3864 = vld [vmem:[%s3308 + $0x1a1] sm:$0xff]
      %v3865 = vld [vmem:[%s3308 + $0x1a9] sm:$0xff]
      %v3866 = vld [vmem:[%s3308 + $0x1b9] sm:$0xff]
      %v3867 = vld [vmem:[%s3308 + $0x1c1] sm:$0xff]
      %v3868 = vld [vmem:[%s3308 + $0x1c9] sm:$0xff]
      %v3869 = vld [vmem:[%s3308 + $0x1d1] sm:$0xff]
      %v3870 = vld [vmem:[%s3308 + $0x1e1] sm:$0xff]
      %v3871 = vld [vmem:[%s3308 + $0x1e9] sm:$0xff]
      %v3872 = vld [vmem:[%s3308 + $0x1f1] sm:$0xff]
      %v3873 = vld [vmem:[%s3308 + $0x1f9] sm:$0xff]
      %v3874 = vld [vmem:[%s3308 + $0x209] sm:$0xff]
      %v3875 = vld [vmem:[%s3308 + $0x211] sm:$0xff]
      %v3876 = vld [vmem:[%s3308 + $0x219] sm:$0xff]
      %v3877 = vld [vmem:[%s3308 + $0x221] sm:$0xff]
      %v3878 = vld [vmem:[%s3308 + $0x231] sm:$0xff]
      %v3879 = vld [vmem:[%s3308 + $0x239] sm:$0xff]
      %v3880 = vld [vmem:[%s3308 + $0x241] sm:$0xff]
      %v3881 = vld [vmem:[%s3308 + $0x249] sm:$0xff]
      %v3882 = vld [vmem:[%s3308 + $0x259] sm:$0xff]
      %v3883 = vld [vmem:[%s3308 + $0x261] sm:$0xff]
      %v3884 = vld [vmem:[%s3308 + $0x269] sm:$0xff]
      %v3885 = vld [vmem:[%s3308 + $0x271] sm:$0xff]
      %v3886 = vld [vmem:[%s3308 + $0x281] sm:$0xff]
      %v3887 = vld [vmem:[%s3308 + $0x289] sm:$0xff]
      %v3888 = vld [vmem:[%s3308 + $0x291] sm:$0xff]
      %v3889 = vld [vmem:[%s3308 + $0x299] sm:$0xff]
      %v3890 = vld [vmem:[%s3308 + $0x2a9] sm:$0xff]
      %v3891 = vld [vmem:[%s3308 + $0x2b1] sm:$0xff]
      %v3892 = vld [vmem:[%s3308 + $0x2b9] sm:$0xff]
      %v3893 = vld [vmem:[%s3308 + $0x2c1] sm:$0xff]
      %v3894 = vld [vmem:[%s3308 + $0x2d1] sm:$0xff]
      %v3895 = vld [vmem:[%s3308 + $0x2d9] sm:$0xff]
      %v3896 = vld [vmem:[%s3308 + $0x2e1] sm:$0xff]
      %v3897 = vld [vmem:[%s3308 + $0x2e9] sm:$0xff]
      %v3898 = vld [vmem:[%s3308 + $0x2f9] sm:$0xff]
      %v3899 = vld [vmem:[%s3308 + $0x301] sm:$0xff]
      %v3900 = vld [vmem:[%s3308 + $0x309] sm:$0xff]
      %v3901 = vld [vmem:[%s3308 + $0x311] sm:$0xff]
      %v3902 = vld [vmem:[%s3308 + $0x321] sm:$0xff]
      %v3903 = vld [vmem:[%s3308 + $0x329] sm:$0xff]
      %v3904 = vld [vmem:[%s3308 + $0x331] sm:$0xff]
      %v3905 = vld [vmem:[%s3308 + $0x339] sm:$0xff]
      %v3906 = vld [vmem:[%s3308 + $0x349] sm:$0xff]
      %v3907 = vld [vmem:[%s3308 + $0x351] sm:$0xff]
      %v3908 = vld [vmem:[%s3308 + $0x359] sm:$0xff]
      %v3909 = vld [vmem:[%s3308 + $0x361] sm:$0xff]
      %v3910 = vld [vmem:[%s3308 + $0x371] sm:$0xff]
      %v3911 = vld [vmem:[%s3308 + $0x379] sm:$0xff]
      %v3912 = vld [vmem:[%s3308 + $0x381] sm:$0xff]
      %v3913 = vld [vmem:[%s3308 + $0x389] sm:$0xff]
      %v3914 = vld [vmem:[%s3308 + $0x399] sm:$0xff]
      %v3915 = vld [vmem:[%s3308 + $0x3a1] sm:$0xff]
      %v3916 = vld [vmem:[%s3308 + $0x3a9] sm:$0xff]
      %v3917 = vld [vmem:[%s3308 + $0x3b1] sm:$0xff]
      %v3918 = vld [vmem:[%s3308 + $0x3c1] sm:$0xff]
      %v3919 = vld [vmem:[%s3308 + $0x3c9] sm:$0xff]
      %v3920 = vld [vmem:[%s3308 + $0x3d1] sm:$0xff]
      %v3921 = vld [vmem:[%s3308 + $0x3d9] sm:$0xff]
      %v3922 = vld [vmem:[%s3308 + $0x3e9] sm:$0xff]
      %v3923 = vld [vmem:[%s3308 + $0x3f1] sm:$0xff]
      %v3924 = vld [vmem:[%s3308 + $0x3f9] sm:$0xff]
      %v3925 = vld [vmem:[%s3308 + $0x401] sm:$0xff]
      %v3926 = vld [vmem:[%s3308 + $0x411] sm:$0xff]
      %v3927 = vld [vmem:[%s3308 + $0x419] sm:$0xff]
      %v3928 = vld [vmem:[%s3308 + $0x421] sm:$0xff]
      %v3929 = vld [vmem:[%s3308 + $0x429] sm:$0xff]
      %v3930 = vld [vmem:[%s3308 + $0x439] sm:$0xff]
      %v3931 = vld [vmem:[%s3308 + $0x441] sm:$0xff]
      %v3932 = vld [vmem:[%s3308 + $0x449] sm:$0xff]
      %v3933 = vld [vmem:[%s3308 + $0x451] sm:$0xff]
      %v3934 = vld [vmem:[%s3308 + $0x461] sm:$0xff]
      %v3935 = vld [vmem:[%s3308 + $0x469] sm:$0xff]
      %v3936 = vld [vmem:[%s3308 + $0x471] sm:$0xff]
      %v3937 = vld [vmem:[%s3308 + $0x479] sm:$0xff]
      %v3938 = vld [vmem:[%s3308 + $0x489] sm:$0xff]
      %v3939 = vld [vmem:[%s3308 + $0x491] sm:$0xff]
      %v3940 = vld [vmem:[%s3308 + $0x499] sm:$0xff]
      %v3941 = vld [vmem:[%s3308 + $0x4a1] sm:$0xff]
      %v3942 = vld [vmem:[%s3308 + $0x4b1] sm:$0xff]
      %v3943 = vld [vmem:[%s3308 + $0x4b9] sm:$0xff]
      %v3944 = vld [vmem:[%s3308 + $0x4c1] sm:$0xff]
      %v3945 = vld [vmem:[%s3308 + $0x4c9] sm:$0xff]
      %v3946 = vld [vmem:[%s3308 + $0x4d9] sm:$0xff]
      %v3947 = vld [vmem:[%s3308 + $0x4e1] sm:$0xff]
      %v3948 = vld [vmem:[%s3308 + $0x4e9] sm:$0xff]
      %v3949 = vld [vmem:[%s3308 + $0x4f1] sm:$0xff]
      %v3950 = vpack.c.bf16 %v3823, %v3822
      %v3951 = vpack.c.bf16 %v3825, %v3824
      %v3952 = vpack.c.bf16 %v3827, %v3826
      %v3953 = vpack.c.bf16 %v3829, %v3828
      %v3954 = vpack.c.bf16 %v3831, %v3830
      %v3955 = vpack.c.bf16 %v3833, %v3832
      %v3956 = vpack.c.bf16 %v3835, %v3834
      %v3957 = vpack.c.bf16 %v3837, %v3836
      %v3958 = vpack.c.bf16 %v3839, %v3838
      %v3959 = vpack.c.bf16 %v3841, %v3840
      %v3960 = vpack.c.bf16 %v3843, %v3842
      %v3961 = vpack.c.bf16 %v3845, %v3844
      %v3962 = vpack.c.bf16 %v3847, %v3846
      %v3963 = vpack.c.bf16 %v3849, %v3848
      %v3964 = vpack.c.bf16 %v3851, %v3850
      %v3965 = vpack.c.bf16 %v3853, %v3852
      %v3966 = vpack.c.bf16 %v3855, %v3854
      %v3967 = vpack.c.bf16 %v3857, %v3856
      %v3968 = vpack.c.bf16 %v3859, %v3858
      %v3969 = vpack.c.bf16 %v3861, %v3860
      %v3970 = vpack.c.bf16 %v3863, %v3862
      %v3971 = vpack.c.bf16 %v3865, %v3864
      %v3972 = vpack.c.bf16 %v3867, %v3866
      %v3973 = vpack.c.bf16 %v3869, %v3868
      %v3974 = vpack.c.bf16 %v3871, %v3870
      %v3975 = vpack.c.bf16 %v3873, %v3872
      %v3976 = vpack.c.bf16 %v3875, %v3874
      %v3977 = vpack.c.bf16 %v3877, %v3876
      %v3978 = vpack.c.bf16 %v3879, %v3878
      %v3979 = vpack.c.bf16 %v3881, %v3880
      %v3980 = vpack.c.bf16 %v3883, %v3882
      %v3981 = vpack.c.bf16 %v3885, %v3884
      %v3982 = vpack.c.bf16 %v3887, %v3886
      %v3983 = vpack.c.bf16 %v3889, %v3888
      %v3984 = vpack.c.bf16 %v3891, %v3890
      %v3985 = vpack.c.bf16 %v3893, %v3892
      %v3986 = vpack.c.bf16 %v3895, %v3894
      %v3987 = vpack.c.bf16 %v3897, %v3896
      %v3988 = vpack.c.bf16 %v3899, %v3898
      %v3989 = vpack.c.bf16 %v3901, %v3900
      %v3990 = vpack.c.bf16 %v3903, %v3902
      %v3991 = vpack.c.bf16 %v3905, %v3904
      %v3992 = vpack.c.bf16 %v3907, %v3906
      %v3993 = vpack.c.bf16 %v3909, %v3908
      %v3994 = vpack.c.bf16 %v3911, %v3910
      %v3995 = vpack.c.bf16 %v3913, %v3912
      %v3996 = vpack.c.bf16 %v3915, %v3914
      %v3997 = vpack.c.bf16 %v3917, %v3916
      %v3998 = vpack.c.bf16 %v3919, %v3918
      %v3999 = vpack.c.bf16 %v3921, %v3920
      %v4000 = vpack.c.bf16 %v3923, %v3922
      %v4001 = vpack.c.bf16 %v3925, %v3924
      %v4002 = vpack.c.bf16 %v3927, %v3926
      %v4003 = vpack.c.bf16 %v3929, %v3928
      %v4004 = vpack.c.bf16 %v3931, %v3930
      %v4005 = vpack.c.bf16 %v3933, %v3932
      %v4006 = vpack.c.bf16 %v3935, %v3934
      %v4007 = vpack.c.bf16 %v3937, %v3936
      %v4008 = vpack.c.bf16 %v3939, %v3938
      %v4009 = vpack.c.bf16 %v3941, %v3940
      %v4010 = vpack.c.bf16 %v3943, %v3942
      %v4011 = vpack.c.bf16 %v3945, %v3944
      %v4012 = vpack.c.bf16 %v3947, %v3946
      %v4013 = vpack.c.bf16 %v3949, %v3948
      %4078 = vrot.lane.b32.xlu0 %v3950, 42
      %v4079 = vpop.permute.xlu0 %4078
      %4080 = vrot.lane.b32.xlu0 %v3951, 42
      %v4081 = vpop.permute.xlu0 %4080
      %4082 = vrot.lane.b32.xlu0 %v3952, 42
      %v4083 = vpop.permute.xlu0 %4082
      %4084 = vrot.lane.b32.xlu0 %v3953, 42
      %v4085 = vpop.permute.xlu0 %4084
      %4086 = vrot.lane.b32.xlu0 %v3954, 42
      %v4087 = vpop.permute.xlu0 %4086
      %4088 = vrot.lane.b32.xlu0 %v3955, 42
      %v4089 = vpop.permute.xlu0 %4088
      %4090 = vrot.lane.b32.xlu0 %v3956, 42
      %v4091 = vpop.permute.xlu0 %4090
      %4092 = vrot.lane.b32.xlu0 %v3957, 42
      %v4093 = vpop.permute.xlu0 %4092
      %4094 = vrot.lane.b32.xlu0 %v3958, 42
      %v4095 = vpop.permute.xlu0 %4094
      %4096 = vrot.lane.b32.xlu0 %v3959, 42
      %v4097 = vpop.permute.xlu0 %4096
      %4098 = vrot.lane.b32.xlu0 %v3960, 42
      %v4099 = vpop.permute.xlu0 %4098
      %4100 = vrot.lane.b32.xlu0 %v3961, 42
      %v4101 = vpop.permute.xlu0 %4100
      %4102 = vrot.lane.b32.xlu0 %v3962, 42
      %v4103 = vpop.permute.xlu0 %4102
      %4104 = vrot.lane.b32.xlu0 %v3963, 42
      %v4105 = vpop.permute.xlu0 %4104
      %4106 = vrot.lane.b32.xlu0 %v3964, 42
      %v4107 = vpop.permute.xlu0 %4106
      %4108 = vrot.lane.b32.xlu0 %v3965, 42
      %v4109 = vpop.permute.xlu0 %4108
      %4110 = vrot.lane.b32.xlu0 %v3966, 42
      %v4111 = vpop.permute.xlu0 %4110
      %4112 = vrot.lane.b32.xlu0 %v3967, 42
      %v4113 = vpop.permute.xlu0 %4112
      %4114 = vrot.lane.b32.xlu0 %v3968, 42
      %v4115 = vpop.permute.xlu0 %4114
      %4116 = vrot.lane.b32.xlu0 %v3969, 42
      %v4117 = vpop.permute.xlu0 %4116
      %4118 = vrot.lane.b32.xlu0 %v3970, 42
      %v4119 = vpop.permute.xlu0 %4118
      %4120 = vrot.lane.b32.xlu0 %v3971, 42
      %v4121 = vpop.permute.xlu0 %4120
      %4122 = vrot.lane.b32.xlu0 %v3972, 42
      %v4123 = vpop.permute.xlu0 %4122
      %4124 = vrot.lane.b32.xlu0 %v3973, 42
      %v4125 = vpop.permute.xlu0 %4124
      %4126 = vrot.lane.b32.xlu0 %v3974, 42
      %v4127 = vpop.permute.xlu0 %4126
      %4128 = vrot.lane.b32.xlu0 %v3975, 42
      %v4129 = vpop.permute.xlu0 %4128
      %4130 = vrot.lane.b32.xlu0 %v3976, 42
      %v4131 = vpop.permute.xlu0 %4130
      %4132 = vrot.lane.b32.xlu0 %v3977, 42
      %v4133 = vpop.permute.xlu0 %4132
      %4134 = vrot.lane.b32.xlu0 %v3978, 42
      %v4135 = vpop.permute.xlu0 %4134
      %4136 = vrot.lane.b32.xlu0 %v3979, 42
      %v4137 = vpop.permute.xlu0 %4136
      %4138 = vrot.lane.b32.xlu0 %v3980, 42
      %v4139 = vpop.permute.xlu0 %4138
      %4140 = vrot.lane.b32.xlu0 %v3981, 42
      %v4141 = vpop.permute.xlu0 %4140
      %4142 = vrot.lane.b32.xlu0 %v3982, 42
      %v4143 = vpop.permute.xlu0 %4142
      %4144 = vrot.lane.b32.xlu0 %v3983, 42
      %v4145 = vpop.permute.xlu0 %4144
      %4146 = vrot.lane.b32.xlu0 %v3984, 42
      %v4147 = vpop.permute.xlu0 %4146
      %4148 = vrot.lane.b32.xlu0 %v3985, 42
      %v4149 = vpop.permute.xlu0 %4148
      %4150 = vrot.lane.b32.xlu0 %v3986, 42
      %v4151 = vpop.permute.xlu0 %4150
      %4152 = vrot.lane.b32.xlu0 %v3987, 42
      %v4153 = vpop.permute.xlu0 %4152
      %4154 = vrot.lane.b32.xlu0 %v3988, 42
      %v4155 = vpop.permute.xlu0 %4154
      %4156 = vrot.lane.b32.xlu0 %v3989, 42
      %v4157 = vpop.permute.xlu0 %4156
      %4158 = vrot.lane.b32.xlu0 %v3990, 42
      %v4159 = vpop.permute.xlu0 %4158
      %4160 = vrot.lane.b32.xlu0 %v3991, 42
      %v4161 = vpop.permute.xlu0 %4160
      %4162 = vrot.lane.b32.xlu0 %v3992, 42
      %v4163 = vpop.permute.xlu0 %4162
      %4164 = vrot.lane.b32.xlu0 %v3993, 42
      %v4165 = vpop.permute.xlu0 %4164
      %4166 = vrot.lane.b32.xlu0 %v3994, 42
      %v4167 = vpop.permute.xlu0 %4166
      %4168 = vrot.lane.b32.xlu0 %v3995, 42
      %v4169 = vpop.permute.xlu0 %4168
      %4170 = vrot.lane.b32.xlu0 %v3996, 42
      %v4171 = vpop.permute.xlu0 %4170
      %4172 = vrot.lane.b32.xlu0 %v3997, 42
      %v4173 = vpop.permute.xlu0 %4172
      %4174 = vrot.lane.b32.xlu0 %v3998, 42
      %v4175 = vpop.permute.xlu0 %4174
      %4176 = vrot.lane.b32.xlu0 %v3999, 42
      %v4177 = vpop.permute.xlu0 %4176
      %4178 = vrot.lane.b32.xlu0 %v4000, 42
      %v4179 = vpop.permute.xlu0 %4178
      %4180 = vrot.lane.b32.xlu0 %v4001, 42
      %v4181 = vpop.permute.xlu0 %4180
      %4182 = vrot.lane.b32.xlu0 %v4002, 42
      %v4183 = vpop.permute.xlu0 %4182
      %4184 = vrot.lane.b32.xlu0 %v4003, 42
      %v4185 = vpop.permute.xlu0 %4184
      %4186 = vrot.lane.b32.xlu0 %v4004, 42
      %v4187 = vpop.permute.xlu0 %4186
      %4188 = vrot.lane.b32.xlu0 %v4005, 42
      %v4189 = vpop.permute.xlu0 %4188
      %4190 = vrot.lane.b32.xlu0 %v4006, 42
      %v4191 = vpop.permute.xlu0 %4190
      %4192 = vrot.lane.b32.xlu0 %v4007, 42
      %v4193 = vpop.permute.xlu0 %4192
      %4194 = vrot.lane.b32.xlu0 %v4008, 42
      %v4195 = vpop.permute.xlu0 %4194
      %4196 = vrot.lane.b32.xlu0 %v4009, 42
      %v4197 = vpop.permute.xlu0 %4196
      %4198 = vrot.lane.b32.xlu0 %v4010, 42
      %v4199 = vpop.permute.xlu0 %4198
      %4200 = vrot.lane.b32.xlu0 %v4011, 42
      %v4201 = vpop.permute.xlu0 %4200
      %4202 = vrot.lane.b32.xlu0 %v4012, 42
      %v4203 = vpop.permute.xlu0 %4202
      %4204 = vrot.lane.b32.xlu0 %v4013, 42
      %v4205 = vpop.permute.xlu0 %4204
      %vm4270 = vcmask 392528
      %4271 = vst.msk [vmem:[#allocation3] sm:$0xff] %vm4270, %v4079
      %4272 = vst.msk [vmem:[#allocation3 + $0x8] sm:$0xff] %vm4270, %v4081
      %4273 = vst.msk [vmem:[#allocation3 + $0x10] sm:$0xff] %vm4270, %v4083
      %4274 = vst.msk [vmem:[#allocation3 + $0x18] sm:$0xff] %vm4270, %v4085
      %4275 = vst.msk [vmem:[#allocation3 + $0x20] sm:$0xff] %vm4270, %v4087
      %4276 = vst.msk [vmem:[#allocation3 + $0x28] sm:$0xff] %vm4270, %v4089
      %4277 = vst.msk [vmem:[#allocation3 + $0x30] sm:$0xff] %vm4270, %v4091
      %4278 = vst.msk [vmem:[#allocation3 + $0x38] sm:$0xff] %vm4270, %v4093
      %4279 = vst.msk [vmem:[#allocation3 + $0x40] sm:$0xff] %vm4270, %v4095
      %4280 = vst.msk [vmem:[#allocation3 + $0x48] sm:$0xff] %vm4270, %v4097
      %4281 = vst.msk [vmem:[#allocation3 + $0x50] sm:$0xff] %vm4270, %v4099
      %4282 = vst.msk [vmem:[#allocation3 + $0x58] sm:$0xff] %vm4270, %v4101
      %4283 = vst.msk [vmem:[#allocation3 + $0x60] sm:$0xff] %vm4270, %v4103
      %4284 = vst.msk [vmem:[#allocation3 + $0x68] sm:$0xff] %vm4270, %v4105
      %4285 = vst.msk [vmem:[#allocation3 + $0x70] sm:$0xff] %vm4270, %v4107
      %4286 = vst.msk [vmem:[#allocation3 + $0x78] sm:$0xff] %vm4270, %v4109
      %4287 = vst.msk [vmem:[#allocation3 + $0x80] sm:$0xff] %vm4270, %v4111
      %4288 = vst.msk [vmem:[#allocation3 + $0x88] sm:$0xff] %vm4270, %v4113
      %4289 = vst.msk [vmem:[#allocation3 + $0x90] sm:$0xff] %vm4270, %v4115
      %4290 = vst.msk [vmem:[#allocation3 + $0x98] sm:$0xff] %vm4270, %v4117
      %4291 = vst.msk [vmem:[#allocation3 + $0xa0] sm:$0xff] %vm4270, %v4119
      %4292 = vst.msk [vmem:[#allocation3 + $0xa8] sm:$0xff] %vm4270, %v4121
      %4293 = vst.msk [vmem:[#allocation3 + $0xb0] sm:$0xff] %vm4270, %v4123
      %4294 = vst.msk [vmem:[#allocation3 + $0xb8] sm:$0xff] %vm4270, %v4125
      %4295 = vst.msk [vmem:[#allocation3 + $0xc0] sm:$0xff] %vm4270, %v4127
      %4296 = vst.msk [vmem:[#allocation3 + $0xc8] sm:$0xff] %vm4270, %v4129
      %4297 = vst.msk [vmem:[#allocation3 + $0xd0] sm:$0xff] %vm4270, %v4131
      %4298 = vst.msk [vmem:[#allocation3 + $0xd8] sm:$0xff] %vm4270, %v4133
      %4299 = vst.msk [vmem:[#allocation3 + $0xe0] sm:$0xff] %vm4270, %v4135
      %4300 = vst.msk [vmem:[#allocation3 + $0xe8] sm:$0xff] %vm4270, %v4137
      %4301 = vst.msk [vmem:[#allocation3 + $0xf0] sm:$0xff] %vm4270, %v4139
      %4302 = vst.msk [vmem:[#allocation3 + $0xf8] sm:$0xff] %vm4270, %v4141
      %4303 = vst.msk [vmem:[#allocation3 + $0x100] sm:$0xff] %vm4270, %v4143
      %4304 = vst.msk [vmem:[#allocation3 + $0x108] sm:$0xff] %vm4270, %v4145
      %4305 = vst.msk [vmem:[#allocation3 + $0x110] sm:$0xff] %vm4270, %v4147
      %4306 = vst.msk [vmem:[#allocation3 + $0x118] sm:$0xff] %vm4270, %v4149
      %4307 = vst.msk [vmem:[#allocation3 + $0x120] sm:$0xff] %vm4270, %v4151
      %4308 = vst.msk [vmem:[#allocation3 + $0x128] sm:$0xff] %vm4270, %v4153
      %4309 = vst.msk [vmem:[#allocation3 + $0x130] sm:$0xff] %vm4270, %v4155
      %4310 = vst.msk [vmem:[#allocation3 + $0x138] sm:$0xff] %vm4270, %v4157
      %4311 = vst.msk [vmem:[#allocation3 + $0x140] sm:$0xff] %vm4270, %v4159
      %4312 = vst.msk [vmem:[#allocation3 + $0x148] sm:$0xff] %vm4270, %v4161
      %4313 = vst.msk [vmem:[#allocation3 + $0x150] sm:$0xff] %vm4270, %v4163
      %4314 = vst.msk [vmem:[#allocation3 + $0x158] sm:$0xff] %vm4270, %v4165
      %4315 = vst.msk [vmem:[#allocation3 + $0x160] sm:$0xff] %vm4270, %v4167
      %4316 = vst.msk [vmem:[#allocation3 + $0x168] sm:$0xff] %vm4270, %v4169
      %4317 = vst.msk [vmem:[#allocation3 + $0x170] sm:$0xff] %vm4270, %v4171
      %4318 = vst.msk [vmem:[#allocation3 + $0x178] sm:$0xff] %vm4270, %v4173
      %4319 = vst.msk [vmem:[#allocation3 + $0x180] sm:$0xff] %vm4270, %v4175
      %4320 = vst.msk [vmem:[#allocation3 + $0x188] sm:$0xff] %vm4270, %v4177
      %4321 = vst.msk [vmem:[#allocation3 + $0x190] sm:$0xff] %vm4270, %v4179
      %4322 = vst.msk [vmem:[#allocation3 + $0x198] sm:$0xff] %vm4270, %v4181
      %4323 = vst.msk [vmem:[#allocation3 + $0x1a0] sm:$0xff] %vm4270, %v4183
      %4324 = vst.msk [vmem:[#allocation3 + $0x1a8] sm:$0xff] %vm4270, %v4185
      %4325 = vst.msk [vmem:[#allocation3 + $0x1b0] sm:$0xff] %vm4270, %v4187
      %4326 = vst.msk [vmem:[#allocation3 + $0x1b8] sm:$0xff] %vm4270, %v4189
      %4327 = vst.msk [vmem:[#allocation3 + $0x1c0] sm:$0xff] %vm4270, %v4191
      %4328 = vst.msk [vmem:[#allocation3 + $0x1c8] sm:$0xff] %vm4270, %v4193
      %4329 = vst.msk [vmem:[#allocation3 + $0x1d0] sm:$0xff] %vm4270, %v4195
      %4330 = vst.msk [vmem:[#allocation3 + $0x1d8] sm:$0xff] %vm4270, %v4197
      %4331 = vst.msk [vmem:[#allocation3 + $0x1e0] sm:$0xff] %vm4270, %v4199
      %4332 = vst.msk [vmem:[#allocation3 + $0x1e8] sm:$0xff] %vm4270, %v4201
      %4333 = vst.msk [vmem:[#allocation3 + $0x1f0] sm:$0xff] %vm4270, %v4203
      %4334 = vst.msk [vmem:[#allocation3 + $0x1f8] sm:$0xff] %vm4270, %v4205
      %v4335 = vld [vmem:[%s3308 + $0x2] sm:$0xff]
      %v4336 = vld [vmem:[%s3308 + $0xa] sm:$0xff]
      %v4337 = vld [vmem:[%s3308 + $0x12] sm:$0xff]
      %v4338 = vld [vmem:[%s3308 + $0x1a] sm:$0xff]
      %v4339 = vld [vmem:[%s3308 + $0x2a] sm:$0xff]
      %v4340 = vld [vmem:[%s3308 + $0x32] sm:$0xff]
      %v4341 = vld [vmem:[%s3308 + $0x3a] sm:$0xff]
      %v4342 = vld [vmem:[%s3308 + $0x42] sm:$0xff]
      %v4343 = vld [vmem:[%s3308 + $0x52] sm:$0xff]
      %v4344 = vld [vmem:[%s3308 + $0x5a] sm:$0xff]
      %v4345 = vld [vmem:[%s3308 + $0x62] sm:$0xff]
      %v4346 = vld [vmem:[%s3308 + $0x6a] sm:$0xff]
      %v4347 = vld [vmem:[%s3308 + $0x7a] sm:$0xff]
      %v4348 = vld [vmem:[%s3308 + $0x82] sm:$0xff]
      %v4349 = vld [vmem:[%s3308 + $0x8a] sm:$0xff]
      %v4350 = vld [vmem:[%s3308 + $0x92] sm:$0xff]
      %v4351 = vld [vmem:[%s3308 + $0xa2] sm:$0xff]
      %v4352 = vld [vmem:[%s3308 + $0xaa] sm:$0xff]
      %v4353 = vld [vmem:[%s3308 + $0xb2] sm:$0xff]
      %v4354 = vld [vmem:[%s3308 + $0xba] sm:$0xff]
      %v4355 = vld [vmem:[%s3308 + $0xca] sm:$0xff]
      %v4356 = vld [vmem:[%s3308 + $0xd2] sm:$0xff]
      %v4357 = vld [vmem:[%s3308 + $0xda] sm:$0xff]
      %v4358 = vld [vmem:[%s3308 + $0xe2] sm:$0xff]
      %v4359 = vld [vmem:[%s3308 + $0xf2] sm:$0xff]
      %v4360 = vld [vmem:[%s3308 + $0xfa] sm:$0xff]
      %v4361 = vld [vmem:[%s3308 + $0x102] sm:$0xff]
      %v4362 = vld [vmem:[%s3308 + $0x10a] sm:$0xff]
      %v4363 = vld [vmem:[%s3308 + $0x11a] sm:$0xff]
      %v4364 = vld [vmem:[%s3308 + $0x122] sm:$0xff]
      %v4365 = vld [vmem:[%s3308 + $0x12a] sm:$0xff]
      %v4366 = vld [vmem:[%s3308 + $0x132] sm:$0xff]
      %v4367 = vld [vmem:[%s3308 + $0x142] sm:$0xff]
      %v4368 = vld [vmem:[%s3308 + $0x14a] sm:$0xff]
      %v4369 = vld [vmem:[%s3308 + $0x152] sm:$0xff]
      %v4370 = vld [vmem:[%s3308 + $0x15a] sm:$0xff]
      %v4371 = vld [vmem:[%s3308 + $0x16a] sm:$0xff]
      %v4372 = vld [vmem:[%s3308 + $0x172] sm:$0xff]
      %v4373 = vld [vmem:[%s3308 + $0x17a] sm:$0xff]
      %v4374 = vld [vmem:[%s3308 + $0x182] sm:$0xff]
      %v4375 = vld [vmem:[%s3308 + $0x192] sm:$0xff]
      %v4376 = vld [vmem:[%s3308 + $0x19a] sm:$0xff]
      %v4377 = vld [vmem:[%s3308 + $0x1a2] sm:$0xff]
      %v4378 = vld [vmem:[%s3308 + $0x1aa] sm:$0xff]
      %v4379 = vld [vmem:[%s3308 + $0x1ba] sm:$0xff]
      %v4380 = vld [vmem:[%s3308 + $0x1c2] sm:$0xff]
      %v4381 = vld [vmem:[%s3308 + $0x1ca] sm:$0xff]
      %v4382 = vld [vmem:[%s3308 + $0x1d2] sm:$0xff]
      %v4383 = vld [vmem:[%s3308 + $0x1e2] sm:$0xff]
      %v4384 = vld [vmem:[%s3308 + $0x1ea] sm:$0xff]
      %v4385 = vld [vmem:[%s3308 + $0x1f2] sm:$0xff]
      %v4386 = vld [vmem:[%s3308 + $0x1fa] sm:$0xff]
      %v4387 = vld [vmem:[%s3308 + $0x20a] sm:$0xff]
      %v4388 = vld [vmem:[%s3308 + $0x212] sm:$0xff]
      %v4389 = vld [vmem:[%s3308 + $0x21a] sm:$0xff]
      %v4390 = vld [vmem:[%s3308 + $0x222] sm:$0xff]
      %v4391 = vld [vmem:[%s3308 + $0x232] sm:$0xff]
      %v4392 = vld [vmem:[%s3308 + $0x23a] sm:$0xff]
      %v4393 = vld [vmem:[%s3308 + $0x242] sm:$0xff]
      %v4394 = vld [vmem:[%s3308 + $0x24a] sm:$0xff]
      %v4395 = vld [vmem:[%s3308 + $0x25a] sm:$0xff]
      %v4396 = vld [vmem:[%s3308 + $0x262] sm:$0xff]
      %v4397 = vld [vmem:[%s3308 + $0x26a] sm:$0xff]
      %v4398 = vld [vmem:[%s3308 + $0x272] sm:$0xff]
      %v4399 = vld [vmem:[%s3308 + $0x282] sm:$0xff]
      %v4400 = vld [vmem:[%s3308 + $0x28a] sm:$0xff]
      %v4401 = vld [vmem:[%s3308 + $0x292] sm:$0xff]
      %v4402 = vld [vmem:[%s3308 + $0x29a] sm:$0xff]
      %v4403 = vld [vmem:[%s3308 + $0x2aa] sm:$0xff]
      %v4404 = vld [vmem:[%s3308 + $0x2b2] sm:$0xff]
      %v4405 = vld [vmem:[%s3308 + $0x2ba] sm:$0xff]
      %v4406 = vld [vmem:[%s3308 + $0x2c2] sm:$0xff]
      %v4407 = vld [vmem:[%s3308 + $0x2d2] sm:$0xff]
      %v4408 = vld [vmem:[%s3308 + $0x2da] sm:$0xff]
      %v4409 = vld [vmem:[%s3308 + $0x2e2] sm:$0xff]
      %v4410 = vld [vmem:[%s3308 + $0x2ea] sm:$0xff]
      %v4411 = vld [vmem:[%s3308 + $0x2fa] sm:$0xff]
      %v4412 = vld [vmem:[%s3308 + $0x302] sm:$0xff]
      %v4413 = vld [vmem:[%s3308 + $0x30a] sm:$0xff]
      %v4414 = vld [vmem:[%s3308 + $0x312] sm:$0xff]
      %v4415 = vld [vmem:[%s3308 + $0x322] sm:$0xff]
      %v4416 = vld [vmem:[%s3308 + $0x32a] sm:$0xff]
      %v4417 = vld [vmem:[%s3308 + $0x332] sm:$0xff]
      %v4418 = vld [vmem:[%s3308 + $0x33a] sm:$0xff]
      %v4419 = vld [vmem:[%s3308 + $0x34a] sm:$0xff]
      %v4420 = vld [vmem:[%s3308 + $0x352] sm:$0xff]
      %v4421 = vld [vmem:[%s3308 + $0x35a] sm:$0xff]
      %v4422 = vld [vmem:[%s3308 + $0x362] sm:$0xff]
      %v4423 = vld [vmem:[%s3308 + $0x372] sm:$0xff]
      %v4424 = vld [vmem:[%s3308 + $0x37a] sm:$0xff]
      %v4425 = vld [vmem:[%s3308 + $0x382] sm:$0xff]
      %v4426 = vld [vmem:[%s3308 + $0x38a] sm:$0xff]
      %v4427 = vld [vmem:[%s3308 + $0x39a] sm:$0xff]
      %v4428 = vld [vmem:[%s3308 + $0x3a2] sm:$0xff]
      %v4429 = vld [vmem:[%s3308 + $0x3aa] sm:$0xff]
      %v4430 = vld [vmem:[%s3308 + $0x3b2] sm:$0xff]
      %v4431 = vld [vmem:[%s3308 + $0x3c2] sm:$0xff]
      %v4432 = vld [vmem:[%s3308 + $0x3ca] sm:$0xff]
      %v4433 = vld [vmem:[%s3308 + $0x3d2] sm:$0xff]
      %v4434 = vld [vmem:[%s3308 + $0x3da] sm:$0xff]
      %v4435 = vld [vmem:[%s3308 + $0x3ea] sm:$0xff]
      %v4436 = vld [vmem:[%s3308 + $0x3f2] sm:$0xff]
      %v4437 = vld [vmem:[%s3308 + $0x3fa] sm:$0xff]
      %v4438 = vld [vmem:[%s3308 + $0x402] sm:$0xff]
      %v4439 = vld [vmem:[%s3308 + $0x412] sm:$0xff]
      %v4440 = vld [vmem:[%s3308 + $0x41a] sm:$0xff]
      %v4441 = vld [vmem:[%s3308 + $0x422] sm:$0xff]
      %v4442 = vld [vmem:[%s3308 + $0x42a] sm:$0xff]
      %v4443 = vld [vmem:[%s3308 + $0x43a] sm:$0xff]
      %v4444 = vld [vmem:[%s3308 + $0x442] sm:$0xff]
      %v4445 = vld [vmem:[%s3308 + $0x44a] sm:$0xff]
      %v4446 = vld [vmem:[%s3308 + $0x452] sm:$0xff]
      %v4447 = vld [vmem:[%s3308 + $0x462] sm:$0xff]
      %v4448 = vld [vmem:[%s3308 + $0x46a] sm:$0xff]
      %v4449 = vld [vmem:[%s3308 + $0x472] sm:$0xff]
      %v4450 = vld [vmem:[%s3308 + $0x47a] sm:$0xff]
      %v4451 = vld [vmem:[%s3308 + $0x48a] sm:$0xff]
      %v4452 = vld [vmem:[%s3308 + $0x492] sm:$0xff]
      %v4453 = vld [vmem:[%s3308 + $0x49a] sm:$0xff]
      %v4454 = vld [vmem:[%s3308 + $0x4a2] sm:$0xff]
      %v4455 = vld [vmem:[%s3308 + $0x4b2] sm:$0xff]
      %v4456 = vld [vmem:[%s3308 + $0x4ba] sm:$0xff]
      %v4457 = vld [vmem:[%s3308 + $0x4c2] sm:$0xff]
      %v4458 = vld [vmem:[%s3308 + $0x4ca] sm:$0xff]
      %v4459 = vld [vmem:[%s3308 + $0x4da] sm:$0xff]
      %v4460 = vld [vmem:[%s3308 + $0x4e2] sm:$0xff]
      %v4461 = vld [vmem:[%s3308 + $0x4ea] sm:$0xff]
      %v4462 = vld [vmem:[%s3308 + $0x4f2] sm:$0xff]
      %v4463 = vpack.c.bf16 %v4336, %v4335
      %v4464 = vpack.c.bf16 %v4338, %v4337
      %v4465 = vpack.c.bf16 %v4340, %v4339
      %v4466 = vpack.c.bf16 %v4342, %v4341
      %v4467 = vpack.c.bf16 %v4344, %v4343
      %v4468 = vpack.c.bf16 %v4346, %v4345
      %v4469 = vpack.c.bf16 %v4348, %v4347
      %v4470 = vpack.c.bf16 %v4350, %v4349
      %v4471 = vpack.c.bf16 %v4352, %v4351
      %v4472 = vpack.c.bf16 %v4354, %v4353
      %v4473 = vpack.c.bf16 %v4356, %v4355
      %v4474 = vpack.c.bf16 %v4358, %v4357
      %v4475 = vpack.c.bf16 %v4360, %v4359
      %v4476 = vpack.c.bf16 %v4362, %v4361
      %v4477 = vpack.c.bf16 %v4364, %v4363
      %v4478 = vpack.c.bf16 %v4366, %v4365
      %v4479 = vpack.c.bf16 %v4368, %v4367
      %v4480 = vpack.c.bf16 %v4370, %v4369
      %v4481 = vpack.c.bf16 %v4372, %v4371
      %v4482 = vpack.c.bf16 %v4374, %v4373
      %v4483 = vpack.c.bf16 %v4376, %v4375
      %v4484 = vpack.c.bf16 %v4378, %v4377
      %v4485 = vpack.c.bf16 %v4380, %v4379
      %v4486 = vpack.c.bf16 %v4382, %v4381
      %v4487 = vpack.c.bf16 %v4384, %v4383
      %v4488 = vpack.c.bf16 %v4386, %v4385
      %v4489 = vpack.c.bf16 %v4388, %v4387
      %v4490 = vpack.c.bf16 %v4390, %v4389
      %v4491 = vpack.c.bf16 %v4392, %v4391
      %v4492 = vpack.c.bf16 %v4394, %v4393
      %v4493 = vpack.c.bf16 %v4396, %v4395
      %v4494 = vpack.c.bf16 %v4398, %v4397
      %v4495 = vpack.c.bf16 %v4400, %v4399
      %v4496 = vpack.c.bf16 %v4402, %v4401
      %v4497 = vpack.c.bf16 %v4404, %v4403
      %v4498 = vpack.c.bf16 %v4406, %v4405
      %v4499 = vpack.c.bf16 %v4408, %v4407
      %v4500 = vpack.c.bf16 %v4410, %v4409
      %v4501 = vpack.c.bf16 %v4412, %v4411
      %v4502 = vpack.c.bf16 %v4414, %v4413
      %v4503 = vpack.c.bf16 %v4416, %v4415
      %v4504 = vpack.c.bf16 %v4418, %v4417
      %v4505 = vpack.c.bf16 %v4420, %v4419
      %v4506 = vpack.c.bf16 %v4422, %v4421
      %v4507 = vpack.c.bf16 %v4424, %v4423
      %v4508 = vpack.c.bf16 %v4426, %v4425
      %v4509 = vpack.c.bf16 %v4428, %v4427
      %v4510 = vpack.c.bf16 %v4430, %v4429
      %v4511 = vpack.c.bf16 %v4432, %v4431
      %v4512 = vpack.c.bf16 %v4434, %v4433
      %v4513 = vpack.c.bf16 %v4436, %v4435
      %v4514 = vpack.c.bf16 %v4438, %v4437
      %v4515 = vpack.c.bf16 %v4440, %v4439
      %v4516 = vpack.c.bf16 %v4442, %v4441
      %v4517 = vpack.c.bf16 %v4444, %v4443
      %v4518 = vpack.c.bf16 %v4446, %v4445
      %v4519 = vpack.c.bf16 %v4448, %v4447
      %v4520 = vpack.c.bf16 %v4450, %v4449
      %v4521 = vpack.c.bf16 %v4452, %v4451
      %v4522 = vpack.c.bf16 %v4454, %v4453
      %v4523 = vpack.c.bf16 %v4456, %v4455
      %v4524 = vpack.c.bf16 %v4458, %v4457
      %v4525 = vpack.c.bf16 %v4460, %v4459
      %v4526 = vpack.c.bf16 %v4462, %v4461
      %4591 = vrot.lane.b32.xlu0 %v4463, 48
      %v4592 = vpop.permute.xlu0 %4591
      %4593 = vrot.lane.b32.xlu0 %v4464, 48
      %v4594 = vpop.permute.xlu0 %4593
      %4595 = vrot.lane.b32.xlu0 %v4465, 48
      %v4596 = vpop.permute.xlu0 %4595
      %4597 = vrot.lane.b32.xlu0 %v4466, 48
      %v4598 = vpop.permute.xlu0 %4597
      %4599 = vrot.lane.b32.xlu0 %v4467, 48
      %v4600 = vpop.permute.xlu0 %4599
      %4601 = vrot.lane.b32.xlu0 %v4468, 48
      %v4602 = vpop.permute.xlu0 %4601
      %4603 = vrot.lane.b32.xlu0 %v4469, 48
      %v4604 = vpop.permute.xlu0 %4603
      %4605 = vrot.lane.b32.xlu0 %v4470, 48
      %v4606 = vpop.permute.xlu0 %4605
      %4607 = vrot.lane.b32.xlu0 %v4471, 48
      %v4608 = vpop.permute.xlu0 %4607
      %4609 = vrot.lane.b32.xlu0 %v4472, 48
      %v4610 = vpop.permute.xlu0 %4609
      %4611 = vrot.lane.b32.xlu0 %v4473, 48
      %v4612 = vpop.permute.xlu0 %4611
      %4613 = vrot.lane.b32.xlu0 %v4474, 48
      %v4614 = vpop.permute.xlu0 %4613
      %4615 = vrot.lane.b32.xlu0 %v4475, 48
      %v4616 = vpop.permute.xlu0 %4615
      %4617 = vrot.lane.b32.xlu0 %v4476, 48
      %v4618 = vpop.permute.xlu0 %4617
      %4619 = vrot.lane.b32.xlu0 %v4477, 48
      %v4620 = vpop.permute.xlu0 %4619
      %4621 = vrot.lane.b32.xlu0 %v4478, 48
      %v4622 = vpop.permute.xlu0 %4621
      %4623 = vrot.lane.b32.xlu0 %v4479, 48
      %v4624 = vpop.permute.xlu0 %4623
      %4625 = vrot.lane.b32.xlu0 %v4480, 48
      %v4626 = vpop.permute.xlu0 %4625
      %4627 = vrot.lane.b32.xlu0 %v4481, 48
      %v4628 = vpop.permute.xlu0 %4627
      %4629 = vrot.lane.b32.xlu0 %v4482, 48
      %v4630 = vpop.permute.xlu0 %4629
      %4631 = vrot.lane.b32.xlu0 %v4483, 48
      %v4632 = vpop.permute.xlu0 %4631
      %4633 = vrot.lane.b32.xlu0 %v4484, 48
      %v4634 = vpop.permute.xlu0 %4633
      %4635 = vrot.lane.b32.xlu0 %v4485, 48
      %v4636 = vpop.permute.xlu0 %4635
      %4637 = vrot.lane.b32.xlu0 %v4486, 48
      %v4638 = vpop.permute.xlu0 %4637
      %4639 = vrot.lane.b32.xlu0 %v4487, 48
      %v4640 = vpop.permute.xlu0 %4639
      %4641 = vrot.lane.b32.xlu0 %v4488, 48
      %v4642 = vpop.permute.xlu0 %4641
      %4643 = vrot.lane.b32.xlu0 %v4489, 48
      %v4644 = vpop.permute.xlu0 %4643
      %4645 = vrot.lane.b32.xlu0 %v4490, 48
      %v4646 = vpop.permute.xlu0 %4645
      %4647 = vrot.lane.b32.xlu0 %v4491, 48
      %v4648 = vpop.permute.xlu0 %4647
      %4649 = vrot.lane.b32.xlu0 %v4492, 48
      %v4650 = vpop.permute.xlu0 %4649
      %4651 = vrot.lane.b32.xlu0 %v4493, 48
      %v4652 = vpop.permute.xlu0 %4651
      %4653 = vrot.lane.b32.xlu0 %v4494, 48
      %v4654 = vpop.permute.xlu0 %4653
      %4655 = vrot.lane.b32.xlu0 %v4495, 48
      %v4656 = vpop.permute.xlu0 %4655
      %4657 = vrot.lane.b32.xlu0 %v4496, 48
      %v4658 = vpop.permute.xlu0 %4657
      %4659 = vrot.lane.b32.xlu0 %v4497, 48
      %v4660 = vpop.permute.xlu0 %4659
      %4661 = vrot.lane.b32.xlu0 %v4498, 48
      %v4662 = vpop.permute.xlu0 %4661
      %4663 = vrot.lane.b32.xlu0 %v4499, 48
      %v4664 = vpop.permute.xlu0 %4663
      %4665 = vrot.lane.b32.xlu0 %v4500, 48
      %v4666 = vpop.permute.xlu0 %4665
      %4667 = vrot.lane.b32.xlu0 %v4501, 48
      %v4668 = vpop.permute.xlu0 %4667
      %4669 = vrot.lane.b32.xlu0 %v4502, 48
      %v4670 = vpop.permute.xlu0 %4669
      %4671 = vrot.lane.b32.xlu0 %v4503, 48
      %v4672 = vpop.permute.xlu0 %4671
      %4673 = vrot.lane.b32.xlu0 %v4504, 48
      %v4674 = vpop.permute.xlu0 %4673
      %4675 = vrot.lane.b32.xlu0 %v4505, 48
      %v4676 = vpop.permute.xlu0 %4675
      %4677 = vrot.lane.b32.xlu0 %v4506, 48
      %v4678 = vpop.permute.xlu0 %4677
      %4679 = vrot.lane.b32.xlu0 %v4507, 48
      %v4680 = vpop.permute.xlu0 %4679
      %4681 = vrot.lane.b32.xlu0 %v4508, 48
      %v4682 = vpop.permute.xlu0 %4681
      %4683 = vrot.lane.b32.xlu0 %v4509, 48
      %v4684 = vpop.permute.xlu0 %4683
      %4685 = vrot.lane.b32.xlu0 %v4510, 48
      %v4686 = vpop.permute.xlu0 %4685
      %4687 = vrot.lane.b32.xlu0 %v4511, 48
      %v4688 = vpop.permute.xlu0 %4687
      %4689 = vrot.lane.b32.xlu0 %v4512, 48
      %v4690 = vpop.permute.xlu0 %4689
      %4691 = vrot.lane.b32.xlu0 %v4513, 48
      %v4692 = vpop.permute.xlu0 %4691
      %4693 = vrot.lane.b32.xlu0 %v4514, 48
      %v4694 = vpop.permute.xlu0 %4693
      %4695 = vrot.lane.b32.xlu0 %v4515, 48
      %v4696 = vpop.permute.xlu0 %4695
      %4697 = vrot.lane.b32.xlu0 %v4516, 48
      %v4698 = vpop.permute.xlu0 %4697
      %4699 = vrot.lane.b32.xlu0 %v4517, 48
      %v4700 = vpop.permute.xlu0 %4699
      %4701 = vrot.lane.b32.xlu0 %v4518, 48
      %v4702 = vpop.permute.xlu0 %4701
      %4703 = vrot.lane.b32.xlu0 %v4519, 48
      %v4704 = vpop.permute.xlu0 %4703
      %4705 = vrot.lane.b32.xlu0 %v4520, 48
      %v4706 = vpop.permute.xlu0 %4705
      %4707 = vrot.lane.b32.xlu0 %v4521, 48
      %v4708 = vpop.permute.xlu0 %4707
      %4709 = vrot.lane.b32.xlu0 %v4522, 48
      %v4710 = vpop.permute.xlu0 %4709
      %4711 = vrot.lane.b32.xlu0 %v4523, 48
      %v4712 = vpop.permute.xlu0 %4711
      %4713 = vrot.lane.b32.xlu0 %v4524, 48
      %v4714 = vpop.permute.xlu0 %4713
      %4715 = vrot.lane.b32.xlu0 %v4525, 48
      %v4716 = vpop.permute.xlu0 %4715
      %4717 = vrot.lane.b32.xlu0 %v4526, 48
      %v4718 = vpop.permute.xlu0 %4717
      %vm4783 = vcmask 441728
      %4784 = vst.msk [vmem:[#allocation3] sm:$0xff] %vm4783, %v4592
      %4785 = vst.msk [vmem:[#allocation3 + $0x8] sm:$0xff] %vm4783, %v4594
      %4786 = vst.msk [vmem:[#allocation3 + $0x10] sm:$0xff] %vm4783, %v4596
      %4787 = vst.msk [vmem:[#allocation3 + $0x18] sm:$0xff] %vm4783, %v4598
      %4788 = vst.msk [vmem:[#allocation3 + $0x20] sm:$0xff] %vm4783, %v4600
      %4789 = vst.msk [vmem:[#allocation3 + $0x28] sm:$0xff] %vm4783, %v4602
      %4790 = vst.msk [vmem:[#allocation3 + $0x30] sm:$0xff] %vm4783, %v4604
      %4791 = vst.msk [vmem:[#allocation3 + $0x38] sm:$0xff] %vm4783, %v4606
      %4792 = vst.msk [vmem:[#allocation3 + $0x40] sm:$0xff] %vm4783, %v4608
      %4793 = vst.msk [vmem:[#allocation3 + $0x48] sm:$0xff] %vm4783, %v4610
      %4794 = vst.msk [vmem:[#allocation3 + $0x50] sm:$0xff] %vm4783, %v4612
      %4795 = vst.msk [vmem:[#allocation3 + $0x58] sm:$0xff] %vm4783, %v4614
      %4796 = vst.msk [vmem:[#allocation3 + $0x60] sm:$0xff] %vm4783, %v4616
      %4797 = vst.msk [vmem:[#allocation3 + $0x68] sm:$0xff] %vm4783, %v4618
      %4798 = vst.msk [vmem:[#allocation3 + $0x70] sm:$0xff] %vm4783, %v4620
      %4799 = vst.msk [vmem:[#allocation3 + $0x78] sm:$0xff] %vm4783, %v4622
      %4800 = vst.msk [vmem:[#allocation3 + $0x80] sm:$0xff] %vm4783, %v4624
      %4801 = vst.msk [vmem:[#allocation3 + $0x88] sm:$0xff] %vm4783, %v4626
      %4802 = vst.msk [vmem:[#allocation3 + $0x90] sm:$0xff] %vm4783, %v4628
      %4803 = vst.msk [vmem:[#allocation3 + $0x98] sm:$0xff] %vm4783, %v4630
      %4804 = vst.msk [vmem:[#allocation3 + $0xa0] sm:$0xff] %vm4783, %v4632
      %4805 = vst.msk [vmem:[#allocation3 + $0xa8] sm:$0xff] %vm4783, %v4634
      %4806 = vst.msk [vmem:[#allocation3 + $0xb0] sm:$0xff] %vm4783, %v4636
      %4807 = vst.msk [vmem:[#allocation3 + $0xb8] sm:$0xff] %vm4783, %v4638
      %4808 = vst.msk [vmem:[#allocation3 + $0xc0] sm:$0xff] %vm4783, %v4640
      %4809 = vst.msk [vmem:[#allocation3 + $0xc8] sm:$0xff] %vm4783, %v4642
      %4810 = vst.msk [vmem:[#allocation3 + $0xd0] sm:$0xff] %vm4783, %v4644
      %4811 = vst.msk [vmem:[#allocation3 + $0xd8] sm:$0xff] %vm4783, %v4646
      %4812 = vst.msk [vmem:[#allocation3 + $0xe0] sm:$0xff] %vm4783, %v4648
      %4813 = vst.msk [vmem:[#allocation3 + $0xe8] sm:$0xff] %vm4783, %v4650
      %4814 = vst.msk [vmem:[#allocation3 + $0xf0] sm:$0xff] %vm4783, %v4652
      %4815 = vst.msk [vmem:[#allocation3 + $0xf8] sm:$0xff] %vm4783, %v4654
      %4816 = vst.msk [vmem:[#allocation3 + $0x100] sm:$0xff] %vm4783, %v4656
      %4817 = vst.msk [vmem:[#allocation3 + $0x108] sm:$0xff] %vm4783, %v4658
      %4818 = vst.msk [vmem:[#allocation3 + $0x110] sm:$0xff] %vm4783, %v4660
      %4819 = vst.msk [vmem:[#allocation3 + $0x118] sm:$0xff] %vm4783, %v4662
      %4820 = vst.msk [vmem:[#allocation3 + $0x120] sm:$0xff] %vm4783, %v4664
      %4821 = vst.msk [vmem:[#allocation3 + $0x128] sm:$0xff] %vm4783, %v4666
      %4822 = vst.msk [vmem:[#allocation3 + $0x130] sm:$0xff] %vm4783, %v4668
      %4823 = vst.msk [vmem:[#allocation3 + $0x138] sm:$0xff] %vm4783, %v4670
      %4824 = vst.msk [vmem:[#allocation3 + $0x140] sm:$0xff] %vm4783, %v4672
      %4825 = vst.msk [vmem:[#allocation3 + $0x148] sm:$0xff] %vm4783, %v4674
      %4826 = vst.msk [vmem:[#allocation3 + $0x150] sm:$0xff] %vm4783, %v4676
      %4827 = vst.msk [vmem:[#allocation3 + $0x158] sm:$0xff] %vm4783, %v4678
      %4828 = vst.msk [vmem:[#allocation3 + $0x160] sm:$0xff] %vm4783, %v4680
      %4829 = vst.msk [vmem:[#allocation3 + $0x168] sm:$0xff] %vm4783, %v4682
      %4830 = vst.msk [vmem:[#allocation3 + $0x170] sm:$0xff] %vm4783, %v4684
      %4831 = vst.msk [vmem:[#allocation3 + $0x178] sm:$0xff] %vm4783, %v4686
      %4832 = vst.msk [vmem:[#allocation3 + $0x180] sm:$0xff] %vm4783, %v4688
      %4833 = vst.msk [vmem:[#allocation3 + $0x188] sm:$0xff] %vm4783, %v4690
      %4834 = vst.msk [vmem:[#allocation3 + $0x190] sm:$0xff] %vm4783, %v4692
      %4835 = vst.msk [vmem:[#allocation3 + $0x198] sm:$0xff] %vm4783, %v4694
      %4836 = vst.msk [vmem:[#allocation3 + $0x1a0] sm:$0xff] %vm4783, %v4696
      %4837 = vst.msk [vmem:[#allocation3 + $0x1a8] sm:$0xff] %vm4783, %v4698
      %4838 = vst.msk [vmem:[#allocation3 + $0x1b0] sm:$0xff] %vm4783, %v4700
      %4839 = vst.msk [vmem:[#allocation3 + $0x1b8] sm:$0xff] %vm4783, %v4702
      %4840 = vst.msk [vmem:[#allocation3 + $0x1c0] sm:$0xff] %vm4783, %v4704
      %4841 = vst.msk [vmem:[#allocation3 + $0x1c8] sm:$0xff] %vm4783, %v4706
      %4842 = vst.msk [vmem:[#allocation3 + $0x1d0] sm:$0xff] %vm4783, %v4708
      %4843 = vst.msk [vmem:[#allocation3 + $0x1d8] sm:$0xff] %vm4783, %v4710
      %4844 = vst.msk [vmem:[#allocation3 + $0x1e0] sm:$0xff] %vm4783, %v4712
      %4845 = vst.msk [vmem:[#allocation3 + $0x1e8] sm:$0xff] %vm4783, %v4714
      %4846 = vst.msk [vmem:[#allocation3 + $0x1f0] sm:$0xff] %vm4783, %v4716
      %4847 = vst.msk [vmem:[#allocation3 + $0x1f8] sm:$0xff] %vm4783, %v4718
      %v4848 = vld [vmem:[#allocation3] sm:$0xff]
      %v4849 = vld [vmem:[#allocation3 + $0x8] sm:$0xff]
      %v4850 = vld [vmem:[#allocation3 + $0x10] sm:$0xff]
      %v4851 = vld [vmem:[#allocation3 + $0x18] sm:$0xff]
      %v4852 = vld [vmem:[#allocation3 + $0x20] sm:$0xff]
      %v4853 = vld [vmem:[#allocation3 + $0x28] sm:$0xff]
      %v4854 = vld [vmem:[#allocation3 + $0x30] sm:$0xff]
      %v4855 = vld [vmem:[#allocation3 + $0x38] sm:$0xff]
      %v4856 = vld [vmem:[#allocation3 + $0x40] sm:$0xff]
      %v4857 = vld [vmem:[#allocation3 + $0x48] sm:$0xff]
      %v4858 = vld [vmem:[#allocation3 + $0x50] sm:$0xff]
      %v4859 = vld [vmem:[#allocation3 + $0x58] sm:$0xff]
      %v4860 = vld [vmem:[#allocation3 + $0x60] sm:$0xff]
      %v4861 = vld [vmem:[#allocation3 + $0x68] sm:$0xff]
      %v4862 = vld [vmem:[#allocation3 + $0x70] sm:$0xff]
      %v4863 = vld [vmem:[#allocation3 + $0x78] sm:$0xff]
      %v4864 = vld [vmem:[#allocation3 + $0x80] sm:$0xff]
      %v4865 = vld [vmem:[#allocation3 + $0x88] sm:$0xff]
      %v4866 = vld [vmem:[#allocation3 + $0x90] sm:$0xff]
      %v4867 = vld [vmem:[#allocation3 + $0x98] sm:$0xff]
      %v4868 = vld [vmem:[#allocation3 + $0xa0] sm:$0xff]
      %v4869 = vld [vmem:[#allocation3 + $0xa8] sm:$0xff]
      %v4870 = vld [vmem:[#allocation3 + $0xb0] sm:$0xff]
      %v4871 = vld [vmem:[#allocation3 + $0xb8] sm:$0xff]
      %v4872 = vld [vmem:[#allocation3 + $0xc0] sm:$0xff]
      %v4873 = vld [vmem:[#allocation3 + $0xc8] sm:$0xff]
      %v4874 = vld [vmem:[#allocation3 + $0xd0] sm:$0xff]
      %v4875 = vld [vmem:[#allocation3 + $0xd8] sm:$0xff]
      %v4876 = vld [vmem:[#allocation3 + $0xe0] sm:$0xff]
      %v4877 = vld [vmem:[#allocation3 + $0xe8] sm:$0xff]
      %v4878 = vld [vmem:[#allocation3 + $0xf0] sm:$0xff]
      %v4879 = vld [vmem:[#allocation3 + $0xf8] sm:$0xff]
      %v4880 = vld [vmem:[#allocation3 + $0x100] sm:$0xff]
      %v4881 = vld [vmem:[#allocation3 + $0x108] sm:$0xff]
      %v4882 = vld [vmem:[#allocation3 + $0x110] sm:$0xff]
      %v4883 = vld [vmem:[#allocation3 + $0x118] sm:$0xff]
      %v4884 = vld [vmem:[#allocation3 + $0x120] sm:$0xff]
      %v4885 = vld [vmem:[#allocation3 + $0x128] sm:$0xff]
      %v4886 = vld [vmem:[#allocation3 + $0x130] sm:$0xff]
      %v4887 = vld [vmem:[#allocation3 + $0x138] sm:$0xff]
      %v4888 = vld [vmem:[#allocation3 + $0x140] sm:$0xff]
      %v4889 = vld [vmem:[#allocation3 + $0x148] sm:$0xff]
      %v4890 = vld [vmem:[#allocation3 + $0x150] sm:$0xff]
      %v4891 = vld [vmem:[#allocation3 + $0x158] sm:$0xff]
      %v4892 = vld [vmem:[#allocation3 + $0x160] sm:$0xff]
      %v4893 = vld [vmem:[#allocation3 + $0x168] sm:$0xff]
      %v4894 = vld [vmem:[#allocation3 + $0x170] sm:$0xff]
      %v4895 = vld [vmem:[#allocation3 + $0x178] sm:$0xff]
      %v4896 = vld [vmem:[#allocation3 + $0x180] sm:$0xff]
      %v4897 = vld [vmem:[#allocation3 + $0x188] sm:$0xff]
      %v4898 = vld [vmem:[#allocation3 + $0x190] sm:$0xff]
      %v4899 = vld [vmem:[#allocation3 + $0x198] sm:$0xff]
      %v4900 = vld [vmem:[#allocation3 + $0x1a0] sm:$0xff]
      %v4901 = vld [vmem:[#allocation3 + $0x1a8] sm:$0xff]
      %v4902 = vld [vmem:[#allocation3 + $0x1b0] sm:$0xff]
      %v4903 = vld [vmem:[#allocation3 + $0x1b8] sm:$0xff]
      %v4904 = vld [vmem:[#allocation3 + $0x1c0] sm:$0xff]
      %v4905 = vld [vmem:[#allocation3 + $0x1c8] sm:$0xff]
      %v4906 = vld [vmem:[#allocation3 + $0x1d0] sm:$0xff]
      %v4907 = vld [vmem:[#allocation3 + $0x1d8] sm:$0xff]
      %v4908 = vld [vmem:[#allocation3 + $0x1e0] sm:$0xff]
      %v4909 = vld [vmem:[#allocation3 + $0x1e8] sm:$0xff]
      %v4910 = vld [vmem:[#allocation3 + $0x1f0] sm:$0xff]
      %v4911 = vld [vmem:[#allocation3 + $0x1f8] sm:$0xff]
      %v4919 = vunpack.c.l.b16 %v480
      %v4920 = vunpack.c.l.b16 %v481
      %v4921 = vunpack.c.l.b16 %v482
      %v4922 = vunpack.c.l.b16 %v483
      %v4923 = vunpack.c.l.b16 %v484
      %v4924 = vunpack.c.l.b16 %v485
      %v4925 = vunpack.c.l.b16 %v486
      %v4926 = vpack.c.b16 %v4920, %v4919
      %v4927 = vpack.c.b16 %v4922, %v4921
      %v4928 = vpack.c.b16 %v4924, %v4923
      %v4929 = vpack.c.b16 %v4925, %v4925
      %vm4933 = vcmask 441344
      %v4935 = vsel %vm4933, %v4848, 0
      %v4938 = vsel %vm4933, %v4849, 0
      %v4941 = vsel %vm4933, %v4850, 0
      %v4944 = vsel %vm4933, %v4851, 0
      %v4947 = vsel %vm4933, %v4852, 0
      %v4950 = vsel %vm4933, %v4853, 0
      %v4953 = vsel %vm4933, %v4854, 0
      %v4956 = vsel %vm4933, %v4855, 0
      %v4959 = vsel %vm4933, %v4856, 0
      %v4962 = vsel %vm4933, %v4857, 0
      %v4965 = vsel %vm4933, %v4858, 0
      %v4968 = vsel %vm4933, %v4859, 0
      %v4971 = vsel %vm4933, %v4860, 0
      %v4974 = vsel %vm4933, %v4861, 0
      %v4977 = vsel %vm4933, %v4862, 0
      %v4980 = vsel %vm4933, %v4863, 0
      %v4983 = vsel %vm4933, %v4864, 0
      %v4986 = vsel %vm4933, %v4865, 0
      %v4989 = vsel %vm4933, %v4866, 0
      %v4992 = vsel %vm4933, %v4867, 0
      %v4995 = vsel %vm4933, %v4868, 0
      %v4998 = vsel %vm4933, %v4869, 0
      %v5001 = vsel %vm4933, %v4870, 0
      %v5004 = vsel %vm4933, %v4871, 0
      %v5007 = vsel %vm4933, %v4872, 0
      %v5010 = vsel %vm4933, %v4873, 0
      %v5013 = vsel %vm4933, %v4874, 0
      %v5016 = vsel %vm4933, %v4875, 0
      %v5019 = vsel %vm4933, %v4876, 0
      %v5022 = vsel %vm4933, %v4877, 0
      %v5025 = vsel %vm4933, %v4878, 0
      %v5028 = vsel %vm4933, %v4879, 0
      %v5031 = vsel %vm4933, %v4880, 0
      %v5034 = vsel %vm4933, %v4881, 0
      %v5037 = vsel %vm4933, %v4882, 0
      %v5040 = vsel %vm4933, %v4883, 0
      %v5043 = vsel %vm4933, %v4884, 0
      %v5046 = vsel %vm4933, %v4885, 0
      %v5049 = vsel %vm4933, %v4886, 0
      %v5052 = vsel %vm4933, %v4887, 0
      %v5055 = vsel %vm4933, %v4888, 0
      %v5058 = vsel %vm4933, %v4889, 0
      %v5061 = vsel %vm4933, %v4890, 0
      %v5064 = vsel %vm4933, %v4891, 0
      %v5067 = vsel %vm4933, %v4892, 0
      %v5070 = vsel %vm4933, %v4893, 0
      %v5073 = vsel %vm4933, %v4894, 0
      %v5076 = vsel %vm4933, %v4895, 0
      %v5079 = vsel %vm4933, %v4896, 0
      %v5082 = vsel %vm4933, %v4897, 0
      %v5085 = vsel %vm4933, %v4898, 0
      %v5088 = vsel %vm4933, %v4899, 0
      %v5091 = vsel %vm4933, %v4900, 0
      %v5094 = vsel %vm4933, %v4901, 0
      %v5097 = vsel %vm4933, %v4902, 0
      %v5100 = vsel %vm4933, %v4903, 0
      %v5103 = vsel %vm4933, %v4904, 0
      %v5106 = vsel %vm4933, %v4905, 0
      %v5109 = vsel %vm4933, %v4906, 0
      %v5112 = vsel %vm4933, %v4907, 0
      %v5115 = vsel %vm4933, %v4908, 0
      %v5118 = vsel %vm4933, %v4909, 0
      %v5121 = vsel %vm4933, %v4910, 0
      %v5124 = vsel %vm4933, %v4911, 0
      %vm5126 = vcmask 1042432
      %v5128 = vsel %vm5126, %v4929, 0
      %5130 = vmatprep.subr.bf16.mxu0 0
      %5131 = vmatpush1.bf16.msra.mxu0 %v4926
      %5132 = vmatprep.subr.bf16.mxu0 0
      %5133 = vmatpush1.bf16.msra.mxu0 %v4927
      %5134 = vmatprep.subr.bf16.mxu0 0
      %5135 = vmatpush1.bf16.msra.mxu0 %v4928
      %5136 = vmatprep.subr.bf16.mxu0 0
      %5137 = vmatpush1.bf16.msra.mxu0 %v5128
      %5138 = vmatprep.subr.bf16.mxu0 0
      %5139 = vmatpush1.bf16.msra.mxu0 0
      %5140 = vmatprep.subr.bf16.mxu0 0
      %5141 = vmatpush1.bf16.msra.mxu0 0
      %5142 = vmatprep.subr.bf16.mxu0 0
      %5143 = vmatpush1.bf16.msra.mxu0 0
      %5144 = vmatprep.subr.bf16.mxu0 0
      %5145 = vmatpush1.bf16.msra.mxu0 0
      %5146 = vmatprep.subr.bf16.mxu0 0
      %5147 = vmatpush1.bf16.msra.mxu0 0
      %5148 = vmatprep.subr.bf16.mxu0 0
      %5149 = vmatpush1.bf16.msra.mxu0 0
      %5150 = vmatprep.subr.bf16.mxu0 0
      %5151 = vmatpush1.bf16.msra.mxu0 0
      %5152 = vmatprep.subr.bf16.mxu0 0
      %5153 = vmatpush1.bf16.msra.mxu0 0
      %5154 = vmatprep.subr.bf16.mxu0 0
      %5155 = vmatpush1.bf16.msra.mxu0 0
      %5156 = vmatprep.subr.bf16.mxu0 0
      %5157 = vmatpush1.bf16.msra.mxu0 0
      %5158 = vmatprep.subr.bf16.mxu0 0
      %5159 = vmatpush1.bf16.msra.mxu0 0
      %5160 = vmatprep.subr.bf16.mxu0 0
      %5161 = vmatpush1.bf16.msra.mxu0 0
      %5162 = vmatprep.mubr.bf16.mxu0 0
      %5163 = vmatmul.mubr.bf16.gmra.mrb[0].mxu0 %v4935
      %v5164 = vpop.f32.mrb[0].mxu0
      %v5165 = vadd.f32 0.0, %v5164
      %v5166 = vpop.f32.mrb[0].mxu0
      %v5167 = vpop.f32.mrb[0].mxu0
      %v5168 = vadd.f32 0.0, %v5167
      %v5169 = vpop.f32.mrb[0].mxu0
      %5170 = vmatprep.mubr.bf16.mxu0 0
      %5171 = vmatmul.mubr.bf16.gmra.mrb[0].mxu0 %v4938
      %v5172 = vpop.f32.mrb[0].mxu0
      %v5173 = vadd.f32 0.0, %v5172
      %v5174 = vpop.f32.mrb[0].mxu0
      %v5175 = vpop.f32.mrb[0].mxu0
      %v5176 = vadd.f32 0.0, %v5175
      %v5177 = vpop.f32.mrb[0].mxu0
      %5178 = vmatprep.mubr.bf16.mxu0 0
      %5179 = vmatmul.mubr.bf16.gmra.mrb[0].mxu0 %v4941
      %v5180 = vpop.f32.mrb[0].mxu0
      %v5181 = vadd.f32 0.0, %v5180
      %v5182 = vpop.f32.mrb[0].mxu0
      %v5183 = vpop.f32.mrb[0].mxu0
      %v5184 = vadd.f32 0.0, %v5183
      %v5185 = vpop.f32.mrb[0].mxu0
      %5186 = vmatprep.mubr.bf16.mxu0 0
      %5187 = vmatmul.mubr.bf16.gmra.mrb[0].mxu0 %v4944
      %v5188 = vpop.f32.mrb[0].mxu0
      %v5189 = vadd.f32 0.0, %v5188
      %v5190 = vpop.f32.mrb[0].mxu0
      %v5191 = vpop.f32.mrb[0].mxu0
      %v5192 = vadd.f32 0.0, %v5191
      %v5193 = vpop.f32.mrb[0].mxu0
      %5194 = vmatprep.mubr.bf16.mxu0 0
      %5195 = vmatmul.mubr.bf16.gmra.mrb[0].mxu0 %v4947
      %v5196 = vpop.f32.mrb[0].mxu0
      %v5197 = vadd.f32 0.0, %v5196
      %v5198 = vpop.f32.mrb[0].mxu0
      %v5199 = vpop.f32.mrb[0].mxu0
      %v5200 = vadd.f32 0.0, %v5199
      %v5201 = vpop.f32.mrb[0].mxu0
      %5202 = vmatprep.mubr.bf16.mxu0 0
      %5203 = vmatmul.mubr.bf16.gmra.mrb[0].mxu0 %v4950
      %v5204 = vpop.f32.mrb[0].mxu0
      %v5205 = vadd.f32 0.0, %v5204
      %v5206 = vpop.f32.mrb[0].mxu0
      %v5207 = vpop.f32.mrb[0].mxu0
      %v5208 = vadd.f32 0.0, %v5207
      %v5209 = vpop.f32.mrb[0].mxu0
      %5210 = vmatprep.mubr.bf16.mxu0 0
      %5211 = vmatmul.mubr.bf16.gmra.mrb[0].mxu0 %v4953
      %v5212 = vpop.f32.mrb[0].mxu0
      %v5213 = vadd.f32 0.0, %v5212
      %v5214 = vpop.f32.mrb[0].mxu0
      %v5215 = vpop.f32.mrb[0].mxu0
      %v5216 = vadd.f32 0.0, %v5215
      %v5217 = vpop.f32.mrb[0].mxu0
      %5218 = vmatprep.mubr.bf16.mxu0 0
      %5219 = vmatmul.mubr.bf16.gmra.mrb[0].mxu0 %v4956
      %v5220 = vpop.f32.mrb[0].mxu0
      %v5221 = vadd.f32 0.0, %v5220
      %v5222 = vpop.f32.mrb[0].mxu0
      %v5223 = vpop.f32.mrb[0].mxu0
      %v5224 = vadd.f32 0.0, %v5223
      %v5225 = vpop.f32.mrb[0].mxu0
      %5226 = vmatprep.mubr.bf16.mxu0 0
      %5227 = vmatmul.mubr.bf16.gmra.mrb[0].mxu0 %v4959
      %v5228 = vpop.f32.mrb[0].mxu0
      %v5229 = vadd.f32 0.0, %v5228
      %v5230 = vpop.f32.mrb[0].mxu0
      %v5231 = vpop.f32.mrb[0].mxu0
      %v5232 = vadd.f32 0.0, %v5231
      %v5233 = vpop.f32.mrb[0].mxu0
      %5234 = vmatprep.mubr.bf16.mxu0 0
      %5235 = vmatmul.mubr.bf16.gmra.mrb[0].mxu0 %v4962
      %v5236 = vpop.f32.mrb[0].mxu0
      %v5237 = vadd.f32 0.0, %v5236
      %v5238 = vpop.f32.mrb[0].mxu0
      %v5239 = vpop.f32.mrb[0].mxu0
      %v5240 = vadd.f32 0.0, %v5239
      %v5241 = vpop.f32.mrb[0].mxu0
      %5242 = vmatprep.mubr.bf16.mxu0 0
      %5243 = vmatmul.mubr.bf16.gmra.mrb[0].mxu0 %v4965
      %v5244 = vpop.f32.mrb[0].mxu0
      %v5245 = vadd.f32 0.0, %v5244
      %v5246 = vpop.f32.mrb[0].mxu0
      %v5247 = vpop.f32.mrb[0].mxu0
      %v5248 = vadd.f32 0.0, %v5247
      %v5249 = vpop.f32.mrb[0].mxu0
      %5250 = vmatprep.mubr.bf16.mxu0 0
      %5251 = vmatmul.mubr.bf16.gmra.mrb[0].mxu0 %v4968
      %v5252 = vpop.f32.mrb[0].mxu0
      %v5253 = vadd.f32 0.0, %v5252
      %v5254 = vpop.f32.mrb[0].mxu0
      %v5255 = vpop.f32.mrb[0].mxu0
      %v5256 = vadd.f32 0.0, %v5255
      %v5257 = vpop.f32.mrb[0].mxu0
      %5258 = vmatprep.mubr.bf16.mxu0 0
      %5259 = vmatmul.mubr.bf16.gmra.mrb[0].mxu0 %v4971
      %v5260 = vpop.f32.mrb[0].mxu0
      %v5261 = vadd.f32 0.0, %v5260
      %v5262 = vpop.f32.mrb[0].mxu0
      %v5263 = vpop.f32.mrb[0].mxu0
      %v5264 = vadd.f32 0.0, %v5263
      %v5265 = vpop.f32.mrb[0].mxu0
      %5266 = vmatprep.mubr.bf16.mxu0 0
      %5267 = vmatmul.mubr.bf16.gmra.mrb[0].mxu0 %v4974
      %v5268 = vpop.f32.mrb[0].mxu0
      %v5269 = vadd.f32 0.0, %v5268
      %v5270 = vpop.f32.mrb[0].mxu0
      %v5271 = vpop.f32.mrb[0].mxu0
      %v5272 = vadd.f32 0.0, %v5271
      %v5273 = vpop.f32.mrb[0].mxu0
      %5274 = vmatprep.mubr.bf16.mxu0 0
      %5275 = vmatmul.mubr.bf16.gmra.mrb[0].mxu0 %v4977
      %v5276 = vpop.f32.mrb[0].mxu0
      %v5277 = vadd.f32 0.0, %v5276
      %v5278 = vpop.f32.mrb[0].mxu0
      %v5279 = vpop.f32.mrb[0].mxu0
      %v5280 = vadd.f32 0.0, %v5279
      %v5281 = vpop.f32.mrb[0].mxu0
      %5282 = vmatprep.mubr.bf16.mxu0 0
      %5283 = vmatmul.mubr.bf16.gmra.mrb[0].mxu0 %v4980
      %v5284 = vpop.f32.mrb[0].mxu0
      %v5285 = vadd.f32 0.0, %v5284
      %v5286 = vpop.f32.mrb[0].mxu0
      %v5287 = vpop.f32.mrb[0].mxu0
      %v5288 = vadd.f32 0.0, %v5287
      %v5289 = vpop.f32.mrb[0].mxu0
      %5290 = vmatprep.mubr.bf16.mxu0 0
      %5291 = vmatmul.mubr.bf16.gmra.mrb[0].mxu0 %v4983
      %v5292 = vpop.f32.mrb[0].mxu0
      %v5293 = vadd.f32 0.0, %v5292
      %v5294 = vpop.f32.mrb[0].mxu0
      %v5295 = vpop.f32.mrb[0].mxu0
      %v5296 = vadd.f32 0.0, %v5295
      %v5297 = vpop.f32.mrb[0].mxu0
      %5298 = vmatprep.mubr.bf16.mxu0 0
      %5299 = vmatmul.mubr.bf16.gmra.mrb[0].mxu0 %v4986
      %v5300 = vpop.f32.mrb[0].mxu0
      %v5301 = vadd.f32 0.0, %v5300
      %v5302 = vpop.f32.mrb[0].mxu0
      %v5303 = vpop.f32.mrb[0].mxu0
      %v5304 = vadd.f32 0.0, %v5303
      %v5305 = vpop.f32.mrb[0].mxu0
      %5306 = vmatprep.mubr.bf16.mxu0 0
      %5307 = vmatmul.mubr.bf16.gmra.mrb[0].mxu0 %v4989
      %v5308 = vpop.f32.mrb[0].mxu0
      %v5309 = vadd.f32 0.0, %v5308
      %v5310 = vpop.f32.mrb[0].mxu0
      %v5311 = vpop.f32.mrb[0].mxu0
      %v5312 = vadd.f32 0.0, %v5311
      %v5313 = vpop.f32.mrb[0].mxu0
      %5314 = vmatprep.mubr.bf16.mxu0 0
      %5315 = vmatmul.mubr.bf16.gmra.mrb[0].mxu0 %v4992
      %v5316 = vpop.f32.mrb[0].mxu0
      %v5317 = vadd.f32 0.0, %v5316
      %v5318 = vpop.f32.mrb[0].mxu0
      %v5319 = vpop.f32.mrb[0].mxu0
      %v5320 = vadd.f32 0.0, %v5319
      %v5321 = vpop.f32.mrb[0].mxu0
      %5322 = vmatprep.mubr.bf16.mxu0 0
      %5323 = vmatmul.mubr.bf16.gmra.mrb[0].mxu0 %v4995
      %v5324 = vpop.f32.mrb[0].mxu0
      %v5325 = vadd.f32 0.0, %v5324
      %v5326 = vpop.f32.mrb[0].mxu0
      %v5327 = vpop.f32.mrb[0].mxu0
      %v5328 = vadd.f32 0.0, %v5327
      %v5329 = vpop.f32.mrb[0].mxu0
      %5330 = vmatprep.mubr.bf16.mxu0 0
      %5331 = vmatmul.mubr.bf16.gmra.mrb[0].mxu0 %v4998
      %v5332 = vpop.f32.mrb[0].mxu0
      %v5333 = vadd.f32 0.0, %v5332
      %v5334 = vpop.f32.mrb[0].mxu0
      %v5335 = vpop.f32.mrb[0].mxu0
      %v5336 = vadd.f32 0.0, %v5335
      %v5337 = vpop.f32.mrb[0].mxu0
      %5338 = vmatprep.mubr.bf16.mxu0 0
      %5339 = vmatmul.mubr.bf16.gmra.mrb[0].mxu0 %v5001
      %v5340 = vpop.f32.mrb[0].mxu0
      %v5341 = vadd.f32 0.0, %v5340
      %v5342 = vpop.f32.mrb[0].mxu0
      %v5343 = vpop.f32.mrb[0].mxu0
      %v5344 = vadd.f32 0.0, %v5343
      %v5345 = vpop.f32.mrb[0].mxu0
      %5346 = vmatprep.mubr.bf16.mxu0 0
      %5347 = vmatmul.mubr.bf16.gmra.mrb[0].mxu0 %v5004
      %v5348 = vpop.f32.mrb[0].mxu0
      %v5349 = vadd.f32 0.0, %v5348
      %v5350 = vpop.f32.mrb[0].mxu0
      %v5351 = vpop.f32.mrb[0].mxu0
      %v5352 = vadd.f32 0.0, %v5351
      %v5353 = vpop.f32.mrb[0].mxu0
      %5354 = vmatprep.mubr.bf16.mxu0 0
      %5355 = vmatmul.mubr.bf16.gmra.mrb[0].mxu0 %v5007
      %v5356 = vpop.f32.mrb[0].mxu0
      %v5357 = vadd.f32 0.0, %v5356
      %v5358 = vpop.f32.mrb[0].mxu0
      %v5359 = vpop.f32.mrb[0].mxu0
      %v5360 = vadd.f32 0.0, %v5359
      %v5361 = vpop.f32.mrb[0].mxu0
      %5362 = vmatprep.mubr.bf16.mxu0 0
      %5363 = vmatmul.mubr.bf16.gmra.mrb[0].mxu0 %v5010
      %v5364 = vpop.f32.mrb[0].mxu0
      %v5365 = vadd.f32 0.0, %v5364
      %v5366 = vpop.f32.mrb[0].mxu0
      %v5367 = vpop.f32.mrb[0].mxu0
      %v5368 = vadd.f32 0.0, %v5367
      %v5369 = vpop.f32.mrb[0].mxu0
      %5370 = vmatprep.mubr.bf16.mxu0 0
      %5371 = vmatmul.mubr.bf16.gmra.mrb[0].mxu0 %v5013
      %v5372 = vpop.f32.mrb[0].mxu0
      %v5373 = vadd.f32 0.0, %v5372
      %v5374 = vpop.f32.mrb[0].mxu0
      %v5375 = vpop.f32.mrb[0].mxu0
      %v5376 = vadd.f32 0.0, %v5375
      %v5377 = vpop.f32.mrb[0].mxu0
      %5378 = vmatprep.mubr.bf16.mxu0 0
      %5379 = vmatmul.mubr.bf16.gmra.mrb[0].mxu0 %v5016
      %v5380 = vpop.f32.mrb[0].mxu0
      %v5381 = vadd.f32 0.0, %v5380
      %v5382 = vpop.f32.mrb[0].mxu0
      %v5383 = vpop.f32.mrb[0].mxu0
      %v5384 = vadd.f32 0.0, %v5383
      %v5385 = vpop.f32.mrb[0].mxu0
      %5386 = vmatprep.mubr.bf16.mxu0 0
      %5387 = vmatmul.mubr.bf16.gmra.mrb[0].mxu0 %v5019
      %v5388 = vpop.f32.mrb[0].mxu0
      %v5389 = vadd.f32 0.0, %v5388
      %v5390 = vpop.f32.mrb[0].mxu0
      %v5391 = vpop.f32.mrb[0].mxu0
      %v5392 = vadd.f32 0.0, %v5391
      %v5393 = vpop.f32.mrb[0].mxu0
      %5394 = vmatprep.mubr.bf16.mxu0 0
      %5395 = vmatmul.mubr.bf16.gmra.mrb[0].mxu0 %v5022
      %v5396 = vpop.f32.mrb[0].mxu0
      %v5397 = vadd.f32 0.0, %v5396
      %v5398 = vpop.f32.mrb[0].mxu0
      %v5399 = vpop.f32.mrb[0].mxu0
      %v5400 = vadd.f32 0.0, %v5399
      %v5401 = vpop.f32.mrb[0].mxu0
      %5402 = vmatprep.mubr.bf16.mxu0 0
      %5403 = vmatmul.mubr.bf16.gmra.mrb[0].mxu0 %v5025
      %v5404 = vpop.f32.mrb[0].mxu0
      %v5405 = vadd.f32 0.0, %v5404
      %v5406 = vpop.f32.mrb[0].mxu0
      %v5407 = vpop.f32.mrb[0].mxu0
      %v5408 = vadd.f32 0.0, %v5407
      %v5409 = vpop.f32.mrb[0].mxu0
      %5410 = vmatprep.mubr.bf16.mxu0 0
      %5411 = vmatmul.mubr.bf16.gmra.mrb[0].mxu0 %v5028
      %v5412 = vpop.f32.mrb[0].mxu0
      %v5413 = vadd.f32 0.0, %v5412
      %v5414 = vpop.f32.mrb[0].mxu0
      %v5415 = vpop.f32.mrb[0].mxu0
      %v5416 = vadd.f32 0.0, %v5415
      %v5417 = vpop.f32.mrb[0].mxu0
      %5418 = vmatprep.mubr.bf16.mxu0 0
      %5419 = vmatmul.mubr.bf16.gmra.mrb[0].mxu0 %v5031
      %v5420 = vpop.f32.mrb[0].mxu0
      %v5421 = vadd.f32 0.0, %v5420
      %v5422 = vpop.f32.mrb[0].mxu0
      %v5423 = vpop.f32.mrb[0].mxu0
      %v5424 = vadd.f32 0.0, %v5423
      %v5425 = vpop.f32.mrb[0].mxu0
      %5426 = vmatprep.mubr.bf16.mxu0 0
      %5427 = vmatmul.mubr.bf16.gmra.mrb[0].mxu0 %v5034
      %v5428 = vpop.f32.mrb[0].mxu0
      %v5429 = vadd.f32 0.0, %v5428
      %v5430 = vpop.f32.mrb[0].mxu0
      %v5431 = vpop.f32.mrb[0].mxu0
      %v5432 = vadd.f32 0.0, %v5431
      %v5433 = vpop.f32.mrb[0].mxu0
      %5434 = vmatprep.mubr.bf16.mxu0 0
      %5435 = vmatmul.mubr.bf16.gmra.mrb[0].mxu0 %v5037
      %v5436 = vpop.f32.mrb[0].mxu0
      %v5437 = vadd.f32 0.0, %v5436
      %v5438 = vpop.f32.mrb[0].mxu0
      %v5439 = vpop.f32.mrb[0].mxu0
      %v5440 = vadd.f32 0.0, %v5439
      %v5441 = vpop.f32.mrb[0].mxu0
      %5442 = vmatprep.mubr.bf16.mxu0 0
      %5443 = vmatmul.mubr.bf16.gmra.mrb[0].mxu0 %v5040
      %v5444 = vpop.f32.mrb[0].mxu0
      %v5445 = vadd.f32 0.0, %v5444
      %v5446 = vpop.f32.mrb[0].mxu0
      %v5447 = vpop.f32.mrb[0].mxu0
      %v5448 = vadd.f32 0.0, %v5447
      %v5449 = vpop.f32.mrb[0].mxu0
      %5450 = vmatprep.mubr.bf16.mxu0 0
      %5451 = vmatmul.mubr.bf16.gmra.mrb[0].mxu0 %v5043
      %v5452 = vpop.f32.mrb[0].mxu0
      %v5453 = vadd.f32 0.0, %v5452
      %v5454 = vpop.f32.mrb[0].mxu0
      %v5455 = vpop.f32.mrb[0].mxu0
      %v5456 = vadd.f32 0.0, %v5455
      %v5457 = vpop.f32.mrb[0].mxu0
      %5458 = vmatprep.mubr.bf16.mxu0 0
      %5459 = vmatmul.mubr.bf16.gmra.mrb[0].mxu0 %v5046
      %v5460 = vpop.f32.mrb[0].mxu0
      %v5461 = vadd.f32 0.0, %v5460
      %v5462 = vpop.f32.mrb[0].mxu0
      %v5463 = vpop.f32.mrb[0].mxu0
      %v5464 = vadd.f32 0.0, %v5463
      %v5465 = vpop.f32.mrb[0].mxu0
      %5466 = vmatprep.mubr.bf16.mxu0 0
      %5467 = vmatmul.mubr.bf16.gmra.mrb[0].mxu0 %v5049
      %v5468 = vpop.f32.mrb[0].mxu0
      %v5469 = vadd.f32 0.0, %v5468
      %v5470 = vpop.f32.mrb[0].mxu0
      %v5471 = vpop.f32.mrb[0].mxu0
      %v5472 = vadd.f32 0.0, %v5471
      %v5473 = vpop.f32.mrb[0].mxu0
      %5474 = vmatprep.mubr.bf16.mxu0 0
      %5475 = vmatmul.mubr.bf16.gmra.mrb[0].mxu0 %v5052
      %v5476 = vpop.f32.mrb[0].mxu0
      %v5477 = vadd.f32 0.0, %v5476
      %v5478 = vpop.f32.mrb[0].mxu0
      %v5479 = vpop.f32.mrb[0].mxu0
      %v5480 = vadd.f32 0.0, %v5479
      %v5481 = vpop.f32.mrb[0].mxu0
      %5482 = vmatprep.mubr.bf16.mxu0 0
      %5483 = vmatmul.mubr.bf16.gmra.mrb[0].mxu0 %v5055
      %v5484 = vpop.f32.mrb[0].mxu0
      %v5485 = vadd.f32 0.0, %v5484
      %v5486 = vpop.f32.mrb[0].mxu0
      %v5487 = vpop.f32.mrb[0].mxu0
      %v5488 = vadd.f32 0.0, %v5487
      %v5489 = vpop.f32.mrb[0].mxu0
      %5490 = vmatprep.mubr.bf16.mxu0 0
      %5491 = vmatmul.mubr.bf16.gmra.mrb[0].mxu0 %v5058
      %v5492 = vpop.f32.mrb[0].mxu0
      %v5493 = vadd.f32 0.0, %v5492
      %v5494 = vpop.f32.mrb[0].mxu0
      %v5495 = vpop.f32.mrb[0].mxu0
      %v5496 = vadd.f32 0.0, %v5495
      %v5497 = vpop.f32.mrb[0].mxu0
      %5498 = vmatprep.mubr.bf16.mxu0 0
      %5499 = vmatmul.mubr.bf16.gmra.mrb[0].mxu0 %v5061
      %v5500 = vpop.f32.mrb[0].mxu0
      %v5501 = vadd.f32 0.0, %v5500
      %v5502 = vpop.f32.mrb[0].mxu0
      %v5503 = vpop.f32.mrb[0].mxu0
      %v5504 = vadd.f32 0.0, %v5503
      %v5505 = vpop.f32.mrb[0].mxu0
      %5506 = vmatprep.mubr.bf16.mxu0 0
      %5507 = vmatmul.mubr.bf16.gmra.mrb[0].mxu0 %v5064
      %v5508 = vpop.f32.mrb[0].mxu0
      %v5509 = vadd.f32 0.0, %v5508
      %v5510 = vpop.f32.mrb[0].mxu0
      %v5511 = vpop.f32.mrb[0].mxu0
      %v5512 = vadd.f32 0.0, %v5511
      %v5513 = vpop.f32.mrb[0].mxu0
      %5514 = vmatprep.mubr.bf16.mxu0 0
      %5515 = vmatmul.mubr.bf16.gmra.mrb[0].mxu0 %v5067
      %v5516 = vpop.f32.mrb[0].mxu0
      %v5517 = vadd.f32 0.0, %v5516
      %v5518 = vpop.f32.mrb[0].mxu0
      %v5519 = vpop.f32.mrb[0].mxu0
      %v5520 = vadd.f32 0.0, %v5519
      %v5521 = vpop.f32.mrb[0].mxu0
      %5522 = vmatprep.mubr.bf16.mxu0 0
      %5523 = vmatmul.mubr.bf16.gmra.mrb[0].mxu0 %v5070
      %v5524 = vpop.f32.mrb[0].mxu0
      %v5525 = vadd.f32 0.0, %v5524
      %v5526 = vpop.f32.mrb[0].mxu0
      %v5527 = vpop.f32.mrb[0].mxu0
      %v5528 = vadd.f32 0.0, %v5527
      %v5529 = vpop.f32.mrb[0].mxu0
      %5530 = vmatprep.mubr.bf16.mxu0 0
      %5531 = vmatmul.mubr.bf16.gmra.mrb[0].mxu0 %v5073
      %v5532 = vpop.f32.mrb[0].mxu0
      %v5533 = vadd.f32 0.0, %v5532
      %v5534 = vpop.f32.mrb[0].mxu0
      %v5535 = vpop.f32.mrb[0].mxu0
      %v5536 = vadd.f32 0.0, %v5535
      %v5537 = vpop.f32.mrb[0].mxu0
      %5538 = vmatprep.mubr.bf16.mxu0 0
      %5539 = vmatmul.mubr.bf16.gmra.mrb[0].mxu0 %v5076
      %v5540 = vpop.f32.mrb[0].mxu0
      %v5541 = vadd.f32 0.0, %v5540
      %v5542 = vpop.f32.mrb[0].mxu0
      %v5543 = vpop.f32.mrb[0].mxu0
      %v5544 = vadd.f32 0.0, %v5543
      %v5545 = vpop.f32.mrb[0].mxu0
      %5546 = vmatprep.mubr.bf16.mxu0 0
      %5547 = vmatmul.mubr.bf16.gmra.mrb[0].mxu0 %v5079
      %v5548 = vpop.f32.mrb[0].mxu0
      %v5549 = vadd.f32 0.0, %v5548
      %v5550 = vpop.f32.mrb[0].mxu0
      %v5551 = vpop.f32.mrb[0].mxu0
      %v5552 = vadd.f32 0.0, %v5551
      %v5553 = vpop.f32.mrb[0].mxu0
      %5554 = vmatprep.mubr.bf16.mxu0 0
      %5555 = vmatmul.mubr.bf16.gmra.mrb[0].mxu0 %v5082
      %v5556 = vpop.f32.mrb[0].mxu0
      %v5557 = vadd.f32 0.0, %v5556
      %v5558 = vpop.f32.mrb[0].mxu0
      %v5559 = vpop.f32.mrb[0].mxu0
      %v5560 = vadd.f32 0.0, %v5559
      %v5561 = vpop.f32.mrb[0].mxu0
      %5562 = vmatprep.mubr.bf16.mxu0 0
      %5563 = vmatmul.mubr.bf16.gmra.mrb[0].mxu0 %v5085
      %v5564 = vpop.f32.mrb[0].mxu0
      %v5565 = vadd.f32 0.0, %v5564
      %v5566 = vpop.f32.mrb[0].mxu0
      %v5567 = vpop.f32.mrb[0].mxu0
      %v5568 = vadd.f32 0.0, %v5567
      %v5569 = vpop.f32.mrb[0].mxu0
      %5570 = vmatprep.mubr.bf16.mxu0 0
      %5571 = vmatmul.mubr.bf16.gmra.mrb[0].mxu0 %v5088
      %v5572 = vpop.f32.mrb[0].mxu0
      %v5573 = vadd.f32 0.0, %v5572
      %v5574 = vpop.f32.mrb[0].mxu0
      %v5575 = vpop.f32.mrb[0].mxu0
      %v5576 = vadd.f32 0.0, %v5575
      %v5577 = vpop.f32.mrb[0].mxu0
      %5578 = vmatprep.mubr.bf16.mxu0 0
      %5579 = vmatmul.mubr.bf16.gmra.mrb[0].mxu0 %v5091
      %v5580 = vpop.f32.mrb[0].mxu0
      %v5581 = vadd.f32 0.0, %v5580
      %v5582 = vpop.f32.mrb[0].mxu0
      %v5583 = vpop.f32.mrb[0].mxu0
      %v5584 = vadd.f32 0.0, %v5583
      %v5585 = vpop.f32.mrb[0].mxu0
      %5586 = vmatprep.mubr.bf16.mxu0 0
      %5587 = vmatmul.mubr.bf16.gmra.mrb[0].mxu0 %v5094
      %v5588 = vpop.f32.mrb[0].mxu0
      %v5589 = vadd.f32 0.0, %v5588
      %v5590 = vpop.f32.mrb[0].mxu0
      %v5591 = vpop.f32.mrb[0].mxu0
      %v5592 = vadd.f32 0.0, %v5591
      %v5593 = vpop.f32.mrb[0].mxu0
      %5594 = vmatprep.mubr.bf16.mxu0 0
      %5595 = vmatmul.mubr.bf16.gmra.mrb[0].mxu0 %v5097
      %v5596 = vpop.f32.mrb[0].mxu0
      %v5597 = vadd.f32 0.0, %v5596
      %v5598 = vpop.f32.mrb[0].mxu0
      %v5599 = vpop.f32.mrb[0].mxu0
      %v5600 = vadd.f32 0.0, %v5599
      %v5601 = vpop.f32.mrb[0].mxu0
      %5602 = vmatprep.mubr.bf16.mxu0 0
      %5603 = vmatmul.mubr.bf16.gmra.mrb[0].mxu0 %v5100
      %v5604 = vpop.f32.mrb[0].mxu0
      %v5605 = vadd.f32 0.0, %v5604
      %v5606 = vpop.f32.mrb[0].mxu0
      %v5607 = vpop.f32.mrb[0].mxu0
      %v5608 = vadd.f32 0.0, %v5607
      %v5609 = vpop.f32.mrb[0].mxu0
      %5610 = vmatprep.mubr.bf16.mxu0 0
      %5611 = vmatmul.mubr.bf16.gmra.mrb[0].mxu0 %v5103
      %v5612 = vpop.f32.mrb[0].mxu0
      %v5613 = vadd.f32 0.0, %v5612
      %v5614 = vpop.f32.mrb[0].mxu0
      %v5615 = vpop.f32.mrb[0].mxu0
      %v5616 = vadd.f32 0.0, %v5615
      %v5617 = vpop.f32.mrb[0].mxu0
      %5618 = vmatprep.mubr.bf16.mxu0 0
      %5619 = vmatmul.mubr.bf16.gmra.mrb[0].mxu0 %v5106
      %v5620 = vpop.f32.mrb[0].mxu0
      %v5621 = vadd.f32 0.0, %v5620
      %v5622 = vpop.f32.mrb[0].mxu0
      %v5623 = vpop.f32.mrb[0].mxu0
      %v5624 = vadd.f32 0.0, %v5623
      %v5625 = vpop.f32.mrb[0].mxu0
      %5626 = vmatprep.mubr.bf16.mxu0 0
      %5627 = vmatmul.mubr.bf16.gmra.mrb[0].mxu0 %v5109
      %v5628 = vpop.f32.mrb[0].mxu0
      %v5629 = vadd.f32 0.0, %v5628
      %v5630 = vpop.f32.mrb[0].mxu0
      %v5631 = vpop.f32.mrb[0].mxu0
      %v5632 = vadd.f32 0.0, %v5631
      %v5633 = vpop.f32.mrb[0].mxu0
      %5634 = vmatprep.mubr.bf16.mxu0 0
      %5635 = vmatmul.mubr.bf16.gmra.mrb[0].mxu0 %v5112
      %v5636 = vpop.f32.mrb[0].mxu0
      %v5637 = vadd.f32 0.0, %v5636
      %v5638 = vpop.f32.mrb[0].mxu0
      %v5639 = vpop.f32.mrb[0].mxu0
      %v5640 = vadd.f32 0.0, %v5639
      %v5641 = vpop.f32.mrb[0].mxu0
      %5642 = vmatprep.mubr.bf16.mxu0 0
      %5643 = vmatmul.mubr.bf16.gmra.mrb[0].mxu0 %v5115
      %v5644 = vpop.f32.mrb[0].mxu0
      %v5645 = vadd.f32 0.0, %v5644
      %v5646 = vpop.f32.mrb[0].mxu0
      %v5647 = vpop.f32.mrb[0].mxu0
      %v5648 = vadd.f32 0.0, %v5647
      %v5649 = vpop.f32.mrb[0].mxu0
      %5650 = vmatprep.mubr.bf16.mxu0 0
      %5651 = vmatmul.mubr.bf16.gmra.mrb[0].mxu0 %v5118
      %v5652 = vpop.f32.mrb[0].mxu0
      %v5653 = vadd.f32 0.0, %v5652
      %v5654 = vpop.f32.mrb[0].mxu0
      %v5655 = vpop.f32.mrb[0].mxu0
      %v5656 = vadd.f32 0.0, %v5655
      %v5657 = vpop.f32.mrb[0].mxu0
      %5658 = vmatprep.mubr.bf16.mxu0 0
      %5659 = vmatmul.mubr.bf16.gmra.mrb[0].mxu0 %v5121
      %v5660 = vpop.f32.mrb[0].mxu0
      %v5661 = vadd.f32 0.0, %v5660
      %v5662 = vpop.f32.mrb[0].mxu0
      %v5663 = vpop.f32.mrb[0].mxu0
      %v5664 = vadd.f32 0.0, %v5663
      %v5665 = vpop.f32.mrb[0].mxu0
      %5666 = vmatprep.mubr.bf16.mxu0 0
      %5667 = vmatmul.mubr.bf16.gmra.mrb[0].mxu0 %v5124
      %v5668 = vpop.f32.mrb[0].mxu0
      %v5669 = vadd.f32 0.0, %v5668
      %v5670 = vpop.f32.mrb[0].mxu0
      %v5671 = vpop.f32.mrb[0].mxu0
      %v5672 = vadd.f32 0.0, %v5671
      %v5673 = vpop.f32.mrb[0].mxu0
      %5674 = vdwg.mxu0
      %vm5675 = vcmask 130048
      %5676 = vst.msk [vmem:[%s143] sm:$0xff] %vm5675, %v5165
      %5677 = vst.msk [vmem:[%s143 + $0x8] sm:$0xff] %vm5675, %v5168
      %5678 = vst.msk [vmem:[%s143 + $0x10] sm:$0xff] %vm5675, %v5173
      %5679 = vst.msk [vmem:[%s143 + $0x18] sm:$0xff] %vm5675, %v5176
      %5680 = vst.msk [vmem:[%s143 + $0x20] sm:$0xff] %vm5675, %v5181
      %5681 = vst.msk [vmem:[%s143 + $0x28] sm:$0xff] %vm5675, %v5184
      %5682 = vst.msk [vmem:[%s143 + $0x30] sm:$0xff] %vm5675, %v5189
      %5683 = vst.msk [vmem:[%s143 + $0x38] sm:$0xff] %vm5675, %v5192
      %5684 = vst.msk [vmem:[%s143 + $0x40] sm:$0xff] %vm5675, %v5197
      %5685 = vst.msk [vmem:[%s143 + $0x48] sm:$0xff] %vm5675, %v5200
      %5686 = vst.msk [vmem:[%s143 + $0x50] sm:$0xff] %vm5675, %v5205
      %5687 = vst.msk [vmem:[%s143 + $0x58] sm:$0xff] %vm5675, %v5208
      %5688 = vst.msk [vmem:[%s143 + $0x60] sm:$0xff] %vm5675, %v5213
      %5689 = vst.msk [vmem:[%s143 + $0x68] sm:$0xff] %vm5675, %v5216
      %5690 = vst.msk [vmem:[%s143 + $0x70] sm:$0xff] %vm5675, %v5221
      %5691 = vst.msk [vmem:[%s143 + $0x78] sm:$0xff] %vm5675, %v5224
      %5692 = vst.msk [vmem:[%s143 + $0x80] sm:$0xff] %vm5675, %v5229
      %5693 = vst.msk [vmem:[%s143 + $0x88] sm:$0xff] %vm5675, %v5232
      %5694 = vst.msk [vmem:[%s143 + $0x90] sm:$0xff] %vm5675, %v5237
      %5695 = vst.msk [vmem:[%s143 + $0x98] sm:$0xff] %vm5675, %v5240
      %5696 = vst.msk [vmem:[%s143 + $0xa0] sm:$0xff] %vm5675, %v5245
      %5697 = vst.msk [vmem:[%s143 + $0xa8] sm:$0xff] %vm5675, %v5248
      %5698 = vst.msk [vmem:[%s143 + $0xb0] sm:$0xff] %vm5675, %v5253
      %5699 = vst.msk [vmem:[%s143 + $0xb8] sm:$0xff] %vm5675, %v5256
      %5700 = vst.msk [vmem:[%s143 + $0xc0] sm:$0xff] %vm5675, %v5261
      %5701 = vst.msk [vmem:[%s143 + $0xc8] sm:$0xff] %vm5675, %v5264
      %5702 = vst.msk [vmem:[%s143 + $0xd0] sm:$0xff] %vm5675, %v5269
      %5703 = vst.msk [vmem:[%s143 + $0xd8] sm:$0xff] %vm5675, %v5272
      %5704 = vst.msk [vmem:[%s143 + $0xe0] sm:$0xff] %vm5675, %v5277
      %5705 = vst.msk [vmem:[%s143 + $0xe8] sm:$0xff] %vm5675, %v5280
      %5706 = vst.msk [vmem:[%s143 + $0xf0] sm:$0xff] %vm5675, %v5285
      %5707 = vst.msk [vmem:[%s143 + $0xf8] sm:$0xff] %vm5675, %v5288
      %5708 = vst.msk [vmem:[%s143 + $0x100] sm:$0xff] %vm5675, %v5293
      %5709 = vst.msk [vmem:[%s143 + $0x108] sm:$0xff] %vm5675, %v5296
      %5710 = vst.msk [vmem:[%s143 + $0x110] sm:$0xff] %vm5675, %v5301
      %5711 = vst.msk [vmem:[%s143 + $0x118] sm:$0xff] %vm5675, %v5304
      %5712 = vst.msk [vmem:[%s143 + $0x120] sm:$0xff] %vm5675, %v5309
      %5713 = vst.msk [vmem:[%s143 + $0x128] sm:$0xff] %vm5675, %v5312
      %5714 = vst.msk [vmem:[%s143 + $0x130] sm:$0xff] %vm5675, %v5317
      %5715 = vst.msk [vmem:[%s143 + $0x138] sm:$0xff] %vm5675, %v5320
      %5716 = vst.msk [vmem:[%s143 + $0x140] sm:$0xff] %vm5675, %v5325
      %5717 = vst.msk [vmem:[%s143 + $0x148] sm:$0xff] %vm5675, %v5328
      %5718 = vst.msk [vmem:[%s143 + $0x150] sm:$0xff] %vm5675, %v5333
      %5719 = vst.msk [vmem:[%s143 + $0x158] sm:$0xff] %vm5675, %v5336
      %5720 = vst.msk [vmem:[%s143 + $0x160] sm:$0xff] %vm5675, %v5341
      %5721 = vst.msk [vmem:[%s143 + $0x168] sm:$0xff] %vm5675, %v5344
      %5722 = vst.msk [vmem:[%s143 + $0x170] sm:$0xff] %vm5675, %v5349
      %5723 = vst.msk [vmem:[%s143 + $0x178] sm:$0xff] %vm5675, %v5352
      %5724 = vst.msk [vmem:[%s143 + $0x180] sm:$0xff] %vm5675, %v5357
      %5725 = vst.msk [vmem:[%s143 + $0x188] sm:$0xff] %vm5675, %v5360
      %5726 = vst.msk [vmem:[%s143 + $0x190] sm:$0xff] %vm5675, %v5365
      %5727 = vst.msk [vmem:[%s143 + $0x198] sm:$0xff] %vm5675, %v5368
      %5728 = vst.msk [vmem:[%s143 + $0x1a0] sm:$0xff] %vm5675, %v5373
      %5729 = vst.msk [vmem:[%s143 + $0x1a8] sm:$0xff] %vm5675, %v5376
      %5730 = vst.msk [vmem:[%s143 + $0x1b0] sm:$0xff] %vm5675, %v5381
      %5731 = vst.msk [vmem:[%s143 + $0x1b8] sm:$0xff] %vm5675, %v5384
      %5732 = vst.msk [vmem:[%s143 + $0x1c0] sm:$0xff] %vm5675, %v5389
      %5733 = vst.msk [vmem:[%s143 + $0x1c8] sm:$0xff] %vm5675, %v5392
      %5734 = vst.msk [vmem:[%s143 + $0x1d0] sm:$0xff] %vm5675, %v5397
      %5735 = vst.msk [vmem:[%s143 + $0x1d8] sm:$0xff] %vm5675, %v5400
      %5736 = vst.msk [vmem:[%s143 + $0x1e0] sm:$0xff] %vm5675, %v5405
      %5737 = vst.msk [vmem:[%s143 + $0x1e8] sm:$0xff] %vm5675, %v5408
      %5738 = vst.msk [vmem:[%s143 + $0x1f0] sm:$0xff] %vm5675, %v5413
      %5739 = vst.msk [vmem:[%s143 + $0x1f8] sm:$0xff] %vm5675, %v5416
      %5740 = vst.msk [vmem:[%s143 + $0x200] sm:$0xff] %vm5675, %v5421
      %5741 = vst.msk [vmem:[%s143 + $0x208] sm:$0xff] %vm5675, %v5424
      %5742 = vst.msk [vmem:[%s143 + $0x210] sm:$0xff] %vm5675, %v5429
      %5743 = vst.msk [vmem:[%s143 + $0x218] sm:$0xff] %vm5675, %v5432
      %5744 = vst.msk [vmem:[%s143 + $0x220] sm:$0xff] %vm5675, %v5437
      %5745 = vst.msk [vmem:[%s143 + $0x228] sm:$0xff] %vm5675, %v5440
      %5746 = vst.msk [vmem:[%s143 + $0x230] sm:$0xff] %vm5675, %v5445
      %5747 = vst.msk [vmem:[%s143 + $0x238] sm:$0xff] %vm5675, %v5448
      %5748 = vst.msk [vmem:[%s143 + $0x240] sm:$0xff] %vm5675, %v5453
      %5749 = vst.msk [vmem:[%s143 + $0x248] sm:$0xff] %vm5675, %v5456
      %5750 = vst.msk [vmem:[%s143 + $0x250] sm:$0xff] %vm5675, %v5461
      %5751 = vst.msk [vmem:[%s143 + $0x258] sm:$0xff] %vm5675, %v5464
      %5752 = vst.msk [vmem:[%s143 + $0x260] sm:$0xff] %vm5675, %v5469
      %5753 = vst.msk [vmem:[%s143 + $0x268] sm:$0xff] %vm5675, %v5472
      %5754 = vst.msk [vmem:[%s143 + $0x270] sm:$0xff] %vm5675, %v5477
      %5755 = vst.msk [vmem:[%s143 + $0x278] sm:$0xff] %vm5675, %v5480
      %5756 = vst.msk [vmem:[%s143 + $0x280] sm:$0xff] %vm5675, %v5485
      %5757 = vst.msk [vmem:[%s143 + $0x288] sm:$0xff] %vm5675, %v5488
      %5758 = vst.msk [vmem:[%s143 + $0x290] sm:$0xff] %vm5675, %v5493
      %5759 = vst.msk [vmem:[%s143 + $0x298] sm:$0xff] %vm5675, %v5496
      %5760 = vst.msk [vmem:[%s143 + $0x2a0] sm:$0xff] %vm5675, %v5501
      %5761 = vst.msk [vmem:[%s143 + $0x2a8] sm:$0xff] %vm5675, %v5504
      %5762 = vst.msk [vmem:[%s143 + $0x2b0] sm:$0xff] %vm5675, %v5509
      %5763 = vst.msk [vmem:[%s143 + $0x2b8] sm:$0xff] %vm5675, %v5512
      %5764 = vst.msk [vmem:[%s143 + $0x2c0] sm:$0xff] %vm5675, %v5517
      %5765 = vst.msk [vmem:[%s143 + $0x2c8] sm:$0xff] %vm5675, %v5520
      %5766 = vst.msk [vmem:[%s143 + $0x2d0] sm:$0xff] %vm5675, %v5525
      %5767 = vst.msk [vmem:[%s143 + $0x2d8] sm:$0xff] %vm5675, %v5528
      %5768 = vst.msk [vmem:[%s143 + $0x2e0] sm:$0xff] %vm5675, %v5533
      %5769 = vst.msk [vmem:[%s143 + $0x2e8] sm:$0xff] %vm5675, %v5536
      %5770 = vst.msk [vmem:[%s143 + $0x2f0] sm:$0xff] %vm5675, %v5541
      %5771 = vst.msk [vmem:[%s143 + $0x2f8] sm:$0xff] %vm5675, %v5544
      %5772 = vst.msk [vmem:[%s143 + $0x300] sm:$0xff] %vm5675, %v5549
      %5773 = vst.msk [vmem:[%s143 + $0x308] sm:$0xff] %vm5675, %v5552
      %5774 = vst.msk [vmem:[%s143 + $0x310] sm:$0xff] %vm5675, %v5557
      %5775 = vst.msk [vmem:[%s143 + $0x318] sm:$0xff] %vm5675, %v5560
      %5776 = vst.msk [vmem:[%s143 + $0x320] sm:$0xff] %vm5675, %v5565
      %5777 = vst.msk [vmem:[%s143 + $0x328] sm:$0xff] %vm5675, %v5568
      %5778 = vst.msk [vmem:[%s143 + $0x330] sm:$0xff] %vm5675, %v5573
      %5779 = vst.msk [vmem:[%s143 + $0x338] sm:$0xff] %vm5675, %v5576
      %5780 = vst.msk [vmem:[%s143 + $0x340] sm:$0xff] %vm5675, %v5581
      %5781 = vst.msk [vmem:[%s143 + $0x348] sm:$0xff] %vm5675, %v5584
      %5782 = vst.msk [vmem:[%s143 + $0x350] sm:$0xff] %vm5675, %v5589
      %5783 = vst.msk [vmem:[%s143 + $0x358] sm:$0xff] %vm5675, %v5592
      %5784 = vst.msk [vmem:[%s143 + $0x360] sm:$0xff] %vm5675, %v5597
      %5785 = vst.msk [vmem:[%s143 + $0x368] sm:$0xff] %vm5675, %v5600
      %5786 = vst.msk [vmem:[%s143 + $0x370] sm:$0xff] %vm5675, %v5605
      %5787 = vst.msk [vmem:[%s143 + $0x378] sm:$0xff] %vm5675, %v5608
      %5788 = vst.msk [vmem:[%s143 + $0x380] sm:$0xff] %vm5675, %v5613
      %5789 = vst.msk [vmem:[%s143 + $0x388] sm:$0xff] %vm5675, %v5616
      %5790 = vst.msk [vmem:[%s143 + $0x390] sm:$0xff] %vm5675, %v5621
      %5791 = vst.msk [vmem:[%s143 + $0x398] sm:$0xff] %vm5675, %v5624
      %5792 = vst.msk [vmem:[%s143 + $0x3a0] sm:$0xff] %vm5675, %v5629
      %5793 = vst.msk [vmem:[%s143 + $0x3a8] sm:$0xff] %vm5675, %v5632
      %5794 = vst.msk [vmem:[%s143 + $0x3b0] sm:$0xff] %vm5675, %v5637
      %5795 = vst.msk [vmem:[%s143 + $0x3b8] sm:$0xff] %vm5675, %v5640
      %5796 = vst.msk [vmem:[%s143 + $0x3c0] sm:$0xff] %vm5675, %v5645
      %5797 = vst.msk [vmem:[%s143 + $0x3c8] sm:$0xff] %vm5675, %v5648
      %5798 = vst.msk [vmem:[%s143 + $0x3d0] sm:$0xff] %vm5675, %v5653
      %5799 = vst.msk [vmem:[%s143 + $0x3d8] sm:$0xff] %vm5675, %v5656
      %5800 = vst.msk [vmem:[%s143 + $0x3e0] sm:$0xff] %vm5675, %v5661
      %5801 = vst.msk [vmem:[%s143 + $0x3e8] sm:$0xff] %vm5675, %v5664
      %5802 = vst.msk [vmem:[%s143 + $0x3f0] sm:$0xff] %vm5675, %v5669
      %5803 = vst.msk [vmem:[%s143 + $0x3f8] sm:$0xff] %vm5675, %v5672
      %p5804 = scmp.lt.s32.totalorder %s13, 1
      %s5805 = scalar_select %p5804, %s13, 1
      %s5806 = smul.addr %s5805, 128
      %s5807 = smul.addr %s5806, 8
      %s5808 = scalar_lea.vmem %s2, %s5807
      // Predicated region
      $region29: #{tpu_custom_call.1} parent=27 // pred_check
        %p5809 = pneg %p78
      $region30: #{tpu_custom_call.1} parent=27 // pred_check_branch
        %5811 = sbr.rel (%p5809) target = $region32
      $region31: #{tpu_custom_call.1} parent=27 // pred_region
        _
      $region32: #{tpu_custom_call.1} parent=27 // pred_fallthru
        _
    $region28: #{tpu_custom_call.1} parent=5 // pred_fallthru
      _
    %p5812 = scmp.le.s32.totalorder 2, %s8
    // Predicated region
    $region33: #{tpu_custom_call.1} parent=5 // pred_check
      %p5813 = pneg %p5812
    $region34: #{tpu_custom_call.1} parent=5 // pred_check_branch
      %5815 = sbr.rel (%p5813) target = $region36
    $region35: #{tpu_custom_call.1} parent=5 // pred_region
      %s5816 = ssub.s32 %s8, 2
      // Predicated region
      $region37: #{tpu_custom_call.1} parent=35 // pred_check
        %p5817 = pneg %p84
      $region38: #{tpu_custom_call.1} parent=35 // pred_check_branch
        %5819 = sbr.rel (%p5817) target = $region40
      $region39: #{tpu_custom_call.1} parent=35 // pred_region
        %p5820 = scmp.lt.s32.totalorder %s14, 1
        %s5821 = scalar_select %p5820, %s14, 1
        %s5822 = smul.addr %s5821, 128
        %s5823 = smul.addr %s5822, 8
        %s5824 = scalar_lea.vmem %s2, %s5823
      $region40: #{tpu_custom_call.1} parent=35 // pred_fallthru
        _
    $region36: #{tpu_custom_call.1} parent=5 // pred_fallthru
      _
  $region6: #{tpu_custom_call.1} parent=0 // loop_footer
    %s12 = sadd.s32 1, %s8
  $region7: #{tpu_custom_call.1} parent=0 // loop_footer_branch
    %7 = sbr.rel target = $region3
  $region8: #{tpu_custom_call.1} parent=0 // loop_exit
    _

</llo_original>
